<compile_context>
chip_gen: v6e
topology: v6e:2x2x1
jax: 0.10.0
libtpu: 0.0.40
codegen_flags: <defaults>
</compile_context>

<pallas_src>
import functools

import jax
import jax.numpy as jnp
from jax.experimental import pallas as pl
from jax.experimental.pallas import tpu as pltpu


def _round_up(x, m):
    return ((x + m - 1) // m) * m


def _pad2(a, rows, cols):
    r, c = a.shape
    return jnp.pad(a, ((0, rows - r), (0, cols - c)))


def _pad_gate_cols(w, h, h_pad):
    """w: (rows, 3*h) -> (rows, 3*h_pad), zero-padding each gate block separately."""
    if h_pad == h:
        return w
    chunks = [jnp.pad(w[:, g * h:(g + 1) * h], ((0, 0), (0, h_pad - h)))
              for g in range(3)]
    return jnp.concatenate(chunks, axis=1)


def _nbytes(shape, dtype):
    n = 1
    for d in shape:
        n *= d
    return n * jnp.dtype(dtype).itemsize


def _gru_att_kernel(x_ref, h0_ref,
                    w_ih_ref, w_h_all_ref, w_att_x_ref,
                    b_ih_ref, b_h_all_ref,
                    out_ref, h_scratch,
                    *, hidden, in_size, time_block):
    t_blk = pl.program_id(1)          # time-block index (sequential axis)
    bsz = x_ref.shape[0]              # batch block size (static)

    @pl.when(t_blk == 0)
    def _():
        h_scratch[...] = h0_ref[...].astype(jnp.float32)

    # Resident operands (loaded once per grid step). Biases stay (1, N): the
    # VPU sublane-broadcasts on the add, no materialized (TB, N) copies.
    w_ih = w_ih_ref[...]                                   # (I, 3H)     bf16
    w_h_all = w_h_all_ref[...]                             # (H, I+3H)   bf16
    b_ih = b_ih_ref[...]                                   # (1, 3H)     f32
    b_h_all = b_h_all_ref[...]                             # (1, I+3H)   f32

    # Load the whole x block once (bf16) and hoist the x-side attention matmul
    # out of the recurrence: it does not depend on h.
    x_all = x_ref[...]                                     # (TB, TT, I) bf16
    att_x = jnp.dot(x_all.reshape(bsz * time_block, in_size),
                    w_att_x_ref[...],
                    preferred_element_type=jnp.float32)
    att_x = att_x.reshape(bsz, time_block, in_size)        # (TB, TT, I) f32

    h = h_scratch[...]                                     # (TB, H) f32 carry

    # TODO(synk): for TT >> 32 switch to lax.fori_loop(..., unroll=8) to bound
    # program size / vreg live ranges; TT defaults to 8 so full unroll is fine.
    for c in range(time_block // 8):
        hs = []
        for s in range(8):
            t = c * 8 + s
            # Fused h-side matmul: attention-gate h-part + all three GRU
            # h-gates (biases b_att / b_hh already folded into b_h_all).
            gh_all = jnp.dot(h.astype(jnp.bfloat16), w_h_all,
                             preferred_element_type=jnp.float32) + b_h_all
            att_h = gh_all[:, :in_size]                    # h @ W_att_h + b_att
            gh = gh_all[:, in_size:]                       # h @ W_hh^T + b_hh

            # Attention gate: a = sigmoid(x@W_att_x + h@W_att_h + b_att)
            a = jax.nn.sigmoid(att_x[:, t, :] + att_h)
            xg = x_all[:, t, :].astype(jnp.float32) * a    # gated x, f32

            # GRU cell (PyTorch GRUCell semantics, gate order r, z, n).
            gx = jnp.dot(xg.astype(jnp.bfloat16), w_ih,
                         preferred_element_type=jnp.float32) + b_ih
            rz = jax.nn.sigmoid(gx[:, :2 * hidden] + gh[:, :2 * hidden])
            r = rz[:, :hidden]
            z = rz[:, hidden:]
            n = jnp.tanh(gx[:, 2 * hidden:] + r * gh[:, 2 * hidden:])
            h = (1.0 - z) * n + z * h
            hs.append(h)

        # One sublane-dense, lane-dense store per 8 timesteps.
        out_ref[:, c * 8:(c + 1) * 8, :] = (
            jnp.stack(hs, axis=1).astype(out_ref.dtype))

    h_scratch[...] = h


def gru_att_forward(inputs, hid0, params, *, time_block=8, batch_block=None,
                    matmul_dtype=jnp.bfloat16):
    """inputs: [B, T, I] (batch-first, like PyTorch). Returns [B, T, H] (f32)."""
    B, T, I = inputs.shape
    H = hid0.shape[1]

    # Lane-align the feature dims (zero-padded; padded h/x columns provably
    # stay zero through the recurrence because the padded weight rows/cols
    # and biases are zero and hid0 / x are zero-padded).
    I_pad = _round_up(I, 128)
    H_pad = _round_up(H, 128)

    # Batch blocking: TB must be a multiple of 8 or equal B (BlockSpec rule).
    # Splitting B in two lets the "parallel" batch axis use v7x's 2nd TC.
    if batch_block is None:
        TB = B // 2 if (B % 2 == 0 and (B // 2) % 8 == 0) else B
    else:
        TB = batch_block
    if B % TB != 0 or not (TB == B or TB % 8 == 0):
        raise ValueError("batch_block must divide B and be a multiple of 8 (or equal B)")

    # Sublane-aligned time block; pad T (zero timesteps at the tail do not
    # affect outputs for t < T since the recurrence runs forward).
    TT = max(8, min(_round_up(time_block, 8), _round_up(T, 8)))
    T_pad = _round_up(T, TT)

    x = jnp.pad(inputs, ((0, 0), (0, T_pad - T), (0, I_pad - I)))
    x = x.astype(matmul_dtype)                               # halve HBM stream
    h0 = jnp.pad(hid0, ((0, 0), (0, H_pad - H))).astype(jnp.float32)

    # Pack / pad / pre-transpose weights (PyTorch computes y = x @ W.T + b).
    # Gate blocks of the 3H axes are padded independently so that the r/z/n
    # boundaries land at H_pad / 2*H_pad (lane-aligned).
    w_ih = _pad2(_pad_gate_cols(params["w_ih"], H, H_pad),
                 I_pad, 3 * H_pad).astype(matmul_dtype)              # (I, 3H)
    w_hh = _pad2(_pad_gate_cols(params["w_hh"], H, H_pad),
                 H_pad, 3 * H_pad)
    w_att_x = _pad2(params["w_att_x"], I_pad, I_pad).astype(matmul_dtype)
    w_att_h = _pad2(params["w_att_h"], H_pad, I_pad)
    w_h_all = jnp.concatenate([w_att_h, w_hh], axis=1).astype(matmul_dtype)

    b_ih = _pad_gate_cols(params["b_ih"], H, H_pad).astype(jnp.float32)
    b_hh = _pad_gate_cols(params["b_hh"], H, H_pad)
    b_att = _pad2(params["b_att"], 1, I_pad)
    b_h_all = jnp.concatenate([b_att, b_hh], axis=1).astype(jnp.float32)

    # VMEM budget: actual double-buffered block footprint, capped well below
    # v7x's 64 MiB physical VMEM per TensorCore.
    vmem_need = (
        2 * _nbytes((TB, TT, I_pad), matmul_dtype)
        + 2 * _nbytes((TB, TT, H_pad), jnp.float32)
        + 2 * _nbytes((TB, H_pad), jnp.float32)
        + 2 * (_nbytes((I_pad, 3 * H_pad), matmul_dtype)
               + _nbytes((H_pad, I_pad + 3 * H_pad), matmul_dtype)
               + _nbytes((I_pad, I_pad), matmul_dtype)
               + _nbytes((1, 3 * H_pad), jnp.float32)
               + _nbytes((1, I_pad + 3 * H_pad), jnp.float32))
        + _nbytes((TB, H_pad), jnp.float32))
    vmem_limit = int(min(max(2 * vmem_need, 32 * 1024 * 1024), 48 * 1024 * 1024))

    const = lambda b, t: (0, 0)
    kernel = functools.partial(_gru_att_kernel, hidden=H_pad, in_size=I_pad,
                               time_block=TT)

    # TODO(synk): at large H the constant weight blocks could be single-
    # buffered (pipeline_mode=pl.Buffered(1)) to halve their VMEM reservation.
    out = pl.pallas_call(
        kernel,
        out_shape=jax.ShapeDtypeStruct((B, T_pad, H_pad), jnp.float32),
        grid_spec=pltpu.PrefetchScalarGridSpec(
            num_scalar_prefetch=0,
            grid=(B // TB, T_pad // TT),
            in_specs=[
                pl.BlockSpec((TB, TT, I_pad), lambda b, t: (b, t, 0)),   # x
                pl.BlockSpec((TB, H_pad), lambda b, t: (b, 0)),          # hid0
                pl.BlockSpec((I_pad, 3 * H_pad), const),                 # W_ih^T
                pl.BlockSpec((H_pad, I_pad + 3 * H_pad), const),         # [W_att_h^T | W_hh^T]
                pl.BlockSpec((I_pad, I_pad), const),                     # W_att_x^T
                pl.BlockSpec((1, 3 * H_pad), const),                     # b_ih
                pl.BlockSpec((1, I_pad + 3 * H_pad), const),             # [b_att | b_hh]
            ],
            out_specs=pl.BlockSpec((TB, TT, H_pad), lambda b, t: (b, t, 0)),
            scratch_shapes=[pltpu.VMEM((TB, H_pad), jnp.float32)],       # carried h
        ),
        compiler_params=pltpu.CompilerParams(
            dimension_semantics=("parallel", "arbitrary"),
            vmem_limit_bytes=vmem_limit,
        ),
    )(x, h0, w_ih, w_h_all, w_att_x, b_ih, b_h_all)

    if T_pad != T or H_pad != H:
        out = out[:, :T, :H]
    return out


def init_params(key, input_size, hidden_size):
    """Deterministic synthetic parameters (PyTorch-like uniform init)."""
    I, H = input_size, hidden_size
    ks = jax.random.split(key, 6)
    s = 1.0 / jnp.sqrt(H)
    # PyTorch GRUCell: weight_ih [3H, I], weight_hh [3H, H]  -> stored transposed.
    w_ih = jax.random.uniform(ks[0], (3 * H, I), jnp.float32, -s, s).T
    w_hh = jax.random.uniform(ks[1], (3 * H, H), jnp.float32, -s, s).T
    b_ih = jax.random.uniform(ks[2], (1, 3 * H), jnp.float32, -s, s)
    b_hh = jax.random.uniform(ks[3], (1, 3 * H), jnp.float32, -s, s)
    # Attention Linear(I+H -> I): weight [I, I+H], bias [I]
    sa = 1.0 / jnp.sqrt(I + H)
    w_att = jax.random.uniform(ks[4], (I, I + H), jnp.float32, -sa, sa)
    b_att = jax.random.uniform(ks[5], (1, I), jnp.float32, -sa, sa)
    return {
        "w_ih": w_ih, "w_hh": w_hh, "b_ih": b_ih, "b_hh": b_hh,
        "w_att_x": w_att[:, :I].T,   # (I, I)
        "w_att_h": w_att[:, I:].T,   # (H, I)
        "b_att": b_att,
    }


def ref_forward(inputs_btI, hid0, p):
    """Pure-JAX f32 reference replicating the PyTorch module forward (atten=True)."""
    B, T, I = inputs_btI.shape
    H = hid0.shape[1]
    h = hid0
    outs = []
    for t in range(T):
        x = inputs_btI[:, t, :]
        a = jax.nn.sigmoid(x @ p["w_att_x"] + h @ p["w_att_h"] + p["b_att"])
        x = x * a
        gx = x @ p["w_ih"] + p["b_ih"]
        gh = h @ p["w_hh"] + p["b_hh"]
        r = jax.nn.sigmoid(gx[:, :H] + gh[:, :H])
        z = jax.nn.sigmoid(gx[:, H:2 * H] + gh[:, H:2 * H])
        n = jnp.tanh(gx[:, 2 * H:] + r * gh[:, 2 * H:])
        h = (1.0 - z) * n + z * h
        outs.append(h)
    return jnp.stack(outs, axis=1)


if __name__ == "__main__":
    B, T, I, H = 2, 8, 16, 32
    key = jax.random.PRNGKey(0)
    k_in, k_h, k_p = jax.random.split(key, 3)

    inputs = jax.random.normal(k_in, (B, T, I), jnp.float32)
    hid0 = jax.random.normal(k_h, (B, H), jnp.float32)
    params = init_params(k_p, I, H)

    out = gru_att_forward(inputs, hid0, params)
    out = jax.block_until_ready(out)

    ref = ref_forward(inputs, hid0, params)
    assert out.shape == (B, T, H)
    # Tolerance loosened vs. the f32 reference because matmul operands / the
    # streamed input are bf16 (f32 accumulation); elementwise math and the
    # recurrence carry stay f32.
    assert jnp.allclose(out, ref, rtol=5e-2, atol=5e-2), "mismatch vs JAX reference"

    print("KERNEL_OK")
</pallas_src>

<mosaic_0001>
module attributes {stable_mosaic.version = 11 : i64} {
  func.func @_gru_att_kernel(%arg0: i32, %arg1: i32, %arg2: memref<2x8x128xbf16, #tpu.memory_space<vmem>>, %arg3: memref<2x128xf32, #tpu.memory_space<vmem>>, %arg4: memref<128x384xbf16, #tpu.memory_space<vmem>>, %arg5: memref<128x512xbf16, #tpu.memory_space<vmem>>, %arg6: memref<128x128xbf16, #tpu.memory_space<vmem>>, %arg7: memref<1x384xf32, #tpu.memory_space<vmem>>, %arg8: memref<1x512xf32, #tpu.memory_space<vmem>>, %arg9: memref<2x8x128xf32, #tpu.memory_space<vmem>>, %arg10: memref<2x128xf32, #tpu.memory_space<vmem>>) attributes {dimension_semantics = [#tpu.dimension_semantics<parallel>, #tpu.dimension_semantics<arbitrary>], iteration_bounds = array<i64: 1, 1>, scalar_prefetch = 0 : i64, scratch_operands = 1 : i64, tpu.core_type = #tpu.core_type<tc>, window_params = [{transform_indices = @transform_0, window_bounds = array<i64: 2, 8, 128>}, {transform_indices = @transform_1, window_bounds = array<i64: 2, 128>}, {pipeline_mode = #tpu.pipeline_mode<synchronous>, transform_indices = @transform_2, window_bounds = array<i64: 128, 384>}, {pipeline_mode = #tpu.pipeline_mode<synchronous>, transform_indices = @transform_3, window_bounds = array<i64: 128, 512>}, {pipeline_mode = #tpu.pipeline_mode<synchronous>, transform_indices = @transform_4, window_bounds = array<i64: 128, 128>}, {pipeline_mode = #tpu.pipeline_mode<synchronous>, transform_indices = @transform_5, window_bounds = array<i64: 1, 384>}, {pipeline_mode = #tpu.pipeline_mode<synchronous>, transform_indices = @transform_6, window_bounds = array<i64: 1, 512>}, {transform_indices = @transform_7, window_bounds = array<i64: 2, 8, 128>}]} {
    %c0_i32 = arith.constant 0 : i32
    %0 = arith.cmpi eq, %arg1, %c0_i32 : i32
    %1 = arith.extui %0 : i1 to i32
    %c0_i32_0 = arith.constant 0 : i32
    %2 = arith.cmpi ne, %1, %c0_i32_0 : i32
    scf.if %2 {
      %c0_60 = arith.constant 0 : index
      %c0_61 = arith.constant 0 : index
      %360 = vector.load %arg3[%c0_60, %c0_61] : memref<2x128xf32, #tpu.memory_space<vmem>>, vector<2x128xf32>
      %c0_62 = arith.constant 0 : index
      %c0_63 = arith.constant 0 : index
      %361 = vector.load %arg10[%c0_62, %c0_63] : memref<2x128xf32, #tpu.memory_space<vmem>>, vector<2x128xf32>
      tpu.vector_store %arg10[%c0_62, %c0_63], %360 {strides = array<i32>} : memref<2x128xf32, #tpu.memory_space<vmem>>, vector<2x128xf32>,
    } else {
    }
    %c0 = arith.constant 0 : index
    %c0_1 = arith.constant 0 : index
    %3 = vector.load %arg4[%c0, %c0_1] : memref<128x384xbf16, #tpu.memory_space<vmem>>, vector<128x384xbf16>
    %c0_2 = arith.constant 0 : index
    %c0_3 = arith.constant 0 : index
    %4 = vector.load %arg5[%c0_2, %c0_3] : memref<128x512xbf16, #tpu.memory_space<vmem>>, vector<128x512xbf16>
    %c0_4 = arith.constant 0 : index
    %c0_5 = arith.constant 0 : index
    %5 = vector.load %arg7[%c0_4, %c0_5] : memref<1x384xf32, #tpu.memory_space<vmem>>, vector<1x384xf32>
    %c0_6 = arith.constant 0 : index
    %c0_7 = arith.constant 0 : index
    %6 = vector.load %arg8[%c0_6, %c0_7] : memref<1x512xf32, #tpu.memory_space<vmem>>, vector<1x512xf32>
    %c0_8 = arith.constant 0 : index
    %c0_9 = arith.constant 0 : index
    %c0_10 = arith.constant 0 : index
    %7 = vector.load %arg2[%c0_8, %c0_9, %c0_10] : memref<2x8x128xbf16, #tpu.memory_space<vmem>>, vector<2x8x128xbf16>
    %8 = vector.shape_cast %7 : vector<2x8x128xbf16> to vector<16x128xbf16>
    %c0_11 = arith.constant 0 : index
    %c0_12 = arith.constant 0 : index
    %9 = vector.load %arg6[%c0_11, %c0_12] : memref<128x128xbf16, #tpu.memory_space<vmem>>, vector<128x128xbf16>
    %cst = arith.constant dense<0.000000e+00> : vector<16x128xf32>
    %10 = tpu.matmul %8, %9, %cst {dimension_numbers = #tpu.dot_dimension_numbers<[1], [0], [0], [1], [0, 0, 1, 1], [], []>} : vector<16x128xbf16>, vector<128x128xbf16>, vector<16x128xf32> -> vector<16x128xf32>
    %11 = vector.shape_cast %10 : vector<16x128xf32> to vector<2x8x128xf32>
    %c0_13 = arith.constant 0 : index
    %c0_14 = arith.constant 0 : index
    %12 = vector.load %arg10[%c0_13, %c0_14] : memref<2x128xf32, #tpu.memory_space<vmem>>, vector<2x128xf32>
    %13 = arith.truncf %12 : vector<2x128xf32> to vector<2x128xbf16>
    %cst_15 = arith.constant dense<0.000000e+00> : vector<2x512xf32>
    %14 = tpu.matmul %13, %4, %cst_15 {dimension_numbers = #tpu.dot_dimension_numbers<[1], [0], [0], [1], [0, 0, 1, 1], [], []>} : vector<2x128xbf16>, vector<128x512xbf16>, vector<2x512xf32> -> vector<2x512xf32>
    %15 = vector.broadcast %6 : vector<1x512xf32> to vector<2x512xf32>
    %16 = arith.addf %14, %15 : vector<2x512xf32>
    %17 = vector.extract_strided_slice %16 {offsets = [0, 0], sizes = [2, 128], strides = [1, 1]} : vector<2x512xf32> to vector<2x128xf32>
    %18 = vector.extract_strided_slice %16 {offsets = [0, 128], sizes = [2, 384], strides = [1, 1]} : vector<2x512xf32> to vector<2x384xf32>
    %19 = vector.extract_strided_slice %11 {offsets = [0, 0, 0], sizes = [2, 1, 128], strides = [1, 1, 1]} : vector<2x8x128xf32> to vector<2x1x128xf32>
    %20 = vector.shape_cast %19 : vector<2x1x128xf32> to vector<2x128xf32>
    %21 = arith.addf %20, %17 : vector<2x128xf32>
    %22 = arith.negf %21 : vector<2x128xf32>
    %23 = math.exp %22 : vector<2x128xf32>
    %cst_16 = arith.constant 1.000000e+00 : f32
    %24 = vector.broadcast %cst_16 : f32 to vector<2x128xf32>
    %25 = arith.addf %24, %23 : vector<2x128xf32>
    %26 = arith.divf %24, %25 : vector<2x128xf32>
    %27 = vector.extract_strided_slice %7 {offsets = [0, 0, 0], sizes = [2, 1, 128], strides = [1, 1, 1]} : vector<2x8x128xbf16> to vector<2x1x128xbf16>
    %28 = vector.shape_cast %27 : vector<2x1x128xbf16> to vector<2x128xbf16>
    %29 = arith.extf %28 : vector<2x128xbf16> to vector<2x128xf32>
    %30 = arith.mulf %29, %26 : vector<2x128xf32>
    %31 = arith.truncf %30 : vector<2x128xf32> to vector<2x128xbf16>
    %cst_17 = arith.constant dense<0.000000e+00> : vector<2x384xf32>
    %32 = tpu.matmul %31, %3, %cst_17 {dimension_numbers = #tpu.dot_dimension_numbers<[1], [0], [0], [1], [0, 0, 1, 1], [], []>} : vector<2x128xbf16>, vector<128x384xbf16>, vector<2x384xf32> -> vector<2x384xf32>
    %33 = vector.broadcast %5 : vector<1x384xf32> to vector<2x384xf32>
    %34 = arith.addf %32, %33 : vector<2x384xf32>
    %35 = vector.extract_strided_slice %34 {offsets = [0, 0], sizes = [2, 256], strides = [1, 1]} : vector<2x384xf32> to vector<2x256xf32>
    %36 = vector.extract_strided_slice %18 {offsets = [0, 0], sizes = [2, 256], strides = [1, 1]} : vector<2x384xf32> to vector<2x256xf32>
    %37 = arith.addf %35, %36 : vector<2x256xf32>
    %38 = arith.negf %37 : vector<2x256xf32>
    %39 = math.exp %38 : vector<2x256xf32>
    %cst_18 = arith.constant 1.000000e+00 : f32
    %40 = vector.broadcast %cst_18 : f32 to vector<2x256xf32>
    %41 = arith.addf %40, %39 : vector<2x256xf32>
    %42 = arith.divf %40, %41 : vector<2x256xf32>
    %43 = vector.extract_strided_slice %42 {offsets = [0, 0], sizes = [2, 128], strides = [1, 1]} : vector<2x256xf32> to vector<2x128xf32>
    %44 = vector.extract_strided_slice %42 {offsets = [0, 128], sizes = [2, 128], strides = [1, 1]} : vector<2x256xf32> to vector<2x128xf32>
    %45 = vector.extract_strided_slice %34 {offsets = [0, 256], sizes = [2, 128], strides = [1, 1]} : vector<2x384xf32> to vector<2x128xf32>
    %46 = vector.extract_strided_slice %18 {offsets = [0, 256], sizes = [2, 128], strides = [1, 1]} : vector<2x384xf32> to vector<2x128xf32>
    %47 = arith.mulf %43, %46 : vector<2x128xf32>
    %48 = arith.addf %45, %47 : vector<2x128xf32>
    %49 = math.tanh %48 : vector<2x128xf32>
    %cst_19 = arith.constant 1.000000e+00 : f32
    %50 = vector.broadcast %cst_19 : f32 to vector<2x128xf32>
    %51 = arith.subf %50, %44 : vector<2x128xf32>
    %52 = arith.mulf %51, %49 : vector<2x128xf32>
    %53 = arith.mulf %44, %12 : vector<2x128xf32>
    %54 = arith.addf %52, %53 : vector<2x128xf32>
    %55 = arith.truncf %54 : vector<2x128xf32> to vector<2x128xbf16>
    %cst_20 = arith.constant dense<0.000000e+00> : vector<2x512xf32>
    %56 = tpu.matmul %55, %4, %cst_20 {dimension_numbers = #tpu.dot_dimension_numbers<[1], [0], [0], [1], [0, 0, 1, 1], [], []>} : vector<2x128xbf16>, vector<128x512xbf16>, vector<2x512xf32> -> vector<2x512xf32>
    %57 = vector.broadcast %6 : vector<1x512xf32> to vector<2x512xf32>
    %58 = arith.addf %56, %57 : vector<2x512xf32>
    %59 = vector.extract_strided_slice %58 {offsets = [0, 0], sizes = [2, 128], strides = [1, 1]} : vector<2x512xf32> to vector<2x128xf32>
    %60 = vector.extract_strided_slice %58 {offsets = [0, 128], sizes = [2, 384], strides = [1, 1]} : vector<2x512xf32> to vector<2x384xf32>
    %61 = vector.extract_strided_slice %11 {offsets = [0, 1, 0], sizes = [2, 1, 128], strides = [1, 1, 1]} : vector<2x8x128xf32> to vector<2x1x128xf32>
    %62 = vector.shape_cast %61 : vector<2x1x128xf32> to vector<2x128xf32>
    %63 = arith.addf %62, %59 : vector<2x128xf32>
    %64 = arith.negf %63 : vector<2x128xf32>
    %65 = math.exp %64 : vector<2x128xf32>
    %cst_21 = arith.constant 1.000000e+00 : f32
    %66 = vector.broadcast %cst_21 : f32 to vector<2x128xf32>
    %67 = arith.addf %66, %65 : vector<2x128xf32>
    %68 = arith.divf %66, %67 : vector<2x128xf32>
    %69 = vector.extract_strided_slice %7 {offsets = [0, 1, 0], sizes = [2, 1, 128], strides = [1, 1, 1]} : vector<2x8x128xbf16> to vector<2x1x128xbf16>
    %70 = vector.shape_cast %69 : vector<2x1x128xbf16> to vector<2x128xbf16>
    %71 = arith.extf %70 : vector<2x128xbf16> to vector<2x128xf32>
    %72 = arith.mulf %71, %68 : vector<2x128xf32>
    %73 = arith.truncf %72 : vector<2x128xf32> to vector<2x128xbf16>
    %cst_22 = arith.constant dense<0.000000e+00> : vector<2x384xf32>
    %74 = tpu.matmul %73, %3, %cst_22 {dimension_numbers = #tpu.dot_dimension_numbers<[1], [0], [0], [1], [0, 0, 1, 1], [], []>} : vector<2x128xbf16>, vector<128x384xbf16>, vector<2x384xf32> -> vector<2x384xf32>
    %75 = vector.broadcast %5 : vector<1x384xf32> to vector<2x384xf32>
    %76 = arith.addf %74, %75 : vector<2x384xf32>
    %77 = vector.extract_strided_slice %76 {offsets = [0, 0], sizes = [2, 256], strides = [1, 1]} : vector<2x384xf32> to vector<2x256xf32>
    %78 = vector.extract_strided_slice %60 {offsets = [0, 0], sizes = [2, 256], strides = [1, 1]} : vector<2x384xf32> to vector<2x256xf32>
    %79 = arith.addf %77, %78 : vector<2x256xf32>
    %80 = arith.negf %79 : vector<2x256xf32>
    %81 = math.exp %80 : vector<2x256xf32>
    %cst_23 = arith.constant 1.000000e+00 : f32
    %82 = vector.broadcast %cst_23 : f32 to vector<2x256xf32>
    %83 = arith.addf %82, %81 : vector<2x256xf32>
    %84 = arith.divf %82, %83 : vector<2x256xf32>
    %85 = vector.extract_strided_slice %84 {offsets = [0, 0], sizes = [2, 128], strides = [1, 1]} : vector<2x256xf32> to vector<2x128xf32>
    %86 = vector.extract_strided_slice %84 {offsets = [0, 128], sizes = [2, 128], strides = [1, 1]} : vector<2x256xf32> to vector<2x128xf32>
    %87 = vector.extract_strided_slice %76 {offsets = [0, 256], sizes = [2, 128], strides = [1, 1]} : vector<2x384xf32> to vector<2x128xf32>
    %88 = vector.extract_strided_slice %60 {offsets = [0, 256], sizes = [2, 128], strides = [1, 1]} : vector<2x384xf32> to vector<2x128xf32>
    %89 = arith.mulf %85, %88 : vector<2x128xf32>
    %90 = arith.addf %87, %89 : vector<2x128xf32>
    %91 = math.tanh %90 : vector<2x128xf32>
    %cst_24 = arith.constant 1.000000e+00 : f32
    %92 = vector.broadcast %cst_24 : f32 to vector<2x128xf32>
    %93 = arith.subf %92, %86 : vector<2x128xf32>
    %94 = arith.mulf %93, %91 : vector<2x128xf32>
    %95 = arith.mulf %86, %54 : vector<2x128xf32>
    %96 = arith.addf %94, %95 : vector<2x128xf32>
    %97 = arith.truncf %96 : vector<2x128xf32> to vector<2x128xbf16>
    %cst_25 = arith.constant dense<0.000000e+00> : vector<2x512xf32>
    %98 = tpu.matmul %97, %4, %cst_25 {dimension_numbers = #tpu.dot_dimension_numbers<[1], [0], [0], [1], [0, 0, 1, 1], [], []>} : vector<2x128xbf16>, vector<128x512xbf16>, vector<2x512xf32> -> vector<2x512xf32>
    %99 = vector.broadcast %6 : vector<1x512xf32> to vector<2x512xf32>
    %100 = arith.addf %98, %99 : vector<2x512xf32>
    %101 = vector.extract_strided_slice %100 {offsets = [0, 0], sizes = [2, 128], strides = [1, 1]} : vector<2x512xf32> to vector<2x128xf32>
    %102 = vector.extract_strided_slice %100 {offsets = [0, 128], sizes = [2, 384], strides = [1, 1]} : vector<2x512xf32> to vector<2x384xf32>
    %103 = vector.extract_strided_slice %11 {offsets = [0, 2, 0], sizes = [2, 1, 128], strides = [1, 1, 1]} : vector<2x8x128xf32> to vector<2x1x128xf32>
    %104 = vector.shape_cast %103 : vector<2x1x128xf32> to vector<2x128xf32>
    %105 = arith.addf %104, %101 : vector<2x128xf32>
    %106 = arith.negf %105 : vector<2x128xf32>
    %107 = math.exp %106 : vector<2x128xf32>
    %cst_26 = arith.constant 1.000000e+00 : f32
    %108 = vector.broadcast %cst_26 : f32 to vector<2x128xf32>
    %109 = arith.addf %108, %107 : vector<2x128xf32>
    %110 = arith.divf %108, %109 : vector<2x128xf32>
    %111 = vector.extract_strided_slice %7 {offsets = [0, 2, 0], sizes = [2, 1, 128], strides = [1, 1, 1]} : vector<2x8x128xbf16> to vector<2x1x128xbf16>
    %112 = vector.shape_cast %111 : vector<2x1x128xbf16> to vector<2x128xbf16>
    %113 = arith.extf %112 : vector<2x128xbf16> to vector<2x128xf32>
    %114 = arith.mulf %113, %110 : vector<2x128xf32>
    %115 = arith.truncf %114 : vector<2x128xf32> to vector<2x128xbf16>
    %cst_27 = arith.constant dense<0.000000e+00> : vector<2x384xf32>
    %116 = tpu.matmul %115, %3, %cst_27 {dimension_numbers = #tpu.dot_dimension_numbers<[1], [0], [0], [1], [0, 0, 1, 1], [], []>} : vector<2x128xbf16>, vector<128x384xbf16>, vector<2x384xf32> -> vector<2x384xf32>
    %117 = vector.broadcast %5 : vector<1x384xf32> to vector<2x384xf32>
    %118 = arith.addf %116, %117 : vector<2x384xf32>
    %119 = vector.extract_strided_slice %118 {offsets = [0, 0], sizes = [2, 256], strides = [1, 1]} : vector<2x384xf32> to vector<2x256xf32>
    %120 = vector.extract_strided_slice %102 {offsets = [0, 0], sizes = [2, 256], strides = [1, 1]} : vector<2x384xf32> to vector<2x256xf32>
    %121 = arith.addf %119, %120 : vector<2x256xf32>
    %122 = arith.negf %121 : vector<2x256xf32>
    %123 = math.exp %122 : vector<2x256xf32>
    %cst_28 = arith.constant 1.000000e+00 : f32
    %124 = vector.broadcast %cst_28 : f32 to vector<2x256xf32>
    %125 = arith.addf %124, %123 : vector<2x256xf32>
    %126 = arith.divf %124, %125 : vector<2x256xf32>
    %127 = vector.extract_strided_slice %126 {offsets = [0, 0], sizes = [2, 128], strides = [1, 1]} : vector<2x256xf32> to vector<2x128xf32>
    %128 = vector.extract_strided_slice %126 {offsets = [0, 128], sizes = [2, 128], strides = [1, 1]} : vector<2x256xf32> to vector<2x128xf32>
    %129 = vector.extract_strided_slice %118 {offsets = [0, 256], sizes = [2, 128], strides = [1, 1]} : vector<2x384xf32> to vector<2x128xf32>
    %130 = vector.extract_strided_slice %102 {offsets = [0, 256], sizes = [2, 128], strides = [1, 1]} : vector<2x384xf32> to vector<2x128xf32>
    %131 = arith.mulf %127, %130 : vector<2x128xf32>
    %132 = arith.addf %129, %131 : vector<2x128xf32>
    %133 = math.tanh %132 : vector<2x128xf32>
    %cst_29 = arith.constant 1.000000e+00 : f32
    %134 = vector.broadcast %cst_29 : f32 to vector<2x128xf32>
    %135 = arith.subf %134, %128 : vector<2x128xf32>
    %136 = arith.mulf %135, %133 : vector<2x128xf32>
    %137 = arith.mulf %128, %96 : vector<2x128xf32>
    %138 = arith.addf %136, %137 : vector<2x128xf32>
    %139 = arith.truncf %138 : vector<2x128xf32> to vector<2x128xbf16>
    %cst_30 = arith.constant dense<0.000000e+00> : vector<2x512xf32>
    %140 = tpu.matmul %139, %4, %cst_30 {dimension_numbers = #tpu.dot_dimension_numbers<[1], [0], [0], [1], [0, 0, 1, 1], [], []>} : vector<2x128xbf16>, vector<128x512xbf16>, vector<2x512xf32> -> vector<2x512xf32>
    %141 = vector.broadcast %6 : vector<1x512xf32> to vector<2x512xf32>
    %142 = arith.addf %140, %141 : vector<2x512xf32>
    %143 = vector.extract_strided_slice %142 {offsets = [0, 0], sizes = [2, 128], strides = [1, 1]} : vector<2x512xf32> to vector<2x128xf32>
    %144 = vector.extract_strided_slice %142 {offsets = [0, 128], sizes = [2, 384], strides = [1, 1]} : vector<2x512xf32> to vector<2x384xf32>
    %145 = vector.extract_strided_slice %11 {offsets = [0, 3, 0], sizes = [2, 1, 128], strides = [1, 1, 1]} : vector<2x8x128xf32> to vector<2x1x128xf32>
    %146 = vector.shape_cast %145 : vector<2x1x128xf32> to vector<2x128xf32>
    %147 = arith.addf %146, %143 : vector<2x128xf32>
    %148 = arith.negf %147 : vector<2x128xf32>
    %149 = math.exp %148 : vector<2x128xf32>
    %cst_31 = arith.constant 1.000000e+00 : f32
    %150 = vector.broadcast %cst_31 : f32 to vector<2x128xf32>
    %151 = arith.addf %150, %149 : vector<2x128xf32>
    %152 = arith.divf %150, %151 : vector<2x128xf32>
    %153 = vector.extract_strided_slice %7 {offsets = [0, 3, 0], sizes = [2, 1, 128], strides = [1, 1, 1]} : vector<2x8x128xbf16> to vector<2x1x128xbf16>
    %154 = vector.shape_cast %153 : vector<2x1x128xbf16> to vector<2x128xbf16>
    %155 = arith.extf %154 : vector<2x128xbf16> to vector<2x128xf32>
    %156 = arith.mulf %155, %152 : vector<2x128xf32>
    %157 = arith.truncf %156 : vector<2x128xf32> to vector<2x128xbf16>
    %cst_32 = arith.constant dense<0.000000e+00> : vector<2x384xf32>
    %158 = tpu.matmul %157, %3, %cst_32 {dimension_numbers = #tpu.dot_dimension_numbers<[1], [0], [0], [1], [0, 0, 1, 1], [], []>} : vector<2x128xbf16>, vector<128x384xbf16>, vector<2x384xf32> -> vector<2x384xf32>
    %159 = vector.broadcast %5 : vector<1x384xf32> to vector<2x384xf32>
    %160 = arith.addf %158, %159 : vector<2x384xf32>
    %161 = vector.extract_strided_slice %160 {offsets = [0, 0], sizes = [2, 256], strides = [1, 1]} : vector<2x384xf32> to vector<2x256xf32>
    %162 = vector.extract_strided_slice %144 {offsets = [0, 0], sizes = [2, 256], strides = [1, 1]} : vector<2x384xf32> to vector<2x256xf32>
    %163 = arith.addf %161, %162 : vector<2x256xf32>
    %164 = arith.negf %163 : vector<2x256xf32>
    %165 = math.exp %164 : vector<2x256xf32>
    %cst_33 = arith.constant 1.000000e+00 : f32
    %166 = vector.broadcast %cst_33 : f32 to vector<2x256xf32>
    %167 = arith.addf %166, %165 : vector<2x256xf32>
    %168 = arith.divf %166, %167 : vector<2x256xf32>
    %169 = vector.extract_strided_slice %168 {offsets = [0, 0], sizes = [2, 128], strides = [1, 1]} : vector<2x256xf32> to vector<2x128xf32>
    %170 = vector.extract_strided_slice %168 {offsets = [0, 128], sizes = [2, 128], strides = [1, 1]} : vector<2x256xf32> to vector<2x128xf32>
    %171 = vector.extract_strided_slice %160 {offsets = [0, 256], sizes = [2, 128], strides = [1, 1]} : vector<2x384xf32> to vector<2x128xf32>
    %172 = vector.extract_strided_slice %144 {offsets = [0, 256], sizes = [2, 128], strides = [1, 1]} : vector<2x384xf32> to vector<2x128xf32>
    %173 = arith.mulf %169, %172 : vector<2x128xf32>
    %174 = arith.addf %171, %173 : vector<2x128xf32>
    %175 = math.tanh %174 : vector<2x128xf32>
    %cst_34 = arith.constant 1.000000e+00 : f32
    %176 = vector.broadcast %cst_34 : f32 to vector<2x128xf32>
    %177 = arith.subf %176, %170 : vector<2x128xf32>
    %178 = arith.mulf %177, %175 : vector<2x128xf32>
    %179 = arith.mulf %170, %138 : vector<2x128xf32>
    %180 = arith.addf %178, %179 : vector<2x128xf32>
    %181 = arith.truncf %180 : vector<2x128xf32> to vector<2x128xbf16>
    %cst_35 = arith.constant dense<0.000000e+00> : vector<2x512xf32>
    %182 = tpu.matmul %181, %4, %cst_35 {dimension_numbers = #tpu.dot_dimension_numbers<[1], [0], [0], [1], [0, 0, 1, 1], [], []>} : vector<2x128xbf16>, vector<128x512xbf16>, vector<2x512xf32> -> vector<2x512xf32>
    %183 = vector.broadcast %6 : vector<1x512xf32> to vector<2x512xf32>
    %184 = arith.addf %182, %183 : vector<2x512xf32>
    %185 = vector.extract_strided_slice %184 {offsets = [0, 0], sizes = [2, 128], strides = [1, 1]} : vector<2x512xf32> to vector<2x128xf32>
    %186 = vector.extract_strided_slice %184 {offsets = [0, 128], sizes = [2, 384], strides = [1, 1]} : vector<2x512xf32> to vector<2x384xf32>
    %187 = vector.extract_strided_slice %11 {offsets = [0, 4, 0], sizes = [2, 1, 128], strides = [1, 1, 1]} : vector<2x8x128xf32> to vector<2x1x128xf32>
    %188 = vector.shape_cast %187 : vector<2x1x128xf32> to vector<2x128xf32>
    %189 = arith.addf %188, %185 : vector<2x128xf32>
    %190 = arith.negf %189 : vector<2x128xf32>
    %191 = math.exp %190 : vector<2x128xf32>
    %cst_36 = arith.constant 1.000000e+00 : f32
    %192 = vector.broadcast %cst_36 : f32 to vector<2x128xf32>
    %193 = arith.addf %192, %191 : vector<2x128xf32>
    %194 = arith.divf %192, %193 : vector<2x128xf32>
    %195 = vector.extract_strided_slice %7 {offsets = [0, 4, 0], sizes = [2, 1, 128], strides = [1, 1, 1]} : vector<2x8x128xbf16> to vector<2x1x128xbf16>
    %196 = vector.shape_cast %195 : vector<2x1x128xbf16> to vector<2x128xbf16>
    %197 = arith.extf %196 : vector<2x128xbf16> to vector<2x128xf32>
    %198 = arith.mulf %197, %194 : vector<2x128xf32>
    %199 = arith.truncf %198 : vector<2x128xf32> to vector<2x128xbf16>
    %cst_37 = arith.constant dense<0.000000e+00> : vector<2x384xf32>
    %200 = tpu.matmul %199, %3, %cst_37 {dimension_numbers = #tpu.dot_dimension_numbers<[1], [0], [0], [1], [0, 0, 1, 1], [], []>} : vector<2x128xbf16>, vector<128x384xbf16>, vector<2x384xf32> -> vector<2x384xf32>
    %201 = vector.broadcast %5 : vector<1x384xf32> to vector<2x384xf32>
    %202 = arith.addf %200, %201 : vector<2x384xf32>
    %203 = vector.extract_strided_slice %202 {offsets = [0, 0], sizes = [2, 256], strides = [1, 1]} : vector<2x384xf32> to vector<2x256xf32>
    %204 = vector.extract_strided_slice %186 {offsets = [0, 0], sizes = [2, 256], strides = [1, 1]} : vector<2x384xf32> to vector<2x256xf32>
    %205 = arith.addf %203, %204 : vector<2x256xf32>
    %206 = arith.negf %205 : vector<2x256xf32>
    %207 = math.exp %206 : vector<2x256xf32>
    %cst_38 = arith.constant 1.000000e+00 : f32
    %208 = vector.broadcast %cst_38 : f32 to vector<2x256xf32>
    %209 = arith.addf %208, %207 : vector<2x256xf32>
    %210 = arith.divf %208, %209 : vector<2x256xf32>
    %211 = vector.extract_strided_slice %210 {offsets = [0, 0], sizes = [2, 128], strides = [1, 1]} : vector<2x256xf32> to vector<2x128xf32>
    %212 = vector.extract_strided_slice %210 {offsets = [0, 128], sizes = [2, 128], strides = [1, 1]} : vector<2x256xf32> to vector<2x128xf32>
    %213 = vector.extract_strided_slice %202 {offsets = [0, 256], sizes = [2, 128], strides = [1, 1]} : vector<2x384xf32> to vector<2x128xf32>
    %214 = vector.extract_strided_slice %186 {offsets = [0, 256], sizes = [2, 128], strides = [1, 1]} : vector<2x384xf32> to vector<2x128xf32>
    %215 = arith.mulf %211, %214 : vector<2x128xf32>
    %216 = arith.addf %213, %215 : vector<2x128xf32>
    %217 = math.tanh %216 : vector<2x128xf32>
    %cst_39 = arith.constant 1.000000e+00 : f32
    %218 = vector.broadcast %cst_39 : f32 to vector<2x128xf32>
    %219 = arith.subf %218, %212 : vector<2x128xf32>
    %220 = arith.mulf %219, %217 : vector<2x128xf32>
    %221 = arith.mulf %212, %180 : vector<2x128xf32>
    %222 = arith.addf %220, %221 : vector<2x128xf32>
    %223 = arith.truncf %222 : vector<2x128xf32> to vector<2x128xbf16>
    %cst_40 = arith.constant dense<0.000000e+00> : vector<2x512xf32>
    %224 = tpu.matmul %223, %4, %cst_40 {dimension_numbers = #tpu.dot_dimension_numbers<[1], [0], [0], [1], [0, 0, 1, 1], [], []>} : vector<2x128xbf16>, vector<128x512xbf16>, vector<2x512xf32> -> vector<2x512xf32>
    %225 = vector.broadcast %6 : vector<1x512xf32> to vector<2x512xf32>
    %226 = arith.addf %224, %225 : vector<2x512xf32>
    %227 = vector.extract_strided_slice %226 {offsets = [0, 0], sizes = [2, 128], strides = [1, 1]} : vector<2x512xf32> to vector<2x128xf32>
    %228 = vector.extract_strided_slice %226 {offsets = [0, 128], sizes = [2, 384], strides = [1, 1]} : vector<2x512xf32> to vector<2x384xf32>
    %229 = vector.extract_strided_slice %11 {offsets = [0, 5, 0], sizes = [2, 1, 128], strides = [1, 1, 1]} : vector<2x8x128xf32> to vector<2x1x128xf32>
    %230 = vector.shape_cast %229 : vector<2x1x128xf32> to vector<2x128xf32>
    %231 = arith.addf %230, %227 : vector<2x128xf32>
    %232 = arith.negf %231 : vector<2x128xf32>
    %233 = math.exp %232 : vector<2x128xf32>
    %cst_41 = arith.constant 1.000000e+00 : f32
    %234 = vector.broadcast %cst_41 : f32 to vector<2x128xf32>
    %235 = arith.addf %234, %233 : vector<2x128xf32>
    %236 = arith.divf %234, %235 : vector<2x128xf32>
    %237 = vector.extract_strided_slice %7 {offsets = [0, 5, 0], sizes = [2, 1, 128], strides = [1, 1, 1]} : vector<2x8x128xbf16> to vector<2x1x128xbf16>
    %238 = vector.shape_cast %237 : vector<2x1x128xbf16> to vector<2x128xbf16>
    %239 = arith.extf %238 : vector<2x128xbf16> to vector<2x128xf32>
    %240 = arith.mulf %239, %236 : vector<2x128xf32>
    %241 = arith.truncf %240 : vector<2x128xf32> to vector<2x128xbf16>
    %cst_42 = arith.constant dense<0.000000e+00> : vector<2x384xf32>
    %242 = tpu.matmul %241, %3, %cst_42 {dimension_numbers = #tpu.dot_dimension_numbers<[1], [0], [0], [1], [0, 0, 1, 1], [], []>} : vector<2x128xbf16>, vector<128x384xbf16>, vector<2x384xf32> -> vector<2x384xf32>
    %243 = vector.broadcast %5 : vector<1x384xf32> to vector<2x384xf32>
    %244 = arith.addf %242, %243 : vector<2x384xf32>
    %245 = vector.extract_strided_slice %244 {offsets = [0, 0], sizes = [2, 256], strides = [1, 1]} : vector<2x384xf32> to vector<2x256xf32>
    %246 = vector.extract_strided_slice %228 {offsets = [0, 0], sizes = [2, 256], strides = [1, 1]} : vector<2x384xf32> to vector<2x256xf32>
    %247 = arith.addf %245, %246 : vector<2x256xf32>
    %248 = arith.negf %247 : vector<2x256xf32>
    %249 = math.exp %248 : vector<2x256xf32>
    %cst_43 = arith.constant 1.000000e+00 : f32
    %250 = vector.broadcast %cst_43 : f32 to vector<2x256xf32>
    %251 = arith.addf %250, %249 : vector<2x256xf32>
    %252 = arith.divf %250, %251 : vector<2x256xf32>
    %253 = vector.extract_strided_slice %252 {offsets = [0, 0], sizes = [2, 128], strides = [1, 1]} : vector<2x256xf32> to vector<2x128xf32>
    %254 = vector.extract_strided_slice %252 {offsets = [0, 128], sizes = [2, 128], strides = [1, 1]} : vector<2x256xf32> to vector<2x128xf32>
    %255 = vector.extract_strided_slice %244 {offsets = [0, 256], sizes = [2, 128], strides = [1, 1]} : vector<2x384xf32> to vector<2x128xf32>
    %256 = vector.extract_strided_slice %228 {offsets = [0, 256], sizes = [2, 128], strides = [1, 1]} : vector<2x384xf32> to vector<2x128xf32>
    %257 = arith.mulf %253, %256 : vector<2x128xf32>
    %258 = arith.addf %255, %257 : vector<2x128xf32>
    %259 = math.tanh %258 : vector<2x128xf32>
    %cst_44 = arith.constant 1.000000e+00 : f32
    %260 = vector.broadcast %cst_44 : f32 to vector<2x128xf32>
    %261 = arith.subf %260, %254 : vector<2x128xf32>
    %262 = arith.mulf %261, %259 : vector<2x128xf32>
    %263 = arith.mulf %254, %222 : vector<2x128xf32>
    %264 = arith.addf %262, %263 : vector<2x128xf32>
    %265 = arith.truncf %264 : vector<2x128xf32> to vector<2x128xbf16>
    %cst_45 = arith.constant dense<0.000000e+00> : vector<2x512xf32>
    %266 = tpu.matmul %265, %4, %cst_45 {dimension_numbers = #tpu.dot_dimension_numbers<[1], [0], [0], [1], [0, 0, 1, 1], [], []>} : vector<2x128xbf16>, vector<128x512xbf16>, vector<2x512xf32> -> vector<2x512xf32>
    %267 = vector.broadcast %6 : vector<1x512xf32> to vector<2x512xf32>
    %268 = arith.addf %266, %267 : vector<2x512xf32>
    %269 = vector.extract_strided_slice %268 {offsets = [0, 0], sizes = [2, 128], strides = [1, 1]} : vector<2x512xf32> to vector<2x128xf32>
    %270 = vector.extract_strided_slice %268 {offsets = [0, 128], sizes = [2, 384], strides = [1, 1]} : vector<2x512xf32> to vector<2x384xf32>
    %271 = vector.extract_strided_slice %11 {offsets = [0, 6, 0], sizes = [2, 1, 128], strides = [1, 1, 1]} : vector<2x8x128xf32> to vector<2x1x128xf32>
    %272 = vector.shape_cast %271 : vector<2x1x128xf32> to vector<2x128xf32>
    %273 = arith.addf %272, %269 : vector<2x128xf32>
    %274 = arith.negf %273 : vector<2x128xf32>
    %275 = math.exp %274 : vector<2x128xf32>
    %cst_46 = arith.constant 1.000000e+00 : f32
    %276 = vector.broadcast %cst_46 : f32 to vector<2x128xf32>
    %277 = arith.addf %276, %275 : vector<2x128xf32>
    %278 = arith.divf %276, %277 : vector<2x128xf32>
    %279 = vector.extract_strided_slice %7 {offsets = [0, 6, 0], sizes = [2, 1, 128], strides = [1, 1, 1]} : vector<2x8x128xbf16> to vector<2x1x128xbf16>
    %280 = vector.shape_cast %279 : vector<2x1x128xbf16> to vector<2x128xbf16>
    %281 = arith.extf %280 : vector<2x128xbf16> to vector<2x128xf32>
    %282 = arith.mulf %281, %278 : vector<2x128xf32>
    %283 = arith.truncf %282 : vector<2x128xf32> to vector<2x128xbf16>
    %cst_47 = arith.constant dense<0.000000e+00> : vector<2x384xf32>
    %284 = tpu.matmul %283, %3, %cst_47 {dimension_numbers = #tpu.dot_dimension_numbers<[1], [0], [0], [1], [0, 0, 1, 1], [], []>} : vector<2x128xbf16>, vector<128x384xbf16>, vector<2x384xf32> -> vector<2x384xf32>
    %285 = vector.broadcast %5 : vector<1x384xf32> to vector<2x384xf32>
    %286 = arith.addf %284, %285 : vector<2x384xf32>
    %287 = vector.extract_strided_slice %286 {offsets = [0, 0], sizes = [2, 256], strides = [1, 1]} : vector<2x384xf32> to vector<2x256xf32>
    %288 = vector.extract_strided_slice %270 {offsets = [0, 0], sizes = [2, 256], strides = [1, 1]} : vector<2x384xf32> to vector<2x256xf32>
    %289 = arith.addf %287, %288 : vector<2x256xf32>
    %290 = arith.negf %289 : vector<2x256xf32>
    %291 = math.exp %290 : vector<2x256xf32>
    %cst_48 = arith.constant 1.000000e+00 : f32
    %292 = vector.broadcast %cst_48 : f32 to vector<2x256xf32>
    %293 = arith.addf %292, %291 : vector<2x256xf32>
    %294 = arith.divf %292, %293 : vector<2x256xf32>
    %295 = vector.extract_strided_slice %294 {offsets = [0, 0], sizes = [2, 128], strides = [1, 1]} : vector<2x256xf32> to vector<2x128xf32>
    %296 = vector.extract_strided_slice %294 {offsets = [0, 128], sizes = [2, 128], strides = [1, 1]} : vector<2x256xf32> to vector<2x128xf32>
    %297 = vector.extract_strided_slice %286 {offsets = [0, 256], sizes = [2, 128], strides = [1, 1]} : vector<2x384xf32> to vector<2x128xf32>
    %298 = vector.extract_strided_slice %270 {offsets = [0, 256], sizes = [2, 128], strides = [1, 1]} : vector<2x384xf32> to vector<2x128xf32>
    %299 = arith.mulf %295, %298 : vector<2x128xf32>
    %300 = arith.addf %297, %299 : vector<2x128xf32>
    %301 = math.tanh %300 : vector<2x128xf32>
    %cst_49 = arith.constant 1.000000e+00 : f32
    %302 = vector.broadcast %cst_49 : f32 to vector<2x128xf32>
    %303 = arith.subf %302, %296 : vector<2x128xf32>
    %304 = arith.mulf %303, %301 : vector<2x128xf32>
    %305 = arith.mulf %296, %264 : vector<2x128xf32>
    %306 = arith.addf %304, %305 : vector<2x128xf32>
    %307 = arith.truncf %306 : vector<2x128xf32> to vector<2x128xbf16>
    %cst_50 = arith.constant dense<0.000000e+00> : vector<2x512xf32>
    %308 = tpu.matmul %307, %4, %cst_50 {dimension_numbers = #tpu.dot_dimension_numbers<[1], [0], [0], [1], [0, 0, 1, 1], [], []>} : vector<2x128xbf16>, vector<128x512xbf16>, vector<2x512xf32> -> vector<2x512xf32>
    %309 = vector.broadcast %6 : vector<1x512xf32> to vector<2x512xf32>
    %310 = arith.addf %308, %309 : vector<2x512xf32>
    %311 = vector.extract_strided_slice %310 {offsets = [0, 0], sizes = [2, 128], strides = [1, 1]} : vector<2x512xf32> to vector<2x128xf32>
    %312 = vector.extract_strided_slice %310 {offsets = [0, 128], sizes = [2, 384], strides = [1, 1]} : vector<2x512xf32> to vector<2x384xf32>
    %313 = vector.extract_strided_slice %11 {offsets = [0, 7, 0], sizes = [2, 1, 128], strides = [1, 1, 1]} : vector<2x8x128xf32> to vector<2x1x128xf32>
    %314 = vector.shape_cast %313 : vector<2x1x128xf32> to vector<2x128xf32>
    %315 = arith.addf %314, %311 : vector<2x128xf32>
    %316 = arith.negf %315 : vector<2x128xf32>
    %317 = math.exp %316 : vector<2x128xf32>
    %cst_51 = arith.constant 1.000000e+00 : f32
    %318 = vector.broadcast %cst_51 : f32 to vector<2x128xf32>
    %319 = arith.addf %318, %317 : vector<2x128xf32>
    %320 = arith.divf %318, %319 : vector<2x128xf32>
    %321 = vector.extract_strided_slice %7 {offsets = [0, 7, 0], sizes = [2, 1, 128], strides = [1, 1, 1]} : vector<2x8x128xbf16> to vector<2x1x128xbf16>
    %322 = vector.shape_cast %321 : vector<2x1x128xbf16> to vector<2x128xbf16>
    %323 = arith.extf %322 : vector<2x128xbf16> to vector<2x128xf32>
    %324 = arith.mulf %323, %320 : vector<2x128xf32>
    %325 = arith.truncf %324 : vector<2x128xf32> to vector<2x128xbf16>
    %cst_52 = arith.constant dense<0.000000e+00> : vector<2x384xf32>
    %326 = tpu.matmul %325, %3, %cst_52 {dimension_numbers = #tpu.dot_dimension_numbers<[1], [0], [0], [1], [0, 0, 1, 1], [], []>} : vector<2x128xbf16>, vector<128x384xbf16>, vector<2x384xf32> -> vector<2x384xf32>
    %327 = vector.broadcast %5 : vector<1x384xf32> to vector<2x384xf32>
    %328 = arith.addf %326, %327 : vector<2x384xf32>
    %329 = vector.extract_strided_slice %328 {offsets = [0, 0], sizes = [2, 256], strides = [1, 1]} : vector<2x384xf32> to vector<2x256xf32>
    %330 = vector.extract_strided_slice %312 {offsets = [0, 0], sizes = [2, 256], strides = [1, 1]} : vector<2x384xf32> to vector<2x256xf32>
    %331 = arith.addf %329, %330 : vector<2x256xf32>
    %332 = arith.negf %331 : vector<2x256xf32>
    %333 = math.exp %332 : vector<2x256xf32>
    %cst_53 = arith.constant 1.000000e+00 : f32
    %334 = vector.broadcast %cst_53 : f32 to vector<2x256xf32>
    %335 = arith.addf %334, %333 : vector<2x256xf32>
    %336 = arith.divf %334, %335 : vector<2x256xf32>
    %337 = vector.extract_strided_slice %336 {offsets = [0, 0], sizes = [2, 128], strides = [1, 1]} : vector<2x256xf32> to vector<2x128xf32>
    %338 = vector.extract_strided_slice %336 {offsets = [0, 128], sizes = [2, 128], strides = [1, 1]} : vector<2x256xf32> to vector<2x128xf32>
    %339 = vector.extract_strided_slice %328 {offsets = [0, 256], sizes = [2, 128], strides = [1, 1]} : vector<2x384xf32> to vector<2x128xf32>
    %340 = vector.extract_strided_slice %312 {offsets = [0, 256], sizes = [2, 128], strides = [1, 1]} : vector<2x384xf32> to vector<2x128xf32>
    %341 = arith.mulf %337, %340 : vector<2x128xf32>
    %342 = arith.addf %339, %341 : vector<2x128xf32>
    %343 = math.tanh %342 : vector<2x128xf32>
    %cst_54 = arith.constant 1.000000e+00 : f32
    %344 = vector.broadcast %cst_54 : f32 to vector<2x128xf32>
    %345 = arith.subf %344, %338 : vector<2x128xf32>
    %346 = arith.mulf %345, %343 : vector<2x128xf32>
    %347 = arith.mulf %338, %306 : vector<2x128xf32>
    %348 = arith.addf %346, %347 : vector<2x128xf32>
    %349 = vector.shape_cast %54 : vector<2x128xf32> to vector<2x1x128xf32>
    %350 = vector.shape_cast %96 : vector<2x128xf32> to vector<2x1x128xf32>
    %351 = vector.shape_cast %138 : vector<2x128xf32> to vector<2x1x128xf32>
    %352 = vector.shape_cast %180 : vector<2x128xf32> to vector<2x1x128xf32>
    %353 = vector.shape_cast %222 : vector<2x128xf32> to vector<2x1x128xf32>
    %354 = vector.shape_cast %264 : vector<2x128xf32> to vector<2x1x128xf32>
    %355 = vector.shape_cast %306 : vector<2x128xf32> to vector<2x1x128xf32>
    %356 = vector.shape_cast %348 : vector<2x128xf32> to vector<2x1x128xf32>
    %357 = tpu.concatenate %349, %350, %351, %352, %353, %354, %355, %356 in 1 : vector<2x1x128xf32>, vector<2x1x128xf32>, vector<2x1x128xf32>, vector<2x1x128xf32>, vector<2x1x128xf32>, vector<2x1x128xf32>, vector<2x1x128xf32>, vector<2x1x128xf32> -> vector<2x8x128xf32>
    %c0_55 = arith.constant 0 : index
    %c0_56 = arith.constant 0 : index
    %c0_57 = arith.constant 0 : index
    %358 = vector.load %arg9[%c0_55, %c0_56, %c0_57] : memref<2x8x128xf32, #tpu.memory_space<vmem>>, vector<2x8x128xf32>
    tpu.vector_store %arg9[%c0_55, %c0_56, %c0_57], %357 {strides = array<i32>} : memref<2x8x128xf32, #tpu.memory_space<vmem>>, vector<2x8x128xf32>,
    %c0_58 = arith.constant 0 : index
    %c0_59 = arith.constant 0 : index
    %359 = vector.load %arg10[%c0_58, %c0_59] : memref<2x128xf32, #tpu.memory_space<vmem>>, vector<2x128xf32>
    tpu.vector_store %arg10[%c0_58, %c0_59], %348 {strides = array<i32>} : memref<2x128xf32, #tpu.memory_space<vmem>>, vector<2x128xf32>,
    return
  }
  func.func @transform_0(%arg0: i32, %arg1: i32) -> (i32, i32, i32) {
    %c0_i32 = arith.constant 0 : i32
    %c0_i32_0 = arith.constant 0 : i32
    return %arg0, %arg1, %c0_i32 : i32, i32, i32
  }
  func.func @transform_1(%arg0: i32, %arg1: i32) -> (i32, i32) {
    %c0_i32 = arith.constant 0 : i32
    %c0_i32_0 = arith.constant 0 : i32
    return %arg0, %c0_i32 : i32, i32
  }
  func.func @transform_2(%arg0: i32, %arg1: i32) -> (i32, i32) {
    %c0_i32 = arith.constant 0 : i32
    %c0_i32_0 = arith.constant 0 : i32
    %c0_i32_1 = arith.constant 0 : i32
    return %c0_i32, %c0_i32_0 : i32, i32
  }
  func.func @transform_3(%arg0: i32, %arg1: i32) -> (i32, i32) {
    %c0_i32 = arith.constant 0 : i32
    %c0_i32_0 = arith.constant 0 : i32
    %c0_i32_1 = arith.constant 0 : i32
    return %c0_i32, %c0_i32_0 : i32, i32
  }
  func.func @transform_4(%arg0: i32, %arg1: i32) -> (i32, i32) {
    %c0_i32 = arith.constant 0 : i32
    %c0_i32_0 = arith.constant 0 : i32
    %c0_i32_1 = arith.constant 0 : i32
    return %c0_i32, %c0_i32_0 : i32, i32
  }
  func.func @transform_5(%arg0: i32, %arg1: i32) -> (i32, i32) {
    %c0_i32 = arith.constant 0 : i32
    %c0_i32_0 = arith.constant 0 : i32
    %c0_i32_1 = arith.constant 0 : i32
    return %c0_i32, %c0_i32_0 : i32, i32
  }
  func.func @transform_6(%arg0: i32, %arg1: i32) -> (i32, i32) {
    %c0_i32 = arith.constant 0 : i32
    %c0_i32_0 = arith.constant 0 : i32
    %c0_i32_1 = arith.constant 0 : i32
    return %c0_i32, %c0_i32_0 : i32, i32
  }
  func.func @transform_7(%arg0: i32, %arg1: i32) -> (i32, i32, i32) {
    %c0_i32 = arith.constant 0 : i32
    %c0_i32_0 = arith.constant 0 : i32
    return %arg0, %arg1, %c0_i32 : i32, i32, i32
  }
}

</mosaic_0001>

<llo_original>
// kernel: tpu_custom_call.1
$region0: #{tpu_custom_call.1}
  #allocation0 [shape = 'u32[]', space=smem, size = 0x4, offset = 0x4, fixed_abs, tag = 'smem constant byte address 0x4 - core index']
  #allocation1 [shape = 'u32[144,128]{1,0:T(1,128)}', space=vmem, size = 0x12000, scoped, tag = 'internal scratch']
  #allocation2 [shape = 'f32[2,128]{1,0:T(2,128)}', space=vmem, size = 0x400, scoped, tag = 'scratch operand']
  %s0 = inlined_call_operand.hbm [shape: bf16[2,8,128], index: 0, kind: input, shape index: {}]
  %s1 = inlined_call_operand.hbm [shape: f32[2,128], index: 1, kind: input, shape index: {}]
  %s2 = inlined_call_operand.hbm [shape: bf16[128,384], index: 2, kind: input, shape index: {}]
  %s3 = inlined_call_operand.hbm [shape: bf16[128,512], index: 3, kind: input, shape index: {}]
  %s4 = inlined_call_operand.hbm [shape: bf16[128,128], index: 4, kind: input, shape index: {}]
  %s5 = inlined_call_operand.vmem [shape: f32[1,384], index: 5, kind: input, shape index: {}]
  %s6 = inlined_call_operand.vmem [shape: f32[1,512], index: 6, kind: input, shape index: {}]
  %s7 = inlined_call_operand.hbm [shape: f32[2,8,128], index: 7, kind: output, shape index: {}]
  %s8 = sld [smem:[#allocation0]]
  $region62: #{tpu_custom_call.1} parent=0
    _
  %s10 = ssub.s32 1, %s8
  %s11 = scalar_select 0, %s10, %s8
  $region1: #{tpu_custom_call.1} parent=0
    #allocation3 [shape = 'u8[4096]{0}', space=vmem, size = 0x1000, scoped, tag = 'input window, operand 0, single buffered']
    #allocation4 [shape = 's32[1]{0}', space=sflag, size = 0x4, scoped, tag = 'scoped memory for tpu_custom_call.1']
    #allocation5 [shape = 's32[1]{0}', space=sflag, size = 0x4, scoped, tag = 'scoped memory for tpu_custom_call.1']
    #allocation6 [shape = 'u8[1024]{0}', space=vmem, size = 0x400, scoped, tag = 'input window, operand 1, single buffered']
    #allocation7 [shape = 's32[1]{0}', space=sflag, size = 0x4, scoped, tag = 'scoped memory for tpu_custom_call.1']
    #allocation8 [shape = 'u8[98304]{0}', space=vmem, size = 0x18000, scoped, tag = 'input window, operand 2, single buffered']
    #allocation9 [shape = 'u8[131072]{0}', space=vmem, size = 0x20000, scoped, tag = 'input window, operand 3, single buffered']
    #allocation10 [shape = 's32[1]{0}', space=sflag, size = 0x4, scoped, tag = 'scoped memory for tpu_custom_call.1']
    #allocation11 [shape = 'u8[32768]{0}', space=vmem, size = 0x8000, scoped, tag = 'input window, operand 4, single buffered']
    #allocation12 [shape = 'u8[8192]{0}', space=vmem, size = 0x2000, scoped, tag = 'output window, operand 0, single buffered']
    %12 = vsyncpa [#allocation4], 0
    %13 = vsyncpa [#allocation7], 0
    %14 = vsyncpa [#allocation10], 0
    %15 = vsyncpa [#allocation5], 0
    // Predicated region
    $region2: #{tpu_custom_call.1} parent=1 // pred_check
      _
    $region3: #{tpu_custom_call.1} parent=1 // pred_check_branch
      %17 = sbr.rel (0) target = $region5
    $region4: #{tpu_custom_call.1} parent=1 // pred_region
      %s19 = ssub.s32 128, 128
      %20 = vsyncadd [#allocation4], %s19
      %s21 = sshll.u32 [#allocation3], 4
      %s22 = int_to_ptr.vmem [resolvable:$true] %s21
      %27 = dma.hbm_to_vmem [thread:$0]  %s0, 128, %s22, [#allocation4], 64, 64, 4
    $region5: #{tpu_custom_call.1} parent=1 // pred_fallthru
      _
    // Predicated region
    $region6: #{tpu_custom_call.1} parent=1 // pred_check
      _
    $region7: #{tpu_custom_call.1} parent=1 // pred_check_branch
      %29 = sbr.rel (0) target = $region9
    $region8: #{tpu_custom_call.1} parent=1 // pred_region
      %s31 = ssub.s32 32, 32
      %32 = vsyncadd [#allocation7], %s31
      %s34 = sshll.u32 [#allocation6], 4
      %s35 = int_to_ptr.vmem [resolvable:$true] %s34
      %37 = dma.hbm_to_vmem [thread:$0]  %s1, 32, %s35, [#allocation7]
    $region9: #{tpu_custom_call.1} parent=1 // pred_fallthru
      _
    // Predicated region
    $region10: #{tpu_custom_call.1} parent=1 // pred_check
      _
    $region11: #{tpu_custom_call.1} parent=1 // pred_check_branch
      %39 = sbr.rel (0) target = $region13
    $region12: #{tpu_custom_call.1} parent=1 // pred_region
      %s41 = ssub.s32 3072, 3072
      %42 = vsyncadd [#allocation7], %s41
      %s43 = sshll.u32 [#allocation8], 4
      %s44 = int_to_ptr.vmem [resolvable:$true] %s43
      %49 = dma.hbm_to_vmem [thread:$0]  %s2, 3072, %s44, [#allocation7], 192, 192, 12
    $region13: #{tpu_custom_call.1} parent=1 // pred_fallthru
      _
    // Predicated region
    $region14: #{tpu_custom_call.1} parent=1 // pred_check
      _
    $region15: #{tpu_custom_call.1} parent=1 // pred_check_branch
      %51 = sbr.rel (0) target = $region17
    $region16: #{tpu_custom_call.1} parent=1 // pred_region
      %s53 = ssub.s32 4096, 4096
      %54 = vsyncadd [#allocation10], %s53
      %s55 = sshll.u32 [#allocation9], 4
      %s56 = int_to_ptr.vmem [resolvable:$true] %s55
      %61 = dma.hbm_to_vmem [thread:$0]  %s3, 4096, %s56, [#allocation10], 256, 256, 16
    $region17: #{tpu_custom_call.1} parent=1 // pred_fallthru
      _
    // Predicated region
    $region18: #{tpu_custom_call.1} parent=1 // pred_check
      _
    $region19: #{tpu_custom_call.1} parent=1 // pred_check_branch
      %63 = sbr.rel (0) target = $region21
    $region20: #{tpu_custom_call.1} parent=1 // pred_region
      %s65 = ssub.s32 1024, 1024
      %66 = vsyncadd [#allocation10], %s65
      %s67 = sshll.u32 [#allocation11], 4
      %s68 = int_to_ptr.vmem [resolvable:$true] %s67
      %73 = dma.hbm_to_vmem [thread:$0]  %s4, 1024, %s68, [#allocation10], 64, 64, 4
    $region21: #{tpu_custom_call.1} parent=1 // pred_fallthru
      _
    // Predicated region
    $region22: #{tpu_custom_call.1} parent=1 // pred_check
      _
    $region23: #{tpu_custom_call.1} parent=1 // pred_check_branch
      %75 = sbr.rel (0) target = $region25
    $region24: #{tpu_custom_call.1} parent=1 // pred_region
      _
    $region25: #{tpu_custom_call.1} parent=1 // pred_fallthru
      _
    // Predicated region
    $region26: #{tpu_custom_call.1} parent=1 // pred_check
      _
    $region27: #{tpu_custom_call.1} parent=1 // pred_check_branch
      %77 = sbr.rel (0) target = $region29
    $region28: #{tpu_custom_call.1} parent=1 // pred_region
      _
    $region29: #{tpu_custom_call.1} parent=1 // pred_fallthru
      _
    // Predicated region
    $region30: #{tpu_custom_call.1} parent=1 // pred_check
      _
    $region31: #{tpu_custom_call.1} parent=1 // pred_check_branch
      %79 = sbr.rel (0) target = $region33
    $region32: #{tpu_custom_call.1} parent=1 // pred_region
      %80 = dma.done [#allocation4], 128
    $region33: #{tpu_custom_call.1} parent=1 // pred_fallthru
      _
    // Predicated region
    $region34: #{tpu_custom_call.1} parent=1 // pred_check
      _
    $region35: #{tpu_custom_call.1} parent=1 // pred_check_branch
      %82 = sbr.rel (0) target = $region37
    $region36: #{tpu_custom_call.1} parent=1 // pred_region
      %83 = dma.done [#allocation7], 32
    $region37: #{tpu_custom_call.1} parent=1 // pred_fallthru
      _
    // Predicated region
    $region38: #{tpu_custom_call.1} parent=1 // pred_check
      _
    $region39: #{tpu_custom_call.1} parent=1 // pred_check_branch
      %85 = sbr.rel (0) target = $region41
    $region40: #{tpu_custom_call.1} parent=1 // pred_region
      %86 = dma.done [#allocation7], 3072
    $region41: #{tpu_custom_call.1} parent=1 // pred_fallthru
      _
    // Predicated region
    $region42: #{tpu_custom_call.1} parent=1 // pred_check
      _
    $region43: #{tpu_custom_call.1} parent=1 // pred_check_branch
      %88 = sbr.rel (0) target = $region45
    $region44: #{tpu_custom_call.1} parent=1 // pred_region
      %89 = dma.done [#allocation10], 4096
    $region45: #{tpu_custom_call.1} parent=1 // pred_fallthru
      _
    // Predicated region
    $region46: #{tpu_custom_call.1} parent=1 // pred_check
      _
    $region47: #{tpu_custom_call.1} parent=1 // pred_check_branch
      %91 = sbr.rel (0) target = $region49
    $region48: #{tpu_custom_call.1} parent=1 // pred_region
      %92 = dma.done [#allocation10], 1024
    $region49: #{tpu_custom_call.1} parent=1 // pred_fallthru
      _
    %p94 = scmp.eq.s32.totalorder 0, 0
    // Predicated region
    $region50: #{tpu_custom_call.1} parent=1 // pred_check
      %p95 = pneg %p94
    $region51: #{tpu_custom_call.1} parent=1 // pred_check_branch
      %97 = sbr.rel (%p95) target = $region53
    $region52: #{tpu_custom_call.1} parent=1 // pred_region
      %v98 = vld [vmem:[#allocation6] sm:$0x3]
      %99 = vst [vmem:[#allocation2] sm:$0x3] %v98
    $region53: #{tpu_custom_call.1} parent=1 // pred_fallthru
      _
    %v100 = vld [vmem:[#allocation8] sm:$0xff]
    %v101 = vld [vmem:[#allocation8 + $0x8] sm:$0xf]
    %v102 = vld [vmem:[#allocation8 + $0xc] sm:$0xff]
    %v103 = vld [vmem:[#allocation8 + $0x14] sm:$0xf]
    %v104 = vld [vmem:[#allocation8 + $0x18] sm:$0xff]
    %v105 = vld [vmem:[#allocation8 + $0x20] sm:$0xf]
    %v106 = vld [vmem:[#allocation8 + $0x24] sm:$0xff]
    %v107 = vld [vmem:[#allocation8 + $0x2c] sm:$0xf]
    %v108 = vld [vmem:[#allocation8 + $0x30] sm:$0xff]
    %v109 = vld [vmem:[#allocation8 + $0x38] sm:$0xf]
    %v110 = vld [vmem:[#allocation8 + $0x3c] sm:$0xff]
    %v111 = vld [vmem:[#allocation8 + $0x44] sm:$0xf]
    %v112 = vld [vmem:[#allocation8 + $0x48] sm:$0xff]
    %v113 = vld [vmem:[#allocation8 + $0x50] sm:$0xf]
    %v114 = vld [vmem:[#allocation8 + $0x54] sm:$0xff]
    %v115 = vld [vmem:[#allocation8 + $0x5c] sm:$0xf]
    %v116 = vld [vmem:[#allocation8 + $0x60] sm:$0xff]
    %v117 = vld [vmem:[#allocation8 + $0x68] sm:$0xf]
    %v118 = vld [vmem:[#allocation8 + $0x6c] sm:$0xff]
    %v119 = vld [vmem:[#allocation8 + $0x74] sm:$0xf]
    %v120 = vld [vmem:[#allocation8 + $0x78] sm:$0xff]
    %v121 = vld [vmem:[#allocation8 + $0x80] sm:$0xf]
    %v122 = vld [vmem:[#allocation8 + $0x84] sm:$0xff]
    %v123 = vld [vmem:[#allocation8 + $0x8c] sm:$0xf]
    %v124 = vld [vmem:[#allocation8 + $0x90] sm:$0xff]
    %v125 = vld [vmem:[#allocation8 + $0x98] sm:$0xf]
    %v126 = vld [vmem:[#allocation8 + $0x9c] sm:$0xff]
    %v127 = vld [vmem:[#allocation8 + $0xa4] sm:$0xf]
    %v128 = vld [vmem:[#allocation8 + $0xa8] sm:$0xff]
    %v129 = vld [vmem:[#allocation8 + $0xb0] sm:$0xf]
    %v130 = vld [vmem:[#allocation8 + $0xb4] sm:$0xff]
    %v131 = vld [vmem:[#allocation8 + $0xbc] sm:$0xf]
    %v132 = vld [vmem:[#allocation9] sm:$0xff]
    %v133 = vld [vmem:[#allocation9 + $0x8] sm:$0xff]
    %v134 = vld [vmem:[#allocation9 + $0x10] sm:$0xff]
    %v135 = vld [vmem:[#allocation9 + $0x18] sm:$0xff]
    %v136 = vld [vmem:[#allocation9 + $0x20] sm:$0xff]
    %v137 = vld [vmem:[#allocation9 + $0x28] sm:$0xff]
    %v138 = vld [vmem:[#allocation9 + $0x30] sm:$0xff]
    %v139 = vld [vmem:[#allocation9 + $0x38] sm:$0xff]
    %v140 = vld [vmem:[#allocation9 + $0x40] sm:$0xff]
    %v141 = vld [vmem:[#allocation9 + $0x48] sm:$0xff]
    %v142 = vld [vmem:[#allocation9 + $0x50] sm:$0xff]
    %v143 = vld [vmem:[#allocation9 + $0x58] sm:$0xff]
    %v144 = vld [vmem:[#allocation9 + $0x60] sm:$0xff]
    %v145 = vld [vmem:[#allocation9 + $0x68] sm:$0xff]
    %v146 = vld [vmem:[#allocation9 + $0x70] sm:$0xff]
    %v147 = vld [vmem:[#allocation9 + $0x78] sm:$0xff]
    %v148 = vld [vmem:[#allocation9 + $0x80] sm:$0xff]
    %v149 = vld [vmem:[#allocation9 + $0x88] sm:$0xff]
    %v150 = vld [vmem:[#allocation9 + $0x90] sm:$0xff]
    %v151 = vld [vmem:[#allocation9 + $0x98] sm:$0xff]
    %v152 = vld [vmem:[#allocation9 + $0xa0] sm:$0xff]
    %v153 = vld [vmem:[#allocation9 + $0xa8] sm:$0xff]
    %v154 = vld [vmem:[#allocation9 + $0xb0] sm:$0xff]
    %v155 = vld [vmem:[#allocation9 + $0xb8] sm:$0xff]
    %v156 = vld [vmem:[#allocation9 + $0xc0] sm:$0xff]
    %v157 = vld [vmem:[#allocation9 + $0xc8] sm:$0xff]
    %v158 = vld [vmem:[#allocation9 + $0xd0] sm:$0xff]
    %v159 = vld [vmem:[#allocation9 + $0xd8] sm:$0xff]
    %v160 = vld [vmem:[#allocation9 + $0xe0] sm:$0xff]
    %v161 = vld [vmem:[#allocation9 + $0xe8] sm:$0xff]
    %v162 = vld [vmem:[#allocation9 + $0xf0] sm:$0xff]
    %v163 = vld [vmem:[#allocation9 + $0xf8] sm:$0xff]
    %v164 = vld [vmem:[%s5] sm:$0x7]
    %v165 = vld [vmem:[%s6] sm:$0xf]
    %v166 = vld [vmem:[#allocation3] sm:$0xf]
    %v167 = vld [vmem:[#allocation3 + $0x4] sm:$0xf]
    %v168 = vld [vmem:[#allocation11] sm:$0xf]
    %v169 = vld [vmem:[#allocation11 + $0x4] sm:$0xf]
    %v170 = vld [vmem:[#allocation11 + $0x8] sm:$0xf]
    %v171 = vld [vmem:[#allocation11 + $0xc] sm:$0xf]
    %v172 = vld [vmem:[#allocation11 + $0x10] sm:$0xf]
    %v173 = vld [vmem:[#allocation11 + $0x14] sm:$0xf]
    %v174 = vld [vmem:[#allocation11 + $0x18] sm:$0xf]
    %v175 = vld [vmem:[#allocation11 + $0x1c] sm:$0xf]
    %v176 = vld [vmem:[#allocation11 + $0x20] sm:$0xf]
    %v177 = vld [vmem:[#allocation11 + $0x24] sm:$0xf]
    %v178 = vld [vmem:[#allocation11 + $0x28] sm:$0xf]
    %v179 = vld [vmem:[#allocation11 + $0x2c] sm:$0xf]
    %v180 = vld [vmem:[#allocation11 + $0x30] sm:$0xf]
    %v181 = vld [vmem:[#allocation11 + $0x34] sm:$0xf]
    %v182 = vld [vmem:[#allocation11 + $0x38] sm:$0xf]
    %v183 = vld [vmem:[#allocation11 + $0x3c] sm:$0xf]
    %v186 = vunpack.c.l.b16 %v166
    %v187 = vunpack.c.l.b16 %v167
    %v188 = vpack.c.b16 %v187, %v186
    %v206 = vunpack.c.l.b16 %v168
    %v207 = vunpack.c.l.b16 %v169
    %v208 = vunpack.c.l.b16 %v170
    %v209 = vunpack.c.l.b16 %v171
    %v210 = vunpack.c.l.b16 %v172
    %v211 = vunpack.c.l.b16 %v173
    %v212 = vunpack.c.l.b16 %v174
    %v213 = vunpack.c.l.b16 %v175
    %v214 = vunpack.c.l.b16 %v176
    %v215 = vunpack.c.l.b16 %v177
    %v216 = vunpack.c.l.b16 %v178
    %v217 = vunpack.c.l.b16 %v179
    %v218 = vunpack.c.l.b16 %v180
    %v219 = vunpack.c.l.b16 %v181
    %v220 = vunpack.c.l.b16 %v182
    %v221 = vunpack.c.l.b16 %v183
    %v222 = vpack.c.b16 %v207, %v206
    %v223 = vpack.c.b16 %v209, %v208
    %v224 = vpack.c.b16 %v211, %v210
    %v225 = vpack.c.b16 %v213, %v212
    %v226 = vpack.c.b16 %v215, %v214
    %v227 = vpack.c.b16 %v217, %v216
    %v228 = vpack.c.b16 %v219, %v218
    %v229 = vpack.c.b16 %v221, %v220
    %238 = vmatprep.subr.bf16.mxu0 0
    %239 = vmatpush1.bf16.msra.mxu0 %v229
    %240 = vmatprep.subr.bf16.mxu0 0
    %241 = vmatpush1.bf16.msra.mxu0 %v228
    %242 = vmatprep.subr.bf16.mxu0 0
    %243 = vmatpush1.bf16.msra.mxu0 %v227
    %244 = vmatprep.subr.bf16.mxu0 0
    %245 = vmatpush1.bf16.msra.mxu0 %v226
    %246 = vmatprep.subr.bf16.mxu0 0
    %247 = vmatpush1.bf16.msra.mxu0 %v225
    %248 = vmatprep.subr.bf16.mxu0 0
    %249 = vmatpush1.bf16.msra.mxu0 %v224
    %250 = vmatprep.subr.bf16.mxu0 0
    %251 = vmatpush1.bf16.msra.mxu0 %v223
    %252 = vmatprep.subr.bf16.mxu0 0
    %253 = vmatpush1.bf16.msra.mxu0 %v222
    %254 = vmatprep.subr.bf16.mxu0 0
    %255 = vmatpush2.bf16.msra.mxu0 0
    %256 = vmatprep.subr.bf16.mxu0 0
    %257 = vmatpush2.bf16.msra.mxu0 0
    %258 = vmatprep.subr.bf16.mxu0 0
    %259 = vmatpush2.bf16.msra.mxu0 0
    %260 = vmatprep.subr.bf16.mxu0 0
    %261 = vmatpush2.bf16.msra.mxu0 0
    %262 = vmatprep.subr.bf16.mxu0 0
    %263 = vmatpush2.bf16.msra.mxu0 0
    %264 = vmatprep.subr.bf16.mxu0 0
    %265 = vmatpush2.bf16.msra.mxu0 0
    %266 = vmatprep.subr.bf16.mxu0 0
    %267 = vmatpush2.bf16.msra.mxu0 0
    %268 = vmatprep.subr.bf16.mxu0 0
    %269 = vmatpush2.bf16.msra.mxu0 0
    %270 = vmatprep.mubr.bf16.mxu0 0
    %271 = vmatmul.mubr.bf16.gmra.mxu0 %v188
    %v272 = vpop.f32.mrf.mxu0
    %v273 = vadd.f32 0.0, %v272
    %v274 = vpop.f32.mrf.mxu0
    %v275 = vpop.f32.mrf.mxu0
    %v276 = vadd.f32 0.0, %v275
    %v277 = vpop.f32.mrf.mxu0
    %278 = vdwg.mxu0
    %v279 = vld [vmem:[#allocation2] sm:$0x3]
    %v280 = vpack.c.bf16 %v279, %v279
    %v282 = vlaneseq
    %v283 = vshrl.u32 %v282, 7
    %v284 = vsub.s32 0, %v283
    %v285 = vrot.slane %v165, %v284
    %v286 = vlaneseq
    %v287 = vshrl.u32 %v286, 7
    %v288 = vsub.s32 1, %v287
    %v289 = vrot.slane %v165, %v288
    %v290 = vlaneseq
    %v291 = vshrl.u32 %v290, 7
    %v292 = vsub.s32 2, %v291
    %v293 = vrot.slane %v165, %v292
    %v294 = vlaneseq
    %v295 = vshrl.u32 %v294, 7
    %v296 = vsub.s32 3, %v295
    %v297 = vrot.slane %v165, %v296
    %v334 = vunpack.c.l.b16 %v132
    %v335 = vunpack.c.h.b16 %v132
    %v336 = vunpack.c.l.b16 %v133
    %v337 = vunpack.c.h.b16 %v133
    %v338 = vunpack.c.l.b16 %v134
    %v339 = vunpack.c.h.b16 %v134
    %v340 = vunpack.c.l.b16 %v135
    %v341 = vunpack.c.h.b16 %v135
    %v342 = vunpack.c.l.b16 %v136
    %v343 = vunpack.c.h.b16 %v136
    %v344 = vunpack.c.l.b16 %v137
    %v345 = vunpack.c.h.b16 %v137
    %v346 = vunpack.c.l.b16 %v138
    %v347 = vunpack.c.h.b16 %v138
    %v348 = vunpack.c.l.b16 %v139
    %v349 = vunpack.c.h.b16 %v139
    %v350 = vunpack.c.l.b16 %v140
    %v351 = vunpack.c.h.b16 %v140
    %v352 = vunpack.c.l.b16 %v141
    %v353 = vunpack.c.h.b16 %v141
    %v354 = vunpack.c.l.b16 %v142
    %v355 = vunpack.c.h.b16 %v142
    %v356 = vunpack.c.l.b16 %v143
    %v357 = vunpack.c.h.b16 %v143
    %v358 = vunpack.c.l.b16 %v144
    %v359 = vunpack.c.h.b16 %v144
    %v360 = vunpack.c.l.b16 %v145
    %v361 = vunpack.c.h.b16 %v145
    %v362 = vunpack.c.l.b16 %v146
    %v363 = vunpack.c.h.b16 %v146
    %v364 = vunpack.c.l.b16 %v147
    %v365 = vunpack.c.h.b16 %v147
    %v366 = vunpack.c.l.b16 %v148
    %v367 = vunpack.c.h.b16 %v148
    %v368 = vunpack.c.l.b16 %v149
    %v369 = vunpack.c.h.b16 %v149
    %v370 = vunpack.c.l.b16 %v150
    %v371 = vunpack.c.h.b16 %v150
    %v372 = vunpack.c.l.b16 %v151
    %v373 = vunpack.c.h.b16 %v151
    %v374 = vunpack.c.l.b16 %v152
    %v375 = vunpack.c.h.b16 %v152
    %v376 = vunpack.c.l.b16 %v153
    %v377 = vunpack.c.h.b16 %v153
    %v378 = vunpack.c.l.b16 %v154
    %v379 = vunpack.c.h.b16 %v154
    %v380 = vunpack.c.l.b16 %v155
    %v381 = vunpack.c.h.b16 %v155
    %v382 = vunpack.c.l.b16 %v156
    %v383 = vunpack.c.h.b16 %v156
    %v384 = vunpack.c.l.b16 %v157
    %v385 = vunpack.c.h.b16 %v157
    %v386 = vunpack.c.l.b16 %v158
    %v387 = vunpack.c.h.b16 %v158
    %v388 = vunpack.c.l.b16 %v159
    %v389 = vunpack.c.h.b16 %v159
    %v390 = vunpack.c.l.b16 %v160
    %v391 = vunpack.c.h.b16 %v160
    %v392 = vunpack.c.l.b16 %v161
    %v393 = vunpack.c.h.b16 %v161
    %v394 = vunpack.c.l.b16 %v162
    %v395 = vunpack.c.h.b16 %v162
    %v396 = vunpack.c.l.b16 %v163
    %v397 = vunpack.c.h.b16 %v163
    %v398 = vpack.c.b16 %v338, %v334
    %v399 = vpack.c.b16 %v339, %v335
    %v400 = vpack.c.b16 %v340, %v336
    %v401 = vpack.c.b16 %v341, %v337
    %v402 = vpack.c.b16 %v346, %v342
    %v403 = vpack.c.b16 %v347, %v343
    %v404 = vpack.c.b16 %v348, %v344
    %v405 = vpack.c.b16 %v349, %v345
    %v406 = vpack.c.b16 %v354, %v350
    %v407 = vpack.c.b16 %v355, %v351
    %v408 = vpack.c.b16 %v356, %v352
    %v409 = vpack.c.b16 %v357, %v353
    %v410 = vpack.c.b16 %v362, %v358
    %v411 = vpack.c.b16 %v363, %v359
    %v412 = vpack.c.b16 %v364, %v360
    %v413 = vpack.c.b16 %v365, %v361
    %v414 = vpack.c.b16 %v370, %v366
    %v415 = vpack.c.b16 %v371, %v367
    %v416 = vpack.c.b16 %v372, %v368
    %v417 = vpack.c.b16 %v373, %v369
    %v418 = vpack.c.b16 %v378, %v374
    %v419 = vpack.c.b16 %v379, %v375
    %v420 = vpack.c.b16 %v380, %v376
    %v421 = vpack.c.b16 %v381, %v377
    %v422 = vpack.c.b16 %v386, %v382
    %v423 = vpack.c.b16 %v387, %v383
    %v424 = vpack.c.b16 %v388, %v384
    %v425 = vpack.c.b16 %v389, %v385
    %v426 = vpack.c.b16 %v394, %v390
    %v427 = vpack.c.b16 %v395, %v391
    %v428 = vpack.c.b16 %v396, %v392
    %v429 = vpack.c.b16 %v397, %v393
    %462 = vmatprep.subr.bf16.mxu0 %v427
    %463 = vmatpush1.bf16.msra.mxu0 %v426
    %464 = vmatprep.subr.bf16.mxu0 %v423
    %465 = vmatpush1.bf16.msra.mxu0 %v422
    %466 = vmatprep.subr.bf16.mxu0 %v419
    %467 = vmatpush1.bf16.msra.mxu0 %v418
    %468 = vmatprep.subr.bf16.mxu0 %v415
    %469 = vmatpush1.bf16.msra.mxu0 %v414
    %470 = vmatprep.subr.bf16.mxu0 %v411
    %471 = vmatpush1.bf16.msra.mxu0 %v410
    %472 = vmatprep.subr.bf16.mxu0 %v407
    %473 = vmatpush1.bf16.msra.mxu0 %v406
    %474 = vmatprep.subr.bf16.mxu0 %v403
    %475 = vmatpush1.bf16.msra.mxu0 %v402
    %476 = vmatprep.subr.bf16.mxu0 %v399
    %477 = vmatpush1.bf16.msra.mxu0 %v398
    %478 = vmatprep.subr.bf16.mxu0 0
    %479 = vmatpush2.bf16.msra.mxu0 0
    %480 = vmatprep.subr.bf16.mxu0 0
    %481 = vmatpush2.bf16.msra.mxu0 0
    %482 = vmatprep.subr.bf16.mxu0 0
    %483 = vmatpush2.bf16.msra.mxu0 0
    %484 = vmatprep.subr.bf16.mxu0 0
    %485 = vmatpush2.bf16.msra.mxu0 0
    %486 = vmatprep.subr.bf16.mxu0 0
    %487 = vmatpush2.bf16.msra.mxu0 0
    %488 = vmatprep.subr.bf16.mxu0 0
    %489 = vmatpush2.bf16.msra.mxu0 0
    %490 = vmatprep.subr.bf16.mxu0 0
    %491 = vmatpush2.bf16.msra.mxu0 0
    %492 = vmatprep.subr.bf16.mxu0 0
    %493 = vmatpush2.bf16.msra.mxu0 0
    %494 = vmatprep.mubr.bf16.mxu0 0
    %495 = vmatmul.mubr.bf16.gmra.mxu0 %v280
    %v496 = vpop.f32.mrf.mxu0
    %v497 = vadd.f32 %v285, %v496
    %v498 = vpop.f32.mrf.mxu0
    %v499 = vadd.f32 %v289, %v498
    %v500 = vpop.f32.mrf.mxu0
    %v501 = vpop.f32.mrf.mxu0
    %502 = vdwg.mxu0
    %503 = vmatprep.subr.bf16.mxu0 %v429
    %504 = vmatpush1.bf16.msra.mxu0 %v428
    %505 = vmatprep.subr.bf16.mxu0 %v425
    %506 = vmatpush1.bf16.msra.mxu0 %v424
    %507 = vmatprep.subr.bf16.mxu0 %v421
    %508 = vmatpush1.bf16.msra.mxu0 %v420
    %509 = vmatprep.subr.bf16.mxu0 %v417
    %510 = vmatpush1.bf16.msra.mxu0 %v416
    %511 = vmatprep.subr.bf16.mxu0 %v413
    %512 = vmatpush1.bf16.msra.mxu0 %v412
    %513 = vmatprep.subr.bf16.mxu0 %v409
    %514 = vmatpush1.bf16.msra.mxu0 %v408
    %515 = vmatprep.subr.bf16.mxu0 %v405
    %516 = vmatpush1.bf16.msra.mxu0 %v404
    %517 = vmatprep.subr.bf16.mxu0 %v401
    %518 = vmatpush1.bf16.msra.mxu0 %v400
    %519 = vmatprep.subr.bf16.mxu0 0
    %520 = vmatpush2.bf16.msra.mxu0 0
    %521 = vmatprep.subr.bf16.mxu0 0
    %522 = vmatpush2.bf16.msra.mxu0 0
    %523 = vmatprep.subr.bf16.mxu0 0
    %524 = vmatpush2.bf16.msra.mxu0 0
    %525 = vmatprep.subr.bf16.mxu0 0
    %526 = vmatpush2.bf16.msra.mxu0 0
    %527 = vmatprep.subr.bf16.mxu0 0
    %528 = vmatpush2.bf16.msra.mxu0 0
    %529 = vmatprep.subr.bf16.mxu0 0
    %530 = vmatpush2.bf16.msra.mxu0 0
    %531 = vmatprep.subr.bf16.mxu0 0
    %532 = vmatpush2.bf16.msra.mxu0 0
    %533 = vmatprep.subr.bf16.mxu0 0
    %534 = vmatpush2.bf16.msra.mxu0 0
    %535 = vmatprep.mubr.bf16.mxu0 0
    %536 = vmatmul.mubr.bf16.gmra.mxu0 %v280
    %v537 = vpop.f32.mrf.mxu0
    %v538 = vadd.f32 %v293, %v537
    %v539 = vpop.f32.mrf.mxu0
    %v540 = vadd.f32 %v297, %v539
    %v541 = vpop.f32.mrf.mxu0
    %v542 = vpop.f32.mrf.mxu0
    %543 = vdwg.mxu0
    %v545 = vrot.slane %v497, 1
    %v548 = vadd.f32 %v273, %v497
    %v549 = vadd.f32 %v276, %v545
    %v550 = vxor.u32 %v548, 2147483648
    %v551 = vxor.u32 %v549, 2147483648
    %v552 = vmul.f32 %v550, 1.442695
    %v553 = vpow.pop %v552
    %v554 = vmul.f32 %v551, 1.442695
    %v555 = vpow.pop %v554
    %v556 = vadd.f32 %v553, 1.0
    %v557 = vadd.f32 %v555, 1.0
    %v558 = vrcp.pop %v556
    %v559 = vmul.f32 1.0, %v558
    %v560 = vrcp.pop %v557
    %v561 = vmul.f32 1.0, %v560
    %v562 = vunpack.c.l.bf16 %v166
    %v563 = vunpack.c.l.bf16 %v167
    %v564 = vmul.f32 %v562, %v559
    %v565 = vmul.f32 %v563, %v561
    %v566 = vpack.c.bf16 %v564, %v564
    %v567 = vpack.c.bf16 %v565, %v565
    %v569 = vlaneseq
    %v570 = vshrl.u32 %v569, 7
    %v571 = vsub.s32 0, %v570
    %v572 = vrot.slane %v164, %v571
    %v573 = vlaneseq
    %v574 = vshrl.u32 %v573, 7
    %v575 = vsub.s32 1, %v574
    %v576 = vrot.slane %v164, %v575
    %v577 = vlaneseq
    %v578 = vshrl.u32 %v577, 7
    %v579 = vsub.s32 2, %v578
    %v580 = vrot.slane %v164, %v579
    %v586 = vunpack.c.l.b16 %v566
    %v587 = vunpack.c.l.b16 %v567
    %v588 = vrot.slane %v587, 7
    %vm589 = vcmask 1041409
    %v590 = vsel %vm589, %v588, %v586
    %v591 = vpack.c.b16 %v590, %v590
    %v625 = vunpack.c.l.b16 %v100
    %v626 = vunpack.c.h.b16 %v100
    %v627 = vunpack.c.l.b16 %v101
    %v628 = vunpack.c.l.b16 %v102
    %v629 = vunpack.c.h.b16 %v102
    %v630 = vunpack.c.l.b16 %v103
    %v631 = vunpack.c.l.b16 %v104
    %v632 = vunpack.c.h.b16 %v104
    %v633 = vunpack.c.l.b16 %v105
    %v634 = vunpack.c.l.b16 %v106
    %v635 = vunpack.c.h.b16 %v106
    %v636 = vunpack.c.l.b16 %v107
    %v637 = vunpack.c.l.b16 %v108
    %v638 = vunpack.c.h.b16 %v108
    %v639 = vunpack.c.l.b16 %v109
    %v640 = vunpack.c.l.b16 %v110
    %v641 = vunpack.c.h.b16 %v110
    %v642 = vunpack.c.l.b16 %v111
    %v643 = vunpack.c.l.b16 %v112
    %v644 = vunpack.c.h.b16 %v112
    %v645 = vunpack.c.l.b16 %v113
    %v646 = vunpack.c.l.b16 %v114
    %v647 = vunpack.c.h.b16 %v114
    %v648 = vunpack.c.l.b16 %v115
    %v649 = vunpack.c.l.b16 %v116
    %v650 = vunpack.c.h.b16 %v116
    %v651 = vunpack.c.l.b16 %v117
    %v652 = vunpack.c.l.b16 %v118
    %v653 = vunpack.c.h.b16 %v118
    %v654 = vunpack.c.l.b16 %v119
    %v655 = vunpack.c.l.b16 %v120
    %v656 = vunpack.c.h.b16 %v120
    %v657 = vunpack.c.l.b16 %v121
    %v658 = vunpack.c.l.b16 %v122
    %v659 = vunpack.c.h.b16 %v122
    %v660 = vunpack.c.l.b16 %v123
    %v661 = vunpack.c.l.b16 %v124
    %v662 = vunpack.c.h.b16 %v124
    %v663 = vunpack.c.l.b16 %v125
    %v664 = vunpack.c.l.b16 %v126
    %v665 = vunpack.c.h.b16 %v126
    %v666 = vunpack.c.l.b16 %v127
    %v667 = vunpack.c.l.b16 %v128
    %v668 = vunpack.c.h.b16 %v128
    %v669 = vunpack.c.l.b16 %v129
    %v670 = vunpack.c.l.b16 %v130
    %v671 = vunpack.c.h.b16 %v130
    %v672 = vunpack.c.l.b16 %v131
    %v673 = vpack.c.b16 %v628, %v625
    %v674 = vpack.c.b16 %v629, %v626
    %v675 = vpack.c.b16 %v630, %v627
    %v676 = vpack.c.b16 %v634, %v631
    %v677 = vpack.c.b16 %v635, %v632
    %v678 = vpack.c.b16 %v636, %v633
    %v679 = vpack.c.b16 %v640, %v637
    %v680 = vpack.c.b16 %v641, %v638
    %v681 = vpack.c.b16 %v642, %v639
    %v682 = vpack.c.b16 %v646, %v643
    %v683 = vpack.c.b16 %v647, %v644
    %v684 = vpack.c.b16 %v648, %v645
    %v685 = vpack.c.b16 %v652, %v649
    %v686 = vpack.c.b16 %v653, %v650
    %v687 = vpack.c.b16 %v654, %v651
    %v688 = vpack.c.b16 %v658, %v655
    %v689 = vpack.c.b16 %v659, %v656
    %v690 = vpack.c.b16 %v660, %v657
    %v691 = vpack.c.b16 %v664, %v661
    %v692 = vpack.c.b16 %v665, %v662
    %v693 = vpack.c.b16 %v666, %v663
    %v694 = vpack.c.b16 %v670, %v667
    %v695 = vpack.c.b16 %v671, %v668
    %v696 = vpack.c.b16 %v672, %v669
    %721 = vmatprep.subr.bf16.mxu0 %v695
    %722 = vmatpush1.bf16.msra.mxu0 %v694
    %723 = vmatprep.subr.bf16.mxu0 %v692
    %724 = vmatpush1.bf16.msra.mxu0 %v691
    %725 = vmatprep.subr.bf16.mxu0 %v689
    %726 = vmatpush1.bf16.msra.mxu0 %v688
    %727 = vmatprep.subr.bf16.mxu0 %v686
    %728 = vmatpush1.bf16.msra.mxu0 %v685
    %729 = vmatprep.subr.bf16.mxu0 %v683
    %730 = vmatpush1.bf16.msra.mxu0 %v682
    %731 = vmatprep.subr.bf16.mxu0 %v680
    %732 = vmatpush1.bf16.msra.mxu0 %v679
    %733 = vmatprep.subr.bf16.mxu0 %v677
    %734 = vmatpush1.bf16.msra.mxu0 %v676
    %735 = vmatprep.subr.bf16.mxu0 %v674
    %736 = vmatpush1.bf16.msra.mxu0 %v673
    %737 = vmatprep.subr.bf16.mxu0 0
    %738 = vmatpush2.bf16.msra.mxu0 0
    %739 = vmatprep.subr.bf16.mxu0 0
    %740 = vmatpush2.bf16.msra.mxu0 0
    %741 = vmatprep.subr.bf16.mxu0 0
    %742 = vmatpush2.bf16.msra.mxu0 0
    %743 = vmatprep.subr.bf16.mxu0 0
    %744 = vmatpush2.bf16.msra.mxu0 0
    %745 = vmatprep.subr.bf16.mxu0 0
    %746 = vmatpush2.bf16.msra.mxu0 0
    %747 = vmatprep.subr.bf16.mxu0 0
    %748 = vmatpush2.bf16.msra.mxu0 0
    %749 = vmatprep.subr.bf16.mxu0 0
    %750 = vmatpush2.bf16.msra.mxu0 0
    %751 = vmatprep.subr.bf16.mxu0 0
    %752 = vmatpush2.bf16.msra.mxu0 0
    %753 = vmatprep.mubr.bf16.mxu0 0
    %754 = vmatmul.mubr.bf16.gmra.mxu0 %v591
    %v755 = vpop.f32.mrf.mxu0
    %v756 = vadd.f32 %v572, %v755
    %v757 = vpop.f32.mrf.mxu0
    %v758 = vadd.f32 %v576, %v757
    %v759 = vpop.f32.mrf.mxu0
    %v760 = vpop.f32.mrf.mxu0
    %761 = vdwg.mxu0
    %762 = vmatprep.subr.bf16.mxu0 0
    %763 = vmatpush1.bf16.msra.mxu0 %v696
    %764 = vmatprep.subr.bf16.mxu0 0
    %765 = vmatpush1.bf16.msra.mxu0 %v693
    %766 = vmatprep.subr.bf16.mxu0 0
    %767 = vmatpush1.bf16.msra.mxu0 %v690
    %768 = vmatprep.subr.bf16.mxu0 0
    %769 = vmatpush1.bf16.msra.mxu0 %v687
    %770 = vmatprep.subr.bf16.mxu0 0
    %771 = vmatpush1.bf16.msra.mxu0 %v684
    %772 = vmatprep.subr.bf16.mxu0 0
    %773 = vmatpush1.bf16.msra.mxu0 %v681
    %774 = vmatprep.subr.bf16.mxu0 0
    %775 = vmatpush1.bf16.msra.mxu0 %v678
    %776 = vmatprep.subr.bf16.mxu0 0
    %777 = vmatpush1.bf16.msra.mxu0 %v675
    %778 = vmatprep.subr.bf16.mxu0 0
    %779 = vmatpush2.bf16.msra.mxu0 0
    %780 = vmatprep.subr.bf16.mxu0 0
    %781 = vmatpush2.bf16.msra.mxu0 0
    %782 = vmatprep.subr.bf16.mxu0 0
    %783 = vmatpush2.bf16.msra.mxu0 0
    %784 = vmatprep.subr.bf16.mxu0 0
    %785 = vmatpush2.bf16.msra.mxu0 0
    %786 = vmatprep.subr.bf16.mxu0 0
    %787 = vmatpush2.bf16.msra.mxu0 0
    %788 = vmatprep.subr.bf16.mxu0 0
    %789 = vmatpush2.bf16.msra.mxu0 0
    %790 = vmatprep.subr.bf16.mxu0 0
    %791 = vmatpush2.bf16.msra.mxu0 0
    %792 = vmatprep.subr.bf16.mxu0 0
    %793 = vmatpush2.bf16.msra.mxu0 0
    %794 = vmatprep.mubr.bf16.mxu0 0
    %795 = vmatmul.mubr.bf16.gmra.mxu0 %v591
    %v796 = vpop.f32.mrf.mxu0
    %v797 = vadd.f32 %v580, %v796
    %v798 = vpop.f32.mrf.mxu0
    %v799 = vpop.f32.mrf.mxu0
    %v800 = vpop.f32.mrf.mxu0
    %801 = vdwg.mxu0
    %v802 = vadd.f32 %v756, %v499
    %v803 = vadd.f32 %v758, %v538
    %v804 = vxor.u32 %v802, 2147483648
    %v805 = vxor.u32 %v803, 2147483648
    %v806 = vmul.f32 %v804, 1.442695
    %v807 = vpow.pop %v806
    %v808 = vmul.f32 %v805, 1.442695
    %v809 = vpow.pop %v808
    %v810 = vadd.f32 %v807, 1.0
    %v811 = vadd.f32 %v809, 1.0
    %v812 = vrcp.pop %v810
    %v813 = vmul.f32 1.0, %v812
    %v814 = vrcp.pop %v811
    %v815 = vmul.f32 1.0, %v814
    %v816 = vmul.f32 %v813, %v540
    %v817 = vadd.f32 %v797, %v816
    %v818 = vtanh.pop %v817
    %v819 = vsub.f32 1.0, %v815
    %v820 = vmul.f32 %v819, %v818
    %v821 = vmul.f32 %v815, %v279
    %v822 = vadd.f32 %v820, %v821
    %v823 = vpack.c.bf16 %v822, %v822
    %824 = vmatprep.subr.bf16.mxu0 %v427
    %825 = vmatpush1.bf16.msra.mxu0 %v426
    %826 = vmatprep.subr.bf16.mxu0 %v423
    %827 = vmatpush1.bf16.msra.mxu0 %v422
    %828 = vmatprep.subr.bf16.mxu0 %v419
    %829 = vmatpush1.bf16.msra.mxu0 %v418
    %830 = vmatprep.subr.bf16.mxu0 %v415
    %831 = vmatpush1.bf16.msra.mxu0 %v414
    %832 = vmatprep.subr.bf16.mxu0 %v411
    %833 = vmatpush1.bf16.msra.mxu0 %v410
    %834 = vmatprep.subr.bf16.mxu0 %v407
    %835 = vmatpush1.bf16.msra.mxu0 %v406
    %836 = vmatprep.subr.bf16.mxu0 %v403
    %837 = vmatpush1.bf16.msra.mxu0 %v402
    %838 = vmatprep.subr.bf16.mxu0 %v399
    %839 = vmatpush1.bf16.msra.mxu0 %v398
    %840 = vmatprep.subr.bf16.mxu0 0
    %841 = vmatpush2.bf16.msra.mxu0 0
    %842 = vmatprep.subr.bf16.mxu0 0
    %843 = vmatpush2.bf16.msra.mxu0 0
    %844 = vmatprep.subr.bf16.mxu0 0
    %845 = vmatpush2.bf16.msra.mxu0 0
    %846 = vmatprep.subr.bf16.mxu0 0
    %847 = vmatpush2.bf16.msra.mxu0 0
    %848 = vmatprep.subr.bf16.mxu0 0
    %849 = vmatpush2.bf16.msra.mxu0 0
    %850 = vmatprep.subr.bf16.mxu0 0
    %851 = vmatpush2.bf16.msra.mxu0 0
    %852 = vmatprep.subr.bf16.mxu0 0
    %853 = vmatpush2.bf16.msra.mxu0 0
    %854 = vmatprep.subr.bf16.mxu0 0
    %855 = vmatpush2.bf16.msra.mxu0 0
    %856 = vmatprep.mubr.bf16.mxu0 0
    %857 = vmatmul.mubr.bf16.gmra.mxu0 %v823
    %v858 = vpop.f32.mrf.mxu0
    %v859 = vadd.f32 %v285, %v858
    %v860 = vpop.f32.mrf.mxu0
    %v861 = vadd.f32 %v289, %v860
    %v862 = vpop.f32.mrf.mxu0
    %v863 = vpop.f32.mrf.mxu0
    %864 = vdwg.mxu0
    %865 = vmatprep.subr.bf16.mxu0 %v429
    %866 = vmatpush1.bf16.msra.mxu0 %v428
    %867 = vmatprep.subr.bf16.mxu0 %v425
    %868 = vmatpush1.bf16.msra.mxu0 %v424
    %869 = vmatprep.subr.bf16.mxu0 %v421
    %870 = vmatpush1.bf16.msra.mxu0 %v420
    %871 = vmatprep.subr.bf16.mxu0 %v417
    %872 = vmatpush1.bf16.msra.mxu0 %v416
    %873 = vmatprep.subr.bf16.mxu0 %v413
    %874 = vmatpush1.bf16.msra.mxu0 %v412
    %875 = vmatprep.subr.bf16.mxu0 %v409
    %876 = vmatpush1.bf16.msra.mxu0 %v408
    %877 = vmatprep.subr.bf16.mxu0 %v405
    %878 = vmatpush1.bf16.msra.mxu0 %v404
    %879 = vmatprep.subr.bf16.mxu0 %v401
    %880 = vmatpush1.bf16.msra.mxu0 %v400
    %881 = vmatprep.subr.bf16.mxu0 0
    %882 = vmatpush2.bf16.msra.mxu0 0
    %883 = vmatprep.subr.bf16.mxu0 0
    %884 = vmatpush2.bf16.msra.mxu0 0
    %885 = vmatprep.subr.bf16.mxu0 0
    %886 = vmatpush2.bf16.msra.mxu0 0
    %887 = vmatprep.subr.bf16.mxu0 0
    %888 = vmatpush2.bf16.msra.mxu0 0
    %889 = vmatprep.subr.bf16.mxu0 0
    %890 = vmatpush2.bf16.msra.mxu0 0
    %891 = vmatprep.subr.bf16.mxu0 0
    %892 = vmatpush2.bf16.msra.mxu0 0
    %893 = vmatprep.subr.bf16.mxu0 0
    %894 = vmatpush2.bf16.msra.mxu0 0
    %895 = vmatprep.subr.bf16.mxu0 0
    %896 = vmatpush2.bf16.msra.mxu0 0
    %897 = vmatprep.mubr.bf16.mxu0 0
    %898 = vmatmul.mubr.bf16.gmra.mxu0 %v823
    %v899 = vpop.f32.mrf.mxu0
    %v900 = vadd.f32 %v293, %v899
    %v901 = vpop.f32.mrf.mxu0
    %v902 = vadd.f32 %v297, %v901
    %v903 = vpop.f32.mrf.mxu0
    %v904 = vpop.f32.mrf.mxu0
    %905 = vdwg.mxu0
    %v907 = vrot.slane %v859, 7
    %v910 = vadd.f32 %v273, %v907
    %v911 = vadd.f32 %v276, %v859
    %v912 = vxor.u32 %v910, 2147483648
    %v913 = vxor.u32 %v911, 2147483648
    %v914 = vmul.f32 %v912, 1.442695
    %v915 = vpow.pop %v914
    %v916 = vmul.f32 %v913, 1.442695
    %v917 = vpow.pop %v916
    %v918 = vadd.f32 %v915, 1.0
    %v919 = vadd.f32 %v917, 1.0
    %v920 = vrcp.pop %v918
    %v921 = vmul.f32 1.0, %v920
    %v922 = vrcp.pop %v919
    %v923 = vmul.f32 1.0, %v922
    %v924 = vmul.f32 %v562, %v921
    %v925 = vmul.f32 %v563, %v923
    %v926 = vpack.c.bf16 %v924, %v924
    %v927 = vpack.c.bf16 %v925, %v925
    %v930 = vunpack.c.l.b16 %v926
    %v931 = vunpack.c.l.b16 %v927
    %v932 = vrot.slane %v930, 1
    %v933 = vsel %vm589, %v931, %v932
    %v934 = vpack.c.b16 %v933, %v933
    %936 = vmatprep.subr.bf16.mxu0 %v695
    %937 = vmatpush1.bf16.msra.mxu0 %v694
    %938 = vmatprep.subr.bf16.mxu0 %v692
    %939 = vmatpush1.bf16.msra.mxu0 %v691
    %940 = vmatprep.subr.bf16.mxu0 %v689
    %941 = vmatpush1.bf16.msra.mxu0 %v688
    %942 = vmatprep.subr.bf16.mxu0 %v686
    %943 = vmatpush1.bf16.msra.mxu0 %v685
    %944 = vmatprep.subr.bf16.mxu0 %v683
    %945 = vmatpush1.bf16.msra.mxu0 %v682
    %946 = vmatprep.subr.bf16.mxu0 %v680
    %947 = vmatpush1.bf16.msra.mxu0 %v679
    %948 = vmatprep.subr.bf16.mxu0 %v677
    %949 = vmatpush1.bf16.msra.mxu0 %v676
    %950 = vmatprep.subr.bf16.mxu0 %v674
    %951 = vmatpush1.bf16.msra.mxu0 %v673
    %952 = vmatprep.subr.bf16.mxu0 0
    %953 = vmatpush2.bf16.msra.mxu0 0
    %954 = vmatprep.subr.bf16.mxu0 0
    %955 = vmatpush2.bf16.msra.mxu0 0
    %956 = vmatprep.subr.bf16.mxu0 0
    %957 = vmatpush2.bf16.msra.mxu0 0
    %958 = vmatprep.subr.bf16.mxu0 0
    %959 = vmatpush2.bf16.msra.mxu0 0
    %960 = vmatprep.subr.bf16.mxu0 0
    %961 = vmatpush2.bf16.msra.mxu0 0
    %962 = vmatprep.subr.bf16.mxu0 0
    %963 = vmatpush2.bf16.msra.mxu0 0
    %964 = vmatprep.subr.bf16.mxu0 0
    %965 = vmatpush2.bf16.msra.mxu0 0
    %966 = vmatprep.subr.bf16.mxu0 0
    %967 = vmatpush2.bf16.msra.mxu0 0
    %968 = vmatprep.mubr.bf16.mxu0 0
    %969 = vmatmul.mubr.bf16.gmra.mxu0 %v934
    %v970 = vpop.f32.mrf.mxu0
    %v971 = vadd.f32 %v572, %v970
    %v972 = vpop.f32.mrf.mxu0
    %v973 = vadd.f32 %v576, %v972
    %v974 = vpop.f32.mrf.mxu0
    %v975 = vpop.f32.mrf.mxu0
    %976 = vdwg.mxu0
    %977 = vmatprep.subr.bf16.mxu0 0
    %978 = vmatpush1.bf16.msra.mxu0 %v696
    %979 = vmatprep.subr.bf16.mxu0 0
    %980 = vmatpush1.bf16.msra.mxu0 %v693
    %981 = vmatprep.subr.bf16.mxu0 0
    %982 = vmatpush1.bf16.msra.mxu0 %v690
    %983 = vmatprep.subr.bf16.mxu0 0
    %984 = vmatpush1.bf16.msra.mxu0 %v687
    %985 = vmatprep.subr.bf16.mxu0 0
    %986 = vmatpush1.bf16.msra.mxu0 %v684
    %987 = vmatprep.subr.bf16.mxu0 0
    %988 = vmatpush1.bf16.msra.mxu0 %v681
    %989 = vmatprep.subr.bf16.mxu0 0
    %990 = vmatpush1.bf16.msra.mxu0 %v678
    %991 = vmatprep.subr.bf16.mxu0 0
    %992 = vmatpush1.bf16.msra.mxu0 %v675
    %993 = vmatprep.subr.bf16.mxu0 0
    %994 = vmatpush2.bf16.msra.mxu0 0
    %995 = vmatprep.subr.bf16.mxu0 0
    %996 = vmatpush2.bf16.msra.mxu0 0
    %997 = vmatprep.subr.bf16.mxu0 0
    %998 = vmatpush2.bf16.msra.mxu0 0
    %999 = vmatprep.subr.bf16.mxu0 0
    %1000 = vmatpush2.bf16.msra.mxu0 0
    %1001 = vmatprep.subr.bf16.mxu0 0
    %1002 = vmatpush2.bf16.msra.mxu0 0
    %1003 = vmatprep.subr.bf16.mxu0 0
    %1004 = vmatpush2.bf16.msra.mxu0 0
    %1005 = vmatprep.subr.bf16.mxu0 0
    %1006 = vmatpush2.bf16.msra.mxu0 0
    %1007 = vmatprep.subr.bf16.mxu0 0
    %1008 = vmatpush2.bf16.msra.mxu0 0
    %1009 = vmatprep.mubr.bf16.mxu0 0
    %1010 = vmatmul.mubr.bf16.gmra.mxu0 %v934
    %v1011 = vpop.f32.mrf.mxu0
    %v1012 = vadd.f32 %v580, %v1011
    %v1013 = vpop.f32.mrf.mxu0
    %v1014 = vpop.f32.mrf.mxu0
    %v1015 = vpop.f32.mrf.mxu0
    %1016 = vdwg.mxu0
    %v1017 = vadd.f32 %v971, %v861
    %v1018 = vadd.f32 %v973, %v900
    %v1019 = vxor.u32 %v1017, 2147483648
    %v1020 = vxor.u32 %v1018, 2147483648
    %v1021 = vmul.f32 %v1019, 1.442695
    %v1022 = vpow.pop %v1021
    %v1023 = vmul.f32 %v1020, 1.442695
    %v1024 = vpow.pop %v1023
    %v1025 = vadd.f32 %v1022, 1.0
    %v1026 = vadd.f32 %v1024, 1.0
    %v1027 = vrcp.pop %v1025
    %v1028 = vmul.f32 1.0, %v1027
    %v1029 = vrcp.pop %v1026
    %v1030 = vmul.f32 1.0, %v1029
    %v1031 = vmul.f32 %v1028, %v902
    %v1032 = vadd.f32 %v1012, %v1031
    %v1033 = vtanh.pop %v1032
    %v1034 = vsub.f32 1.0, %v1030
    %v1035 = vmul.f32 %v1034, %v1033
    %v1036 = vmul.f32 %v1030, %v822
    %v1037 = vadd.f32 %v1035, %v1036
    %v1038 = vpack.c.bf16 %v1037, %v1037
    %1039 = vmatprep.subr.bf16.mxu0 %v427
    %1040 = vmatpush1.bf16.msra.mxu0 %v426
    %1041 = vmatprep.subr.bf16.mxu0 %v423
    %1042 = vmatpush1.bf16.msra.mxu0 %v422
    %1043 = vmatprep.subr.bf16.mxu0 %v419
    %1044 = vmatpush1.bf16.msra.mxu0 %v418
    %1045 = vmatprep.subr.bf16.mxu0 %v415
    %1046 = vmatpush1.bf16.msra.mxu0 %v414
    %1047 = vmatprep.subr.bf16.mxu0 %v411
    %1048 = vmatpush1.bf16.msra.mxu0 %v410
    %1049 = vmatprep.subr.bf16.mxu0 %v407
    %1050 = vmatpush1.bf16.msra.mxu0 %v406
    %1051 = vmatprep.subr.bf16.mxu0 %v403
    %1052 = vmatpush1.bf16.msra.mxu0 %v402
    %1053 = vmatprep.subr.bf16.mxu0 %v399
    %1054 = vmatpush1.bf16.msra.mxu0 %v398
    %1055 = vmatprep.subr.bf16.mxu0 0
    %1056 = vmatpush2.bf16.msra.mxu0 0
    %1057 = vmatprep.subr.bf16.mxu0 0
    %1058 = vmatpush2.bf16.msra.mxu0 0
    %1059 = vmatprep.subr.bf16.mxu0 0
    %1060 = vmatpush2.bf16.msra.mxu0 0
    %1061 = vmatprep.subr.bf16.mxu0 0
    %1062 = vmatpush2.bf16.msra.mxu0 0
    %1063 = vmatprep.subr.bf16.mxu0 0
    %1064 = vmatpush2.bf16.msra.mxu0 0
    %1065 = vmatprep.subr.bf16.mxu0 0
    %1066 = vmatpush2.bf16.msra.mxu0 0
    %1067 = vmatprep.subr.bf16.mxu0 0
    %1068 = vmatpush2.bf16.msra.mxu0 0
    %1069 = vmatprep.subr.bf16.mxu0 0
    %1070 = vmatpush2.bf16.msra.mxu0 0
    %1071 = vmatprep.mubr.bf16.mxu0 0
    %1072 = vmatmul.mubr.bf16.gmra.mxu0 %v1038
    %v1073 = vpop.f32.mrf.mxu0
    %v1074 = vadd.f32 %v285, %v1073
    %v1075 = vpop.f32.mrf.mxu0
    %v1076 = vadd.f32 %v289, %v1075
    %v1077 = vpop.f32.mrf.mxu0
    %v1078 = vpop.f32.mrf.mxu0
    %1079 = vdwg.mxu0
    %1080 = vmatprep.subr.bf16.mxu0 %v429
    %1081 = vmatpush1.bf16.msra.mxu0 %v428
    %1082 = vmatprep.subr.bf16.mxu0 %v425
    %1083 = vmatpush1.bf16.msra.mxu0 %v424
    %1084 = vmatprep.subr.bf16.mxu0 %v421
    %1085 = vmatpush1.bf16.msra.mxu0 %v420
    %1086 = vmatprep.subr.bf16.mxu0 %v417
    %1087 = vmatpush1.bf16.msra.mxu0 %v416
    %1088 = vmatprep.subr.bf16.mxu0 %v413
    %1089 = vmatpush1.bf16.msra.mxu0 %v412
    %1090 = vmatprep.subr.bf16.mxu0 %v409
    %1091 = vmatpush1.bf16.msra.mxu0 %v408
    %1092 = vmatprep.subr.bf16.mxu0 %v405
    %1093 = vmatpush1.bf16.msra.mxu0 %v404
    %1094 = vmatprep.subr.bf16.mxu0 %v401
    %1095 = vmatpush1.bf16.msra.mxu0 %v400
    %1096 = vmatprep.subr.bf16.mxu0 0
    %1097 = vmatpush2.bf16.msra.mxu0 0
    %1098 = vmatprep.subr.bf16.mxu0 0
    %1099 = vmatpush2.bf16.msra.mxu0 0
    %1100 = vmatprep.subr.bf16.mxu0 0
    %1101 = vmatpush2.bf16.msra.mxu0 0
    %1102 = vmatprep.subr.bf16.mxu0 0
    %1103 = vmatpush2.bf16.msra.mxu0 0
    %1104 = vmatprep.subr.bf16.mxu0 0
    %1105 = vmatpush2.bf16.msra.mxu0 0
    %1106 = vmatprep.subr.bf16.mxu0 0
    %1107 = vmatpush2.bf16.msra.mxu0 0
    %1108 = vmatprep.subr.bf16.mxu0 0
    %1109 = vmatpush2.bf16.msra.mxu0 0
    %1110 = vmatprep.subr.bf16.mxu0 0
    %1111 = vmatpush2.bf16.msra.mxu0 0
    %1112 = vmatprep.mubr.bf16.mxu0 0
    %1113 = vmatmul.mubr.bf16.gmra.mxu0 %v1038
    %v1114 = vpop.f32.mrf.mxu0
    %v1115 = vadd.f32 %v293, %v1114
    %v1116 = vpop.f32.mrf.mxu0
    %v1117 = vadd.f32 %v297, %v1116
    %v1118 = vpop.f32.mrf.mxu0
    %v1119 = vpop.f32.mrf.mxu0
    %1120 = vdwg.mxu0
    %v1122 = vrot.slane %v1074, 6
    %v1123 = vrot.slane %v1074, 7
    %v1126 = vadd.f32 %v273, %v1122
    %v1127 = vadd.f32 %v276, %v1123
    %v1128 = vxor.u32 %v1126, 2147483648
    %v1129 = vxor.u32 %v1127, 2147483648
    %v1130 = vmul.f32 %v1128, 1.442695
    %v1131 = vpow.pop %v1130
    %v1132 = vmul.f32 %v1129, 1.442695
    %v1133 = vpow.pop %v1132
    %v1134 = vadd.f32 %v1131, 1.0
    %v1135 = vadd.f32 %v1133, 1.0
    %v1136 = vrcp.pop %v1134
    %v1137 = vmul.f32 1.0, %v1136
    %v1138 = vrcp.pop %v1135
    %v1139 = vmul.f32 1.0, %v1138
    %v1140 = vmul.f32 %v562, %v1137
    %v1141 = vmul.f32 %v563, %v1139
    %v1142 = vpack.c.bf16 %v1140, %v1140
    %v1143 = vpack.c.bf16 %v1141, %v1141
    %v1146 = vunpack.c.l.b16 %v1142
    %v1147 = vunpack.c.l.b16 %v1143
    %v1148 = vrot.slane %v1146, 2
    %v1149 = vrot.slane %v1147, 1
    %v1150 = vsel %vm589, %v1149, %v1148
    %v1151 = vpack.c.b16 %v1150, %v1150
    %1153 = vmatprep.subr.bf16.mxu0 %v695
    %1154 = vmatpush1.bf16.msra.mxu0 %v694
    %1155 = vmatprep.subr.bf16.mxu0 %v692
    %1156 = vmatpush1.bf16.msra.mxu0 %v691
    %1157 = vmatprep.subr.bf16.mxu0 %v689
    %1158 = vmatpush1.bf16.msra.mxu0 %v688
    %1159 = vmatprep.subr.bf16.mxu0 %v686
    %1160 = vmatpush1.bf16.msra.mxu0 %v685
    %1161 = vmatprep.subr.bf16.mxu0 %v683
    %1162 = vmatpush1.bf16.msra.mxu0 %v682
    %1163 = vmatprep.subr.bf16.mxu0 %v680
    %1164 = vmatpush1.bf16.msra.mxu0 %v679
    %1165 = vmatprep.subr.bf16.mxu0 %v677
    %1166 = vmatpush1.bf16.msra.mxu0 %v676
    %1167 = vmatprep.subr.bf16.mxu0 %v674
    %1168 = vmatpush1.bf16.msra.mxu0 %v673
    %1169 = vmatprep.subr.bf16.mxu0 0
    %1170 = vmatpush2.bf16.msra.mxu0 0
    %1171 = vmatprep.subr.bf16.mxu0 0
    %1172 = vmatpush2.bf16.msra.mxu0 0
    %1173 = vmatprep.subr.bf16.mxu0 0
    %1174 = vmatpush2.bf16.msra.mxu0 0
    %1175 = vmatprep.subr.bf16.mxu0 0
    %1176 = vmatpush2.bf16.msra.mxu0 0
    %1177 = vmatprep.subr.bf16.mxu0 0
    %1178 = vmatpush2.bf16.msra.mxu0 0
    %1179 = vmatprep.subr.bf16.mxu0 0
    %1180 = vmatpush2.bf16.msra.mxu0 0
    %1181 = vmatprep.subr.bf16.mxu0 0
    %1182 = vmatpush2.bf16.msra.mxu0 0
    %1183 = vmatprep.subr.bf16.mxu0 0
    %1184 = vmatpush2.bf16.msra.mxu0 0
    %1185 = vmatprep.mubr.bf16.mxu0 0
    %1186 = vmatmul.mubr.bf16.gmra.mxu0 %v1151
    %v1187 = vpop.f32.mrf.mxu0
    %v1188 = vadd.f32 %v572, %v1187
    %v1189 = vpop.f32.mrf.mxu0
    %v1190 = vadd.f32 %v576, %v1189
    %v1191 = vpop.f32.mrf.mxu0
    %v1192 = vpop.f32.mrf.mxu0
    %1193 = vdwg.mxu0
    %1194 = vmatprep.subr.bf16.mxu0 0
    %1195 = vmatpush1.bf16.msra.mxu0 %v696
    %1196 = vmatprep.subr.bf16.mxu0 0
    %1197 = vmatpush1.bf16.msra.mxu0 %v693
    %1198 = vmatprep.subr.bf16.mxu0 0
    %1199 = vmatpush1.bf16.msra.mxu0 %v690
    %1200 = vmatprep.subr.bf16.mxu0 0
    %1201 = vmatpush1.bf16.msra.mxu0 %v687
    %1202 = vmatprep.subr.bf16.mxu0 0
    %1203 = vmatpush1.bf16.msra.mxu0 %v684
    %1204 = vmatprep.subr.bf16.mxu0 0
    %1205 = vmatpush1.bf16.msra.mxu0 %v681
    %1206 = vmatprep.subr.bf16.mxu0 0
    %1207 = vmatpush1.bf16.msra.mxu0 %v678
    %1208 = vmatprep.subr.bf16.mxu0 0
    %1209 = vmatpush1.bf16.msra.mxu0 %v675
    %1210 = vmatprep.subr.bf16.mxu0 0
    %1211 = vmatpush2.bf16.msra.mxu0 0
    %1212 = vmatprep.subr.bf16.mxu0 0
    %1213 = vmatpush2.bf16.msra.mxu0 0
    %1214 = vmatprep.subr.bf16.mxu0 0
    %1215 = vmatpush2.bf16.msra.mxu0 0
    %1216 = vmatprep.subr.bf16.mxu0 0
    %1217 = vmatpush2.bf16.msra.mxu0 0
    %1218 = vmatprep.subr.bf16.mxu0 0
    %1219 = vmatpush2.bf16.msra.mxu0 0
    %1220 = vmatprep.subr.bf16.mxu0 0
    %1221 = vmatpush2.bf16.msra.mxu0 0
    %1222 = vmatprep.subr.bf16.mxu0 0
    %1223 = vmatpush2.bf16.msra.mxu0 0
    %1224 = vmatprep.subr.bf16.mxu0 0
    %1225 = vmatpush2.bf16.msra.mxu0 0
    %1226 = vmatprep.mubr.bf16.mxu0 0
    %1227 = vmatmul.mubr.bf16.gmra.mxu0 %v1151
    %v1228 = vpop.f32.mrf.mxu0
    %v1229 = vadd.f32 %v580, %v1228
    %v1230 = vpop.f32.mrf.mxu0
    %v1231 = vpop.f32.mrf.mxu0
    %v1232 = vpop.f32.mrf.mxu0
    %1233 = vdwg.mxu0
    %v1234 = vadd.f32 %v1188, %v1076
    %v1235 = vadd.f32 %v1190, %v1115
    %v1236 = vxor.u32 %v1234, 2147483648
    %v1237 = vxor.u32 %v1235, 2147483648
    %v1238 = vmul.f32 %v1236, 1.442695
    %v1239 = vpow.pop %v1238
    %v1240 = vmul.f32 %v1237, 1.442695
    %v1241 = vpow.pop %v1240
    %v1242 = vadd.f32 %v1239, 1.0
    %v1243 = vadd.f32 %v1241, 1.0
    %v1244 = vrcp.pop %v1242
    %v1245 = vmul.f32 1.0, %v1244
    %v1246 = vrcp.pop %v1243
    %v1247 = vmul.f32 1.0, %v1246
    %v1248 = vmul.f32 %v1245, %v1117
    %v1249 = vadd.f32 %v1229, %v1248
    %v1250 = vtanh.pop %v1249
    %v1251 = vsub.f32 1.0, %v1247
    %v1252 = vmul.f32 %v1251, %v1250
    %v1253 = vmul.f32 %v1247, %v1037
    %v1254 = vadd.f32 %v1252, %v1253
    %v1255 = vpack.c.bf16 %v1254, %v1254
    %1256 = vmatprep.subr.bf16.mxu0 %v427
    %1257 = vmatpush1.bf16.msra.mxu0 %v426
    %1258 = vmatprep.subr.bf16.mxu0 %v423
    %1259 = vmatpush1.bf16.msra.mxu0 %v422
    %1260 = vmatprep.subr.bf16.mxu0 %v419
    %1261 = vmatpush1.bf16.msra.mxu0 %v418
    %1262 = vmatprep.subr.bf16.mxu0 %v415
    %1263 = vmatpush1.bf16.msra.mxu0 %v414
    %1264 = vmatprep.subr.bf16.mxu0 %v411
    %1265 = vmatpush1.bf16.msra.mxu0 %v410
    %1266 = vmatprep.subr.bf16.mxu0 %v407
    %1267 = vmatpush1.bf16.msra.mxu0 %v406
    %1268 = vmatprep.subr.bf16.mxu0 %v403
    %1269 = vmatpush1.bf16.msra.mxu0 %v402
    %1270 = vmatprep.subr.bf16.mxu0 %v399
    %1271 = vmatpush1.bf16.msra.mxu0 %v398
    %1272 = vmatprep.subr.bf16.mxu0 0
    %1273 = vmatpush2.bf16.msra.mxu0 0
    %1274 = vmatprep.subr.bf16.mxu0 0
    %1275 = vmatpush2.bf16.msra.mxu0 0
    %1276 = vmatprep.subr.bf16.mxu0 0
    %1277 = vmatpush2.bf16.msra.mxu0 0
    %1278 = vmatprep.subr.bf16.mxu0 0
    %1279 = vmatpush2.bf16.msra.mxu0 0
    %1280 = vmatprep.subr.bf16.mxu0 0
    %1281 = vmatpush2.bf16.msra.mxu0 0
    %1282 = vmatprep.subr.bf16.mxu0 0
    %1283 = vmatpush2.bf16.msra.mxu0 0
    %1284 = vmatprep.subr.bf16.mxu0 0
    %1285 = vmatpush2.bf16.msra.mxu0 0
    %1286 = vmatprep.subr.bf16.mxu0 0
    %1287 = vmatpush2.bf16.msra.mxu0 0
    %1288 = vmatprep.mubr.bf16.mxu0 0
    %1289 = vmatmul.mubr.bf16.gmra.mxu0 %v1255
    %v1290 = vpop.f32.mrf.mxu0
    %v1291 = vadd.f32 %v285, %v1290
    %v1292 = vpop.f32.mrf.mxu0
    %v1293 = vadd.f32 %v289, %v1292
    %v1294 = vpop.f32.mrf.mxu0
    %v1295 = vpop.f32.mrf.mxu0
    %1296 = vdwg.mxu0
    %1297 = vmatprep.subr.bf16.mxu0 %v429
    %1298 = vmatpush1.bf16.msra.mxu0 %v428
    %1299 = vmatprep.subr.bf16.mxu0 %v425
    %1300 = vmatpush1.bf16.msra.mxu0 %v424
    %1301 = vmatprep.subr.bf16.mxu0 %v421
    %1302 = vmatpush1.bf16.msra.mxu0 %v420
    %1303 = vmatprep.subr.bf16.mxu0 %v417
    %1304 = vmatpush1.bf16.msra.mxu0 %v416
    %1305 = vmatprep.subr.bf16.mxu0 %v413
    %1306 = vmatpush1.bf16.msra.mxu0 %v412
    %1307 = vmatprep.subr.bf16.mxu0 %v409
    %1308 = vmatpush1.bf16.msra.mxu0 %v408
    %1309 = vmatprep.subr.bf16.mxu0 %v405
    %1310 = vmatpush1.bf16.msra.mxu0 %v404
    %1311 = vmatprep.subr.bf16.mxu0 %v401
    %1312 = vmatpush1.bf16.msra.mxu0 %v400
    %1313 = vmatprep.subr.bf16.mxu0 0
    %1314 = vmatpush2.bf16.msra.mxu0 0
    %1315 = vmatprep.subr.bf16.mxu0 0
    %1316 = vmatpush2.bf16.msra.mxu0 0
    %1317 = vmatprep.subr.bf16.mxu0 0
    %1318 = vmatpush2.bf16.msra.mxu0 0
    %1319 = vmatprep.subr.bf16.mxu0 0
    %1320 = vmatpush2.bf16.msra.mxu0 0
    %1321 = vmatprep.subr.bf16.mxu0 0
    %1322 = vmatpush2.bf16.msra.mxu0 0
    %1323 = vmatprep.subr.bf16.mxu0 0
    %1324 = vmatpush2.bf16.msra.mxu0 0
    %1325 = vmatprep.subr.bf16.mxu0 0
    %1326 = vmatpush2.bf16.msra.mxu0 0
    %1327 = vmatprep.subr.bf16.mxu0 0
    %1328 = vmatpush2.bf16.msra.mxu0 0
    %1329 = vmatprep.mubr.bf16.mxu0 0
    %1330 = vmatmul.mubr.bf16.gmra.mxu0 %v1255
    %v1331 = vpop.f32.mrf.mxu0
    %v1332 = vadd.f32 %v293, %v1331
    %v1333 = vpop.f32.mrf.mxu0
    %v1334 = vadd.f32 %v297, %v1333
    %v1335 = vpop.f32.mrf.mxu0
    %v1336 = vpop.f32.mrf.mxu0
    %1337 = vdwg.mxu0
    %v1339 = vrot.slane %v1291, 5
    %v1340 = vrot.slane %v1291, 6
    %v1343 = vadd.f32 %v273, %v1339
    %v1344 = vadd.f32 %v276, %v1340
    %v1345 = vxor.u32 %v1343, 2147483648
    %v1346 = vxor.u32 %v1344, 2147483648
    %v1347 = vmul.f32 %v1345, 1.442695
    %v1348 = vpow.pop %v1347
    %v1349 = vmul.f32 %v1346, 1.442695
    %v1350 = vpow.pop %v1349
    %v1351 = vadd.f32 %v1348, 1.0
    %v1352 = vadd.f32 %v1350, 1.0
    %v1353 = vrcp.pop %v1351
    %v1354 = vmul.f32 1.0, %v1353
    %v1355 = vrcp.pop %v1352
    %v1356 = vmul.f32 1.0, %v1355
    %v1357 = vmul.f32 %v562, %v1354
    %v1358 = vmul.f32 %v563, %v1356
    %v1359 = vpack.c.bf16 %v1357, %v1357
    %v1360 = vpack.c.bf16 %v1358, %v1358
    %v1363 = vunpack.c.l.b16 %v1359
    %v1364 = vunpack.c.l.b16 %v1360
    %v1365 = vrot.slane %v1363, 3
    %v1366 = vrot.slane %v1364, 2
    %v1367 = vsel %vm589, %v1366, %v1365
    %v1368 = vpack.c.b16 %v1367, %v1367
    %1370 = vmatprep.subr.bf16.mxu0 %v695
    %1371 = vmatpush1.bf16.msra.mxu0 %v694
    %1372 = vmatprep.subr.bf16.mxu0 %v692
    %1373 = vmatpush1.bf16.msra.mxu0 %v691
    %1374 = vmatprep.subr.bf16.mxu0 %v689
    %1375 = vmatpush1.bf16.msra.mxu0 %v688
    %1376 = vmatprep.subr.bf16.mxu0 %v686
    %1377 = vmatpush1.bf16.msra.mxu0 %v685
    %1378 = vmatprep.subr.bf16.mxu0 %v683
    %1379 = vmatpush1.bf16.msra.mxu0 %v682
    %1380 = vmatprep.subr.bf16.mxu0 %v680
    %1381 = vmatpush1.bf16.msra.mxu0 %v679
    %1382 = vmatprep.subr.bf16.mxu0 %v677
    %1383 = vmatpush1.bf16.msra.mxu0 %v676
    %1384 = vmatprep.subr.bf16.mxu0 %v674
    %1385 = vmatpush1.bf16.msra.mxu0 %v673
    %1386 = vmatprep.subr.bf16.mxu0 0
    %1387 = vmatpush2.bf16.msra.mxu0 0
    %1388 = vmatprep.subr.bf16.mxu0 0
    %1389 = vmatpush2.bf16.msra.mxu0 0
    %1390 = vmatprep.subr.bf16.mxu0 0
    %1391 = vmatpush2.bf16.msra.mxu0 0
    %1392 = vmatprep.subr.bf16.mxu0 0
    %1393 = vmatpush2.bf16.msra.mxu0 0
    %1394 = vmatprep.subr.bf16.mxu0 0
    %1395 = vmatpush2.bf16.msra.mxu0 0
    %1396 = vmatprep.subr.bf16.mxu0 0
    %1397 = vmatpush2.bf16.msra.mxu0 0
    %1398 = vmatprep.subr.bf16.mxu0 0
    %1399 = vmatpush2.bf16.msra.mxu0 0
    %1400 = vmatprep.subr.bf16.mxu0 0
    %1401 = vmatpush2.bf16.msra.mxu0 0
    %1402 = vmatprep.mubr.bf16.mxu0 0
    %1403 = vmatmul.mubr.bf16.gmra.mxu0 %v1368
    %v1404 = vpop.f32.mrf.mxu0
    %v1405 = vadd.f32 %v572, %v1404
    %v1406 = vpop.f32.mrf.mxu0
    %v1407 = vadd.f32 %v576, %v1406
    %v1408 = vpop.f32.mrf.mxu0
    %v1409 = vpop.f32.mrf.mxu0
    %1410 = vdwg.mxu0
    %1411 = vmatprep.subr.bf16.mxu0 0
    %1412 = vmatpush1.bf16.msra.mxu0 %v696
    %1413 = vmatprep.subr.bf16.mxu0 0
    %1414 = vmatpush1.bf16.msra.mxu0 %v693
    %1415 = vmatprep.subr.bf16.mxu0 0
    %1416 = vmatpush1.bf16.msra.mxu0 %v690
    %1417 = vmatprep.subr.bf16.mxu0 0
    %1418 = vmatpush1.bf16.msra.mxu0 %v687
    %1419 = vmatprep.subr.bf16.mxu0 0
    %1420 = vmatpush1.bf16.msra.mxu0 %v684
    %1421 = vmatprep.subr.bf16.mxu0 0
    %1422 = vmatpush1.bf16.msra.mxu0 %v681
    %1423 = vmatprep.subr.bf16.mxu0 0
    %1424 = vmatpush1.bf16.msra.mxu0 %v678
    %1425 = vmatprep.subr.bf16.mxu0 0
    %1426 = vmatpush1.bf16.msra.mxu0 %v675
    %1427 = vmatprep.subr.bf16.mxu0 0
    %1428 = vmatpush2.bf16.msra.mxu0 0
    %1429 = vmatprep.subr.bf16.mxu0 0
    %1430 = vmatpush2.bf16.msra.mxu0 0
    %1431 = vmatprep.subr.bf16.mxu0 0
    %1432 = vmatpush2.bf16.msra.mxu0 0
    %1433 = vmatprep.subr.bf16.mxu0 0
    %1434 = vmatpush2.bf16.msra.mxu0 0
    %1435 = vmatprep.subr.bf16.mxu0 0
    %1436 = vmatpush2.bf16.msra.mxu0 0
    %1437 = vmatprep.subr.bf16.mxu0 0
    %1438 = vmatpush2.bf16.msra.mxu0 0
    %1439 = vmatprep.subr.bf16.mxu0 0
    %1440 = vmatpush2.bf16.msra.mxu0 0
    %1441 = vmatprep.subr.bf16.mxu0 0
    %1442 = vmatpush2.bf16.msra.mxu0 0
    %1443 = vmatprep.mubr.bf16.mxu0 0
    %1444 = vmatmul.mubr.bf16.gmra.mxu0 %v1368
    %v1445 = vpop.f32.mrf.mxu0
    %v1446 = vadd.f32 %v580, %v1445
    %v1447 = vpop.f32.mrf.mxu0
    %v1448 = vpop.f32.mrf.mxu0
    %v1449 = vpop.f32.mrf.mxu0
    %1450 = vdwg.mxu0
    %v1451 = vadd.f32 %v1405, %v1293
    %v1452 = vadd.f32 %v1407, %v1332
    %v1453 = vxor.u32 %v1451, 2147483648
    %v1454 = vxor.u32 %v1452, 2147483648
    %v1455 = vmul.f32 %v1453, 1.442695
    %v1456 = vpow.pop %v1455
    %v1457 = vmul.f32 %v1454, 1.442695
    %v1458 = vpow.pop %v1457
    %v1459 = vadd.f32 %v1456, 1.0
    %v1460 = vadd.f32 %v1458, 1.0
    %v1461 = vrcp.pop %v1459
    %v1462 = vmul.f32 1.0, %v1461
    %v1463 = vrcp.pop %v1460
    %v1464 = vmul.f32 1.0, %v1463
    %v1465 = vmul.f32 %v1462, %v1334
    %v1466 = vadd.f32 %v1446, %v1465
    %v1467 = vtanh.pop %v1466
    %v1468 = vsub.f32 1.0, %v1464
    %v1469 = vmul.f32 %v1468, %v1467
    %v1470 = vmul.f32 %v1464, %v1254
    %v1471 = vadd.f32 %v1469, %v1470
    %v1472 = vpack.c.bf16 %v1471, %v1471
    %1473 = vmatprep.subr.bf16.mxu0 %v427
    %1474 = vmatpush1.bf16.msra.mxu0 %v426
    %1475 = vmatprep.subr.bf16.mxu0 %v423
    %1476 = vmatpush1.bf16.msra.mxu0 %v422
    %1477 = vmatprep.subr.bf16.mxu0 %v419
    %1478 = vmatpush1.bf16.msra.mxu0 %v418
    %1479 = vmatprep.subr.bf16.mxu0 %v415
    %1480 = vmatpush1.bf16.msra.mxu0 %v414
    %1481 = vmatprep.subr.bf16.mxu0 %v411
    %1482 = vmatpush1.bf16.msra.mxu0 %v410
    %1483 = vmatprep.subr.bf16.mxu0 %v407
    %1484 = vmatpush1.bf16.msra.mxu0 %v406
    %1485 = vmatprep.subr.bf16.mxu0 %v403
    %1486 = vmatpush1.bf16.msra.mxu0 %v402
    %1487 = vmatprep.subr.bf16.mxu0 %v399
    %1488 = vmatpush1.bf16.msra.mxu0 %v398
    %1489 = vmatprep.subr.bf16.mxu0 0
    %1490 = vmatpush2.bf16.msra.mxu0 0
    %1491 = vmatprep.subr.bf16.mxu0 0
    %1492 = vmatpush2.bf16.msra.mxu0 0
    %1493 = vmatprep.subr.bf16.mxu0 0
    %1494 = vmatpush2.bf16.msra.mxu0 0
    %1495 = vmatprep.subr.bf16.mxu0 0
    %1496 = vmatpush2.bf16.msra.mxu0 0
    %1497 = vmatprep.subr.bf16.mxu0 0
    %1498 = vmatpush2.bf16.msra.mxu0 0
    %1499 = vmatprep.subr.bf16.mxu0 0
    %1500 = vmatpush2.bf16.msra.mxu0 0
    %1501 = vmatprep.subr.bf16.mxu0 0
    %1502 = vmatpush2.bf16.msra.mxu0 0
    %1503 = vmatprep.subr.bf16.mxu0 0
    %1504 = vmatpush2.bf16.msra.mxu0 0
    %1505 = vmatprep.mubr.bf16.mxu0 0
    %1506 = vmatmul.mubr.bf16.gmra.mxu0 %v1472
    %v1507 = vpop.f32.mrf.mxu0
    %v1508 = vadd.f32 %v285, %v1507
    %v1509 = vpop.f32.mrf.mxu0
    %v1510 = vadd.f32 %v289, %v1509
    %v1511 = vpop.f32.mrf.mxu0
    %v1512 = vpop.f32.mrf.mxu0
    %1513 = vdwg.mxu0
    %1514 = vmatprep.subr.bf16.mxu0 %v429
    %1515 = vmatpush1.bf16.msra.mxu0 %v428
    %1516 = vmatprep.subr.bf16.mxu0 %v425
    %1517 = vmatpush1.bf16.msra.mxu0 %v424
    %1518 = vmatprep.subr.bf16.mxu0 %v421
    %1519 = vmatpush1.bf16.msra.mxu0 %v420
    %1520 = vmatprep.subr.bf16.mxu0 %v417
    %1521 = vmatpush1.bf16.msra.mxu0 %v416
    %1522 = vmatprep.subr.bf16.mxu0 %v413
    %1523 = vmatpush1.bf16.msra.mxu0 %v412
    %1524 = vmatprep.subr.bf16.mxu0 %v409
    %1525 = vmatpush1.bf16.msra.mxu0 %v408
    %1526 = vmatprep.subr.bf16.mxu0 %v405
    %1527 = vmatpush1.bf16.msra.mxu0 %v404
    %1528 = vmatprep.subr.bf16.mxu0 %v401
    %1529 = vmatpush1.bf16.msra.mxu0 %v400
    %1530 = vmatprep.subr.bf16.mxu0 0
    %1531 = vmatpush2.bf16.msra.mxu0 0
    %1532 = vmatprep.subr.bf16.mxu0 0
    %1533 = vmatpush2.bf16.msra.mxu0 0
    %1534 = vmatprep.subr.bf16.mxu0 0
    %1535 = vmatpush2.bf16.msra.mxu0 0
    %1536 = vmatprep.subr.bf16.mxu0 0
    %1537 = vmatpush2.bf16.msra.mxu0 0
    %1538 = vmatprep.subr.bf16.mxu0 0
    %1539 = vmatpush2.bf16.msra.mxu0 0
    %1540 = vmatprep.subr.bf16.mxu0 0
    %1541 = vmatpush2.bf16.msra.mxu0 0
    %1542 = vmatprep.subr.bf16.mxu0 0
    %1543 = vmatpush2.bf16.msra.mxu0 0
    %1544 = vmatprep.subr.bf16.mxu0 0
    %1545 = vmatpush2.bf16.msra.mxu0 0
    %1546 = vmatprep.mubr.bf16.mxu0 0
    %1547 = vmatmul.mubr.bf16.gmra.mxu0 %v1472
    %v1548 = vpop.f32.mrf.mxu0
    %v1549 = vadd.f32 %v293, %v1548
    %v1550 = vpop.f32.mrf.mxu0
    %v1551 = vadd.f32 %v297, %v1550
    %v1552 = vpop.f32.mrf.mxu0
    %v1553 = vpop.f32.mrf.mxu0
    %1554 = vdwg.mxu0
    %v1556 = vrot.slane %v1508, 4
    %v1557 = vrot.slane %v1508, 5
    %v1560 = vadd.f32 %v273, %v1556
    %v1561 = vadd.f32 %v276, %v1557
    %v1562 = vxor.u32 %v1560, 2147483648
    %v1563 = vxor.u32 %v1561, 2147483648
    %v1564 = vmul.f32 %v1562, 1.442695
    %v1565 = vpow.pop %v1564
    %v1566 = vmul.f32 %v1563, 1.442695
    %v1567 = vpow.pop %v1566
    %v1568 = vadd.f32 %v1565, 1.0
    %v1569 = vadd.f32 %v1567, 1.0
    %v1570 = vrcp.pop %v1568
    %v1571 = vmul.f32 1.0, %v1570
    %v1572 = vrcp.pop %v1569
    %v1573 = vmul.f32 1.0, %v1572
    %v1574 = vmul.f32 %v562, %v1571
    %v1575 = vmul.f32 %v563, %v1573
    %v1576 = vpack.c.bf16 %v1574, %v1574
    %v1577 = vpack.c.bf16 %v1575, %v1575
    %v1580 = vunpack.c.l.b16 %v1576
    %v1581 = vunpack.c.l.b16 %v1577
    %v1582 = vrot.slane %v1580, 4
    %v1583 = vrot.slane %v1581, 3
    %v1584 = vsel %vm589, %v1583, %v1582
    %v1585 = vpack.c.b16 %v1584, %v1584
    %1587 = vmatprep.subr.bf16.mxu0 %v695
    %1588 = vmatpush1.bf16.msra.mxu0 %v694
    %1589 = vmatprep.subr.bf16.mxu0 %v692
    %1590 = vmatpush1.bf16.msra.mxu0 %v691
    %1591 = vmatprep.subr.bf16.mxu0 %v689
    %1592 = vmatpush1.bf16.msra.mxu0 %v688
    %1593 = vmatprep.subr.bf16.mxu0 %v686
    %1594 = vmatpush1.bf16.msra.mxu0 %v685
    %1595 = vmatprep.subr.bf16.mxu0 %v683
    %1596 = vmatpush1.bf16.msra.mxu0 %v682
    %1597 = vmatprep.subr.bf16.mxu0 %v680
    %1598 = vmatpush1.bf16.msra.mxu0 %v679
    %1599 = vmatprep.subr.bf16.mxu0 %v677
    %1600 = vmatpush1.bf16.msra.mxu0 %v676
    %1601 = vmatprep.subr.bf16.mxu0 %v674
    %1602 = vmatpush1.bf16.msra.mxu0 %v673
    %1603 = vmatprep.subr.bf16.mxu0 0
    %1604 = vmatpush2.bf16.msra.mxu0 0
    %1605 = vmatprep.subr.bf16.mxu0 0
    %1606 = vmatpush2.bf16.msra.mxu0 0
    %1607 = vmatprep.subr.bf16.mxu0 0
    %1608 = vmatpush2.bf16.msra.mxu0 0
    %1609 = vmatprep.subr.bf16.mxu0 0
    %1610 = vmatpush2.bf16.msra.mxu0 0
    %1611 = vmatprep.subr.bf16.mxu0 0
    %1612 = vmatpush2.bf16.msra.mxu0 0
    %1613 = vmatprep.subr.bf16.mxu0 0
    %1614 = vmatpush2.bf16.msra.mxu0 0
    %1615 = vmatprep.subr.bf16.mxu0 0
    %1616 = vmatpush2.bf16.msra.mxu0 0
    %1617 = vmatprep.subr.bf16.mxu0 0
    %1618 = vmatpush2.bf16.msra.mxu0 0
    %1619 = vmatprep.mubr.bf16.mxu0 0
    %1620 = vmatmul.mubr.bf16.gmra.mxu0 %v1585
    %v1621 = vpop.f32.mrf.mxu0
    %v1622 = vadd.f32 %v572, %v1621
    %v1623 = vpop.f32.mrf.mxu0
    %v1624 = vadd.f32 %v576, %v1623
    %v1625 = vpop.f32.mrf.mxu0
    %v1626 = vpop.f32.mrf.mxu0
    %1627 = vdwg.mxu0
    %1628 = vmatprep.subr.bf16.mxu0 0
    %1629 = vmatpush1.bf16.msra.mxu0 %v696
    %1630 = vmatprep.subr.bf16.mxu0 0
    %1631 = vmatpush1.bf16.msra.mxu0 %v693
    %1632 = vmatprep.subr.bf16.mxu0 0
    %1633 = vmatpush1.bf16.msra.mxu0 %v690
    %1634 = vmatprep.subr.bf16.mxu0 0
    %1635 = vmatpush1.bf16.msra.mxu0 %v687
    %1636 = vmatprep.subr.bf16.mxu0 0
    %1637 = vmatpush1.bf16.msra.mxu0 %v684
    %1638 = vmatprep.subr.bf16.mxu0 0
    %1639 = vmatpush1.bf16.msra.mxu0 %v681
    %1640 = vmatprep.subr.bf16.mxu0 0
    %1641 = vmatpush1.bf16.msra.mxu0 %v678
    %1642 = vmatprep.subr.bf16.mxu0 0
    %1643 = vmatpush1.bf16.msra.mxu0 %v675
    %1644 = vmatprep.subr.bf16.mxu0 0
    %1645 = vmatpush2.bf16.msra.mxu0 0
    %1646 = vmatprep.subr.bf16.mxu0 0
    %1647 = vmatpush2.bf16.msra.mxu0 0
    %1648 = vmatprep.subr.bf16.mxu0 0
    %1649 = vmatpush2.bf16.msra.mxu0 0
    %1650 = vmatprep.subr.bf16.mxu0 0
    %1651 = vmatpush2.bf16.msra.mxu0 0
    %1652 = vmatprep.subr.bf16.mxu0 0
    %1653 = vmatpush2.bf16.msra.mxu0 0
    %1654 = vmatprep.subr.bf16.mxu0 0
    %1655 = vmatpush2.bf16.msra.mxu0 0
    %1656 = vmatprep.subr.bf16.mxu0 0
    %1657 = vmatpush2.bf16.msra.mxu0 0
    %1658 = vmatprep.subr.bf16.mxu0 0
    %1659 = vmatpush2.bf16.msra.mxu0 0
    %1660 = vmatprep.mubr.bf16.mxu0 0
    %1661 = vmatmul.mubr.bf16.gmra.mxu0 %v1585
    %v1662 = vpop.f32.mrf.mxu0
    %v1663 = vadd.f32 %v580, %v1662
    %v1664 = vpop.f32.mrf.mxu0
    %v1665 = vpop.f32.mrf.mxu0
    %v1666 = vpop.f32.mrf.mxu0
    %1667 = vdwg.mxu0
    %v1668 = vadd.f32 %v1622, %v1510
    %v1669 = vadd.f32 %v1624, %v1549
    %v1670 = vxor.u32 %v1668, 2147483648
    %v1671 = vxor.u32 %v1669, 2147483648
    %v1672 = vmul.f32 %v1670, 1.442695
    %v1673 = vpow.pop %v1672
    %v1674 = vmul.f32 %v1671, 1.442695
    %v1675 = vpow.pop %v1674
    %v1676 = vadd.f32 %v1673, 1.0
    %v1677 = vadd.f32 %v1675, 1.0
    %v1678 = vrcp.pop %v1676
    %v1679 = vmul.f32 1.0, %v1678
    %v1680 = vrcp.pop %v1677
    %v1681 = vmul.f32 1.0, %v1680
    %v1682 = vmul.f32 %v1679, %v1551
    %v1683 = vadd.f32 %v1663, %v1682
    %v1684 = vtanh.pop %v1683
    %v1685 = vsub.f32 1.0, %v1681
    %v1686 = vmul.f32 %v1685, %v1684
    %v1687 = vmul.f32 %v1681, %v1471
    %v1688 = vadd.f32 %v1686, %v1687
    %v1689 = vpack.c.bf16 %v1688, %v1688
    %1690 = vmatprep.subr.bf16.mxu0 %v427
    %1691 = vmatpush1.bf16.msra.mxu0 %v426
    %1692 = vmatprep.subr.bf16.mxu0 %v423
    %1693 = vmatpush1.bf16.msra.mxu0 %v422
    %1694 = vmatprep.subr.bf16.mxu0 %v419
    %1695 = vmatpush1.bf16.msra.mxu0 %v418
    %1696 = vmatprep.subr.bf16.mxu0 %v415
    %1697 = vmatpush1.bf16.msra.mxu0 %v414
    %1698 = vmatprep.subr.bf16.mxu0 %v411
    %1699 = vmatpush1.bf16.msra.mxu0 %v410
    %1700 = vmatprep.subr.bf16.mxu0 %v407
    %1701 = vmatpush1.bf16.msra.mxu0 %v406
    %1702 = vmatprep.subr.bf16.mxu0 %v403
    %1703 = vmatpush1.bf16.msra.mxu0 %v402
    %1704 = vmatprep.subr.bf16.mxu0 %v399
    %1705 = vmatpush1.bf16.msra.mxu0 %v398
    %1706 = vmatprep.subr.bf16.mxu0 0
    %1707 = vmatpush2.bf16.msra.mxu0 0
    %1708 = vmatprep.subr.bf16.mxu0 0
    %1709 = vmatpush2.bf16.msra.mxu0 0
    %1710 = vmatprep.subr.bf16.mxu0 0
    %1711 = vmatpush2.bf16.msra.mxu0 0
    %1712 = vmatprep.subr.bf16.mxu0 0
    %1713 = vmatpush2.bf16.msra.mxu0 0
    %1714 = vmatprep.subr.bf16.mxu0 0
    %1715 = vmatpush2.bf16.msra.mxu0 0
    %1716 = vmatprep.subr.bf16.mxu0 0
    %1717 = vmatpush2.bf16.msra.mxu0 0
    %1718 = vmatprep.subr.bf16.mxu0 0
    %1719 = vmatpush2.bf16.msra.mxu0 0
    %1720 = vmatprep.subr.bf16.mxu0 0
    %1721 = vmatpush2.bf16.msra.mxu0 0
    %1722 = vmatprep.mubr.bf16.mxu0 0
    %1723 = vmatmul.mubr.bf16.gmra.mxu0 %v1689
    %v1724 = vpop.f32.mrf.mxu0
    %v1725 = vadd.f32 %v285, %v1724
    %v1726 = vpop.f32.mrf.mxu0
    %v1727 = vadd.f32 %v289, %v1726
    %v1728 = vpop.f32.mrf.mxu0
    %v1729 = vpop.f32.mrf.mxu0
    %1730 = vdwg.mxu0
    %1731 = vmatprep.subr.bf16.mxu0 %v429
    %1732 = vmatpush1.bf16.msra.mxu0 %v428
    %1733 = vmatprep.subr.bf16.mxu0 %v425
    %1734 = vmatpush1.bf16.msra.mxu0 %v424
    %1735 = vmatprep.subr.bf16.mxu0 %v421
    %1736 = vmatpush1.bf16.msra.mxu0 %v420
    %1737 = vmatprep.subr.bf16.mxu0 %v417
    %1738 = vmatpush1.bf16.msra.mxu0 %v416
    %1739 = vmatprep.subr.bf16.mxu0 %v413
    %1740 = vmatpush1.bf16.msra.mxu0 %v412
    %1741 = vmatprep.subr.bf16.mxu0 %v409
    %1742 = vmatpush1.bf16.msra.mxu0 %v408
    %1743 = vmatprep.subr.bf16.mxu0 %v405
    %1744 = vmatpush1.bf16.msra.mxu0 %v404
    %1745 = vmatprep.subr.bf16.mxu0 %v401
    %1746 = vmatpush1.bf16.msra.mxu0 %v400
    %1747 = vmatprep.subr.bf16.mxu0 0
    %1748 = vmatpush2.bf16.msra.mxu0 0
    %1749 = vmatprep.subr.bf16.mxu0 0
    %1750 = vmatpush2.bf16.msra.mxu0 0
    %1751 = vmatprep.subr.bf16.mxu0 0
    %1752 = vmatpush2.bf16.msra.mxu0 0
    %1753 = vmatprep.subr.bf16.mxu0 0
    %1754 = vmatpush2.bf16.msra.mxu0 0
    %1755 = vmatprep.subr.bf16.mxu0 0
    %1756 = vmatpush2.bf16.msra.mxu0 0
    %1757 = vmatprep.subr.bf16.mxu0 0
    %1758 = vmatpush2.bf16.msra.mxu0 0
    %1759 = vmatprep.subr.bf16.mxu0 0
    %1760 = vmatpush2.bf16.msra.mxu0 0
    %1761 = vmatprep.subr.bf16.mxu0 0
    %1762 = vmatpush2.bf16.msra.mxu0 0
    %1763 = vmatprep.mubr.bf16.mxu0 0
    %1764 = vmatmul.mubr.bf16.gmra.mxu0 %v1689
    %v1765 = vpop.f32.mrf.mxu0
    %v1766 = vadd.f32 %v293, %v1765
    %v1767 = vpop.f32.mrf.mxu0
    %v1768 = vadd.f32 %v297, %v1767
    %v1769 = vpop.f32.mrf.mxu0
    %v1770 = vpop.f32.mrf.mxu0
    %1771 = vdwg.mxu0
    %v1773 = vrot.slane %v1725, 3
    %v1774 = vrot.slane %v1725, 4
    %v1777 = vadd.f32 %v273, %v1773
    %v1778 = vadd.f32 %v276, %v1774
    %v1779 = vxor.u32 %v1777, 2147483648
    %v1780 = vxor.u32 %v1778, 2147483648
    %v1781 = vmul.f32 %v1779, 1.442695
    %v1782 = vpow.pop %v1781
    %v1783 = vmul.f32 %v1780, 1.442695
    %v1784 = vpow.pop %v1783
    %v1785 = vadd.f32 %v1782, 1.0
    %v1786 = vadd.f32 %v1784, 1.0
    %v1787 = vrcp.pop %v1785
    %v1788 = vmul.f32 1.0, %v1787
    %v1789 = vrcp.pop %v1786
    %v1790 = vmul.f32 1.0, %v1789
    %v1791 = vmul.f32 %v562, %v1788
    %v1792 = vmul.f32 %v563, %v1790
    %v1793 = vpack.c.bf16 %v1791, %v1791
    %v1794 = vpack.c.bf16 %v1792, %v1792
    %v1797 = vunpack.c.l.b16 %v1793
    %v1798 = vunpack.c.l.b16 %v1794
    %v1799 = vrot.slane %v1797, 5
    %v1800 = vrot.slane %v1798, 4
    %v1801 = vsel %vm589, %v1800, %v1799
    %v1802 = vpack.c.b16 %v1801, %v1801
    %1804 = vmatprep.subr.bf16.mxu0 %v695
    %1805 = vmatpush1.bf16.msra.mxu0 %v694
    %1806 = vmatprep.subr.bf16.mxu0 %v692
    %1807 = vmatpush1.bf16.msra.mxu0 %v691
    %1808 = vmatprep.subr.bf16.mxu0 %v689
    %1809 = vmatpush1.bf16.msra.mxu0 %v688
    %1810 = vmatprep.subr.bf16.mxu0 %v686
    %1811 = vmatpush1.bf16.msra.mxu0 %v685
    %1812 = vmatprep.subr.bf16.mxu0 %v683
    %1813 = vmatpush1.bf16.msra.mxu0 %v682
    %1814 = vmatprep.subr.bf16.mxu0 %v680
    %1815 = vmatpush1.bf16.msra.mxu0 %v679
    %1816 = vmatprep.subr.bf16.mxu0 %v677
    %1817 = vmatpush1.bf16.msra.mxu0 %v676
    %1818 = vmatprep.subr.bf16.mxu0 %v674
    %1819 = vmatpush1.bf16.msra.mxu0 %v673
    %1820 = vmatprep.subr.bf16.mxu0 0
    %1821 = vmatpush2.bf16.msra.mxu0 0
    %1822 = vmatprep.subr.bf16.mxu0 0
    %1823 = vmatpush2.bf16.msra.mxu0 0
    %1824 = vmatprep.subr.bf16.mxu0 0
    %1825 = vmatpush2.bf16.msra.mxu0 0
    %1826 = vmatprep.subr.bf16.mxu0 0
    %1827 = vmatpush2.bf16.msra.mxu0 0
    %1828 = vmatprep.subr.bf16.mxu0 0
    %1829 = vmatpush2.bf16.msra.mxu0 0
    %1830 = vmatprep.subr.bf16.mxu0 0
    %1831 = vmatpush2.bf16.msra.mxu0 0
    %1832 = vmatprep.subr.bf16.mxu0 0
    %1833 = vmatpush2.bf16.msra.mxu0 0
    %1834 = vmatprep.subr.bf16.mxu0 0
    %1835 = vmatpush2.bf16.msra.mxu0 0
    %1836 = vmatprep.mubr.bf16.mxu0 0
    %1837 = vmatmul.mubr.bf16.gmra.mxu0 %v1802
    %v1838 = vpop.f32.mrf.mxu0
    %v1839 = vadd.f32 %v572, %v1838
    %v1840 = vpop.f32.mrf.mxu0
    %v1841 = vadd.f32 %v576, %v1840
    %v1842 = vpop.f32.mrf.mxu0
    %v1843 = vpop.f32.mrf.mxu0
    %1844 = vdwg.mxu0
    %1845 = vmatprep.subr.bf16.mxu0 0
    %1846 = vmatpush1.bf16.msra.mxu0 %v696
    %1847 = vmatprep.subr.bf16.mxu0 0
    %1848 = vmatpush1.bf16.msra.mxu0 %v693
    %1849 = vmatprep.subr.bf16.mxu0 0
    %1850 = vmatpush1.bf16.msra.mxu0 %v690
    %1851 = vmatprep.subr.bf16.mxu0 0
    %1852 = vmatpush1.bf16.msra.mxu0 %v687
    %1853 = vmatprep.subr.bf16.mxu0 0
    %1854 = vmatpush1.bf16.msra.mxu0 %v684
    %1855 = vmatprep.subr.bf16.mxu0 0
    %1856 = vmatpush1.bf16.msra.mxu0 %v681
    %1857 = vmatprep.subr.bf16.mxu0 0
    %1858 = vmatpush1.bf16.msra.mxu0 %v678
    %1859 = vmatprep.subr.bf16.mxu0 0
    %1860 = vmatpush1.bf16.msra.mxu0 %v675
    %1861 = vmatprep.subr.bf16.mxu0 0
    %1862 = vmatpush2.bf16.msra.mxu0 0
    %1863 = vmatprep.subr.bf16.mxu0 0
    %1864 = vmatpush2.bf16.msra.mxu0 0
    %1865 = vmatprep.subr.bf16.mxu0 0
    %1866 = vmatpush2.bf16.msra.mxu0 0
    %1867 = vmatprep.subr.bf16.mxu0 0
    %1868 = vmatpush2.bf16.msra.mxu0 0
    %1869 = vmatprep.subr.bf16.mxu0 0
    %1870 = vmatpush2.bf16.msra.mxu0 0
    %1871 = vmatprep.subr.bf16.mxu0 0
    %1872 = vmatpush2.bf16.msra.mxu0 0
    %1873 = vmatprep.subr.bf16.mxu0 0
    %1874 = vmatpush2.bf16.msra.mxu0 0
    %1875 = vmatprep.subr.bf16.mxu0 0
    %1876 = vmatpush2.bf16.msra.mxu0 0
    %1877 = vmatprep.mubr.bf16.mxu0 0
    %1878 = vmatmul.mubr.bf16.gmra.mxu0 %v1802
    %v1879 = vpop.f32.mrf.mxu0
    %v1880 = vadd.f32 %v580, %v1879
    %v1881 = vpop.f32.mrf.mxu0
    %v1882 = vpop.f32.mrf.mxu0
    %v1883 = vpop.f32.mrf.mxu0
    %1884 = vdwg.mxu0
    %v1885 = vadd.f32 %v1839, %v1727
    %v1886 = vadd.f32 %v1841, %v1766
    %v1887 = vxor.u32 %v1885, 2147483648
    %v1888 = vxor.u32 %v1886, 2147483648
    %v1889 = vmul.f32 %v1887, 1.442695
    %v1890 = vpow.pop %v1889
    %v1891 = vmul.f32 %v1888, 1.442695
    %v1892 = vpow.pop %v1891
    %v1893 = vadd.f32 %v1890, 1.0
    %v1894 = vadd.f32 %v1892, 1.0
    %v1895 = vrcp.pop %v1893
    %v1896 = vmul.f32 1.0, %v1895
    %v1897 = vrcp.pop %v1894
    %v1898 = vmul.f32 1.0, %v1897
    %v1899 = vmul.f32 %v1896, %v1768
    %v1900 = vadd.f32 %v1880, %v1899
    %v1901 = vtanh.pop %v1900
    %v1902 = vsub.f32 1.0, %v1898
    %v1903 = vmul.f32 %v1902, %v1901
    %v1904 = vmul.f32 %v1898, %v1688
    %v1905 = vadd.f32 %v1903, %v1904
    %v1906 = vpack.c.bf16 %v1905, %v1905
    %1907 = vmatprep.subr.bf16.mxu0 %v427
    %1908 = vmatpush1.bf16.msra.mxu0 %v426
    %1909 = vmatprep.subr.bf16.mxu0 %v423
    %1910 = vmatpush1.bf16.msra.mxu0 %v422
    %1911 = vmatprep.subr.bf16.mxu0 %v419
    %1912 = vmatpush1.bf16.msra.mxu0 %v418
    %1913 = vmatprep.subr.bf16.mxu0 %v415
    %1914 = vmatpush1.bf16.msra.mxu0 %v414
    %1915 = vmatprep.subr.bf16.mxu0 %v411
    %1916 = vmatpush1.bf16.msra.mxu0 %v410
    %1917 = vmatprep.subr.bf16.mxu0 %v407
    %1918 = vmatpush1.bf16.msra.mxu0 %v406
    %1919 = vmatprep.subr.bf16.mxu0 %v403
    %1920 = vmatpush1.bf16.msra.mxu0 %v402
    %1921 = vmatprep.subr.bf16.mxu0 %v399
    %1922 = vmatpush1.bf16.msra.mxu0 %v398
    %1923 = vmatprep.subr.bf16.mxu0 0
    %1924 = vmatpush2.bf16.msra.mxu0 0
    %1925 = vmatprep.subr.bf16.mxu0 0
    %1926 = vmatpush2.bf16.msra.mxu0 0
    %1927 = vmatprep.subr.bf16.mxu0 0
    %1928 = vmatpush2.bf16.msra.mxu0 0
    %1929 = vmatprep.subr.bf16.mxu0 0
    %1930 = vmatpush2.bf16.msra.mxu0 0
    %1931 = vmatprep.subr.bf16.mxu0 0
    %1932 = vmatpush2.bf16.msra.mxu0 0
    %1933 = vmatprep.subr.bf16.mxu0 0
    %1934 = vmatpush2.bf16.msra.mxu0 0
    %1935 = vmatprep.subr.bf16.mxu0 0
    %1936 = vmatpush2.bf16.msra.mxu0 0
    %1937 = vmatprep.subr.bf16.mxu0 0
    %1938 = vmatpush2.bf16.msra.mxu0 0
    %1939 = vmatprep.mubr.bf16.mxu0 0
    %1940 = vmatmul.mubr.bf16.gmra.mxu0 %v1906
    %v1941 = vpop.f32.mrf.mxu0
    %v1942 = vadd.f32 %v285, %v1941
    %v1943 = vpop.f32.mrf.mxu0
    %v1944 = vadd.f32 %v289, %v1943
    %v1945 = vpop.f32.mrf.mxu0
    %v1946 = vpop.f32.mrf.mxu0
    %1947 = vdwg.mxu0
    %1948 = vmatprep.subr.bf16.mxu0 %v429
    %1949 = vmatpush1.bf16.msra.mxu0 %v428
    %1950 = vmatprep.subr.bf16.mxu0 %v425
    %1951 = vmatpush1.bf16.msra.mxu0 %v424
    %1952 = vmatprep.subr.bf16.mxu0 %v421
    %1953 = vmatpush1.bf16.msra.mxu0 %v420
    %1954 = vmatprep.subr.bf16.mxu0 %v417
    %1955 = vmatpush1.bf16.msra.mxu0 %v416
    %1956 = vmatprep.subr.bf16.mxu0 %v413
    %1957 = vmatpush1.bf16.msra.mxu0 %v412
    %1958 = vmatprep.subr.bf16.mxu0 %v409
    %1959 = vmatpush1.bf16.msra.mxu0 %v408
    %1960 = vmatprep.subr.bf16.mxu0 %v405
    %1961 = vmatpush1.bf16.msra.mxu0 %v404
    %1962 = vmatprep.subr.bf16.mxu0 %v401
    %1963 = vmatpush1.bf16.msra.mxu0 %v400
    %1964 = vmatprep.subr.bf16.mxu0 0
    %1965 = vmatpush2.bf16.msra.mxu0 0
    %1966 = vmatprep.subr.bf16.mxu0 0
    %1967 = vmatpush2.bf16.msra.mxu0 0
    %1968 = vmatprep.subr.bf16.mxu0 0
    %1969 = vmatpush2.bf16.msra.mxu0 0
    %1970 = vmatprep.subr.bf16.mxu0 0
    %1971 = vmatpush2.bf16.msra.mxu0 0
    %1972 = vmatprep.subr.bf16.mxu0 0
    %1973 = vmatpush2.bf16.msra.mxu0 0
    %1974 = vmatprep.subr.bf16.mxu0 0
    %1975 = vmatpush2.bf16.msra.mxu0 0
    %1976 = vmatprep.subr.bf16.mxu0 0
    %1977 = vmatpush2.bf16.msra.mxu0 0
    %1978 = vmatprep.subr.bf16.mxu0 0
    %1979 = vmatpush2.bf16.msra.mxu0 0
    %1980 = vmatprep.mubr.bf16.mxu0 0
    %1981 = vmatmul.mubr.bf16.gmra.mxu0 %v1906
    %v1982 = vpop.f32.mrf.mxu0
    %v1983 = vadd.f32 %v293, %v1982
    %v1984 = vpop.f32.mrf.mxu0
    %v1985 = vadd.f32 %v297, %v1984
    %v1986 = vpop.f32.mrf.mxu0
    %v1987 = vpop.f32.mrf.mxu0
    %1988 = vdwg.mxu0
    %v1990 = vrot.slane %v1942, 2
    %v1991 = vrot.slane %v1942, 3
    %v1994 = vadd.f32 %v273, %v1990
    %v1995 = vadd.f32 %v276, %v1991
    %v1996 = vxor.u32 %v1994, 2147483648
    %v1997 = vxor.u32 %v1995, 2147483648
    %v1998 = vmul.f32 %v1996, 1.442695
    %v1999 = vpow.pop %v1998
    %v2000 = vmul.f32 %v1997, 1.442695
    %v2001 = vpow.pop %v2000
    %v2002 = vadd.f32 %v1999, 1.0
    %v2003 = vadd.f32 %v2001, 1.0
    %v2004 = vrcp.pop %v2002
    %v2005 = vmul.f32 1.0, %v2004
    %v2006 = vrcp.pop %v2003
    %v2007 = vmul.f32 1.0, %v2006
    %v2008 = vmul.f32 %v562, %v2005
    %v2009 = vmul.f32 %v563, %v2007
    %v2010 = vpack.c.bf16 %v2008, %v2008
    %v2011 = vpack.c.bf16 %v2009, %v2009
    %v2014 = vunpack.c.l.b16 %v2010
    %v2015 = vunpack.c.l.b16 %v2011
    %v2016 = vrot.slane %v2014, 6
    %v2017 = vrot.slane %v2015, 5
    %v2018 = vsel %vm589, %v2017, %v2016
    %v2019 = vpack.c.b16 %v2018, %v2018
    %2021 = vmatprep.subr.bf16.mxu0 %v695
    %2022 = vmatpush1.bf16.msra.mxu0 %v694
    %2023 = vmatprep.subr.bf16.mxu0 %v692
    %2024 = vmatpush1.bf16.msra.mxu0 %v691
    %2025 = vmatprep.subr.bf16.mxu0 %v689
    %2026 = vmatpush1.bf16.msra.mxu0 %v688
    %2027 = vmatprep.subr.bf16.mxu0 %v686
    %2028 = vmatpush1.bf16.msra.mxu0 %v685
    %2029 = vmatprep.subr.bf16.mxu0 %v683
    %2030 = vmatpush1.bf16.msra.mxu0 %v682
    %2031 = vmatprep.subr.bf16.mxu0 %v680
    %2032 = vmatpush1.bf16.msra.mxu0 %v679
    %2033 = vmatprep.subr.bf16.mxu0 %v677
    %2034 = vmatpush1.bf16.msra.mxu0 %v676
    %2035 = vmatprep.subr.bf16.mxu0 %v674
    %2036 = vmatpush1.bf16.msra.mxu0 %v673
    %2037 = vmatprep.subr.bf16.mxu0 0
    %2038 = vmatpush2.bf16.msra.mxu0 0
    %2039 = vmatprep.subr.bf16.mxu0 0
    %2040 = vmatpush2.bf16.msra.mxu0 0
    %2041 = vmatprep.subr.bf16.mxu0 0
    %2042 = vmatpush2.bf16.msra.mxu0 0
    %2043 = vmatprep.subr.bf16.mxu0 0
    %2044 = vmatpush2.bf16.msra.mxu0 0
    %2045 = vmatprep.subr.bf16.mxu0 0
    %2046 = vmatpush2.bf16.msra.mxu0 0
    %2047 = vmatprep.subr.bf16.mxu0 0
    %2048 = vmatpush2.bf16.msra.mxu0 0
    %2049 = vmatprep.subr.bf16.mxu0 0
    %2050 = vmatpush2.bf16.msra.mxu0 0
    %2051 = vmatprep.subr.bf16.mxu0 0
    %2052 = vmatpush2.bf16.msra.mxu0 0
    %2053 = vmatprep.mubr.bf16.mxu0 0
    %2054 = vmatmul.mubr.bf16.gmra.mxu0 %v2019
    %v2055 = vpop.f32.mrf.mxu0
    %v2056 = vadd.f32 %v572, %v2055
    %v2057 = vpop.f32.mrf.mxu0
    %v2058 = vadd.f32 %v576, %v2057
    %v2059 = vpop.f32.mrf.mxu0
    %v2060 = vpop.f32.mrf.mxu0
    %2061 = vdwg.mxu0
    %2062 = vmatprep.subr.bf16.mxu0 0
    %2063 = vmatpush1.bf16.msra.mxu0 %v696
    %2064 = vmatprep.subr.bf16.mxu0 0
    %2065 = vmatpush1.bf16.msra.mxu0 %v693
    %2066 = vmatprep.subr.bf16.mxu0 0
    %2067 = vmatpush1.bf16.msra.mxu0 %v690
    %2068 = vmatprep.subr.bf16.mxu0 0
    %2069 = vmatpush1.bf16.msra.mxu0 %v687
    %2070 = vmatprep.subr.bf16.mxu0 0
    %2071 = vmatpush1.bf16.msra.mxu0 %v684
    %2072 = vmatprep.subr.bf16.mxu0 0
    %2073 = vmatpush1.bf16.msra.mxu0 %v681
    %2074 = vmatprep.subr.bf16.mxu0 0
    %2075 = vmatpush1.bf16.msra.mxu0 %v678
    %2076 = vmatprep.subr.bf16.mxu0 0
    %2077 = vmatpush1.bf16.msra.mxu0 %v675
    %2078 = vmatprep.subr.bf16.mxu0 0
    %2079 = vmatpush2.bf16.msra.mxu0 0
    %2080 = vmatprep.subr.bf16.mxu0 0
    %2081 = vmatpush2.bf16.msra.mxu0 0
    %2082 = vmatprep.subr.bf16.mxu0 0
    %2083 = vmatpush2.bf16.msra.mxu0 0
    %2084 = vmatprep.subr.bf16.mxu0 0
    %2085 = vmatpush2.bf16.msra.mxu0 0
    %2086 = vmatprep.subr.bf16.mxu0 0
    %2087 = vmatpush2.bf16.msra.mxu0 0
    %2088 = vmatprep.subr.bf16.mxu0 0
    %2089 = vmatpush2.bf16.msra.mxu0 0
    %2090 = vmatprep.subr.bf16.mxu0 0
    %2091 = vmatpush2.bf16.msra.mxu0 0
    %2092 = vmatprep.subr.bf16.mxu0 0
    %2093 = vmatpush2.bf16.msra.mxu0 0
    %2094 = vmatprep.mubr.bf16.mxu0 0
    %2095 = vmatmul.mubr.bf16.gmra.mxu0 %v2019
    %v2096 = vpop.f32.mrf.mxu0
    %v2097 = vadd.f32 %v580, %v2096
    %v2098 = vpop.f32.mrf.mxu0
    %v2099 = vpop.f32.mrf.mxu0
    %v2100 = vpop.f32.mrf.mxu0
    %2101 = vdwg.mxu0
    %v2102 = vadd.f32 %v2056, %v1944
    %v2103 = vadd.f32 %v2058, %v1983
    %v2104 = vxor.u32 %v2102, 2147483648
    %v2105 = vxor.u32 %v2103, 2147483648
    %v2106 = vmul.f32 %v2104, 1.442695
    %v2107 = vpow.pop %v2106
    %v2108 = vmul.f32 %v2105, 1.442695
    %v2109 = vpow.pop %v2108
    %v2110 = vadd.f32 %v2107, 1.0
    %v2111 = vadd.f32 %v2109, 1.0
    %v2112 = vrcp.pop %v2110
    %v2113 = vmul.f32 1.0, %v2112
    %v2114 = vrcp.pop %v2111
    %v2115 = vmul.f32 1.0, %v2114
    %v2116 = vmul.f32 %v2113, %v1985
    %v2117 = vadd.f32 %v2097, %v2116
    %v2118 = vtanh.pop %v2117
    %v2119 = vsub.f32 1.0, %v2115
    %v2120 = vmul.f32 %v2119, %v2118
    %v2121 = vmul.f32 %v2115, %v1905
    %v2122 = vadd.f32 %v2120, %v2121
    %v2123 = vpack.c.bf16 %v2122, %v2122
    %2124 = vmatprep.subr.bf16.mxu0 %v427
    %2125 = vmatpush1.bf16.msra.mxu0 %v426
    %2126 = vmatprep.subr.bf16.mxu0 %v423
    %2127 = vmatpush1.bf16.msra.mxu0 %v422
    %2128 = vmatprep.subr.bf16.mxu0 %v419
    %2129 = vmatpush1.bf16.msra.mxu0 %v418
    %2130 = vmatprep.subr.bf16.mxu0 %v415
    %2131 = vmatpush1.bf16.msra.mxu0 %v414
    %2132 = vmatprep.subr.bf16.mxu0 %v411
    %2133 = vmatpush1.bf16.msra.mxu0 %v410
    %2134 = vmatprep.subr.bf16.mxu0 %v407
    %2135 = vmatpush1.bf16.msra.mxu0 %v406
    %2136 = vmatprep.subr.bf16.mxu0 %v403
    %2137 = vmatpush1.bf16.msra.mxu0 %v402
    %2138 = vmatprep.subr.bf16.mxu0 %v399
    %2139 = vmatpush1.bf16.msra.mxu0 %v398
    %2140 = vmatprep.subr.bf16.mxu0 0
    %2141 = vmatpush2.bf16.msra.mxu0 0
    %2142 = vmatprep.subr.bf16.mxu0 0
    %2143 = vmatpush2.bf16.msra.mxu0 0
    %2144 = vmatprep.subr.bf16.mxu0 0
    %2145 = vmatpush2.bf16.msra.mxu0 0
    %2146 = vmatprep.subr.bf16.mxu0 0
    %2147 = vmatpush2.bf16.msra.mxu0 0
    %2148 = vmatprep.subr.bf16.mxu0 0
    %2149 = vmatpush2.bf16.msra.mxu0 0
    %2150 = vmatprep.subr.bf16.mxu0 0
    %2151 = vmatpush2.bf16.msra.mxu0 0
    %2152 = vmatprep.subr.bf16.mxu0 0
    %2153 = vmatpush2.bf16.msra.mxu0 0
    %2154 = vmatprep.subr.bf16.mxu0 0
    %2155 = vmatpush2.bf16.msra.mxu0 0
    %2156 = vmatprep.mubr.bf16.mxu0 0
    %2157 = vmatmul.mubr.bf16.gmra.mxu0 %v2123
    %v2158 = vpop.f32.mrf.mxu0
    %v2159 = vadd.f32 %v285, %v2158
    %v2160 = vpop.f32.mrf.mxu0
    %v2161 = vadd.f32 %v289, %v2160
    %v2162 = vpop.f32.mrf.mxu0
    %v2163 = vpop.f32.mrf.mxu0
    %2164 = vdwg.mxu0
    %2165 = vmatprep.subr.bf16.mxu0 %v429
    %2166 = vmatpush1.bf16.msra.mxu0 %v428
    %2167 = vmatprep.subr.bf16.mxu0 %v425
    %2168 = vmatpush1.bf16.msra.mxu0 %v424
    %2169 = vmatprep.subr.bf16.mxu0 %v421
    %2170 = vmatpush1.bf16.msra.mxu0 %v420
    %2171 = vmatprep.subr.bf16.mxu0 %v417
    %2172 = vmatpush1.bf16.msra.mxu0 %v416
    %2173 = vmatprep.subr.bf16.mxu0 %v413
    %2174 = vmatpush1.bf16.msra.mxu0 %v412
    %2175 = vmatprep.subr.bf16.mxu0 %v409
    %2176 = vmatpush1.bf16.msra.mxu0 %v408
    %2177 = vmatprep.subr.bf16.mxu0 %v405
    %2178 = vmatpush1.bf16.msra.mxu0 %v404
    %2179 = vmatprep.subr.bf16.mxu0 %v401
    %2180 = vmatpush1.bf16.msra.mxu0 %v400
    %2181 = vmatprep.subr.bf16.mxu0 0
    %2182 = vmatpush2.bf16.msra.mxu0 0
    %2183 = vmatprep.subr.bf16.mxu0 0
    %2184 = vmatpush2.bf16.msra.mxu0 0
    %2185 = vmatprep.subr.bf16.mxu0 0
    %2186 = vmatpush2.bf16.msra.mxu0 0
    %2187 = vmatprep.subr.bf16.mxu0 0
    %2188 = vmatpush2.bf16.msra.mxu0 0
    %2189 = vmatprep.subr.bf16.mxu0 0
    %2190 = vmatpush2.bf16.msra.mxu0 0
    %2191 = vmatprep.subr.bf16.mxu0 0
    %2192 = vmatpush2.bf16.msra.mxu0 0
    %2193 = vmatprep.subr.bf16.mxu0 0
    %2194 = vmatpush2.bf16.msra.mxu0 0
    %2195 = vmatprep.subr.bf16.mxu0 0
    %2196 = vmatpush2.bf16.msra.mxu0 0
    %2197 = vmatprep.mubr.bf16.mxu0 0
    %2198 = vmatmul.mubr.bf16.gmra.mxu0 %v2123
    %v2199 = vpop.f32.mrf.mxu0
    %v2200 = vadd.f32 %v293, %v2199
    %v2201 = vpop.f32.mrf.mxu0
    %v2202 = vadd.f32 %v297, %v2201
    %v2203 = vpop.f32.mrf.mxu0
    %v2204 = vpop.f32.mrf.mxu0
    %2205 = vdwg.mxu0
    %v2207 = vrot.slane %v2159, 1
    %v2208 = vrot.slane %v2159, 2
    %v2211 = vadd.f32 %v273, %v2207
    %v2212 = vadd.f32 %v276, %v2208
    %v2213 = vxor.u32 %v2211, 2147483648
    %v2214 = vxor.u32 %v2212, 2147483648
    %v2215 = vmul.f32 %v2213, 1.442695
    %v2216 = vpow.pop %v2215
    %v2217 = vmul.f32 %v2214, 1.442695
    %v2218 = vpow.pop %v2217
    %v2219 = vadd.f32 %v2216, 1.0
    %v2220 = vadd.f32 %v2218, 1.0
    %v2221 = vrcp.pop %v2219
    %v2222 = vmul.f32 1.0, %v2221
    %v2223 = vrcp.pop %v2220
    %v2224 = vmul.f32 1.0, %v2223
    %v2225 = vmul.f32 %v562, %v2222
    %v2226 = vmul.f32 %v563, %v2224
    %v2227 = vpack.c.bf16 %v2225, %v2225
    %v2228 = vpack.c.bf16 %v2226, %v2226
    %v2231 = vunpack.c.l.b16 %v2227
    %v2232 = vunpack.c.l.b16 %v2228
    %v2233 = vrot.slane %v2231, 7
    %v2234 = vrot.slane %v2232, 6
    %v2235 = vsel %vm589, %v2234, %v2233
    %v2236 = vpack.c.b16 %v2235, %v2235
    %2238 = vmatprep.subr.bf16.mxu0 %v695
    %2239 = vmatpush1.bf16.msra.mxu0 %v694
    %2240 = vmatprep.subr.bf16.mxu0 %v692
    %2241 = vmatpush1.bf16.msra.mxu0 %v691
    %2242 = vmatprep.subr.bf16.mxu0 %v689
    %2243 = vmatpush1.bf16.msra.mxu0 %v688
    %2244 = vmatprep.subr.bf16.mxu0 %v686
    %2245 = vmatpush1.bf16.msra.mxu0 %v685
    %2246 = vmatprep.subr.bf16.mxu0 %v683
    %2247 = vmatpush1.bf16.msra.mxu0 %v682
    %2248 = vmatprep.subr.bf16.mxu0 %v680
    %2249 = vmatpush1.bf16.msra.mxu0 %v679
    %2250 = vmatprep.subr.bf16.mxu0 %v677
    %2251 = vmatpush1.bf16.msra.mxu0 %v676
    %2252 = vmatprep.subr.bf16.mxu0 %v674
    %2253 = vmatpush1.bf16.msra.mxu0 %v673
    %2254 = vmatprep.subr.bf16.mxu0 0
    %2255 = vmatpush2.bf16.msra.mxu0 0
    %2256 = vmatprep.subr.bf16.mxu0 0
    %2257 = vmatpush2.bf16.msra.mxu0 0
    %2258 = vmatprep.subr.bf16.mxu0 0
    %2259 = vmatpush2.bf16.msra.mxu0 0
    %2260 = vmatprep.subr.bf16.mxu0 0
    %2261 = vmatpush2.bf16.msra.mxu0 0
    %2262 = vmatprep.subr.bf16.mxu0 0
    %2263 = vmatpush2.bf16.msra.mxu0 0
    %2264 = vmatprep.subr.bf16.mxu0 0
    %2265 = vmatpush2.bf16.msra.mxu0 0
    %2266 = vmatprep.subr.bf16.mxu0 0
    %2267 = vmatpush2.bf16.msra.mxu0 0
    %2268 = vmatprep.subr.bf16.mxu0 0
    %2269 = vmatpush2.bf16.msra.mxu0 0
    %2270 = vmatprep.mubr.bf16.mxu0 0
    %2271 = vmatmul.mubr.bf16.gmra.mxu0 %v2236
    %v2272 = vpop.f32.mrf.mxu0
    %v2273 = vadd.f32 %v572, %v2272
    %v2274 = vpop.f32.mrf.mxu0
    %v2275 = vadd.f32 %v576, %v2274
    %v2276 = vpop.f32.mrf.mxu0
    %v2277 = vpop.f32.mrf.mxu0
    %2278 = vdwg.mxu0
    %2279 = vmatprep.subr.bf16.mxu0 0
    %2280 = vmatpush1.bf16.msra.mxu0 %v696
    %2281 = vmatprep.subr.bf16.mxu0 0
    %2282 = vmatpush1.bf16.msra.mxu0 %v693
    %2283 = vmatprep.subr.bf16.mxu0 0
    %2284 = vmatpush1.bf16.msra.mxu0 %v690
    %2285 = vmatprep.subr.bf16.mxu0 0
    %2286 = vmatpush1.bf16.msra.mxu0 %v687
    %2287 = vmatprep.subr.bf16.mxu0 0
    %2288 = vmatpush1.bf16.msra.mxu0 %v684
    %2289 = vmatprep.subr.bf16.mxu0 0
    %2290 = vmatpush1.bf16.msra.mxu0 %v681
    %2291 = vmatprep.subr.bf16.mxu0 0
    %2292 = vmatpush1.bf16.msra.mxu0 %v678
    %2293 = vmatprep.subr.bf16.mxu0 0
    %2294 = vmatpush1.bf16.msra.mxu0 %v675
    %2295 = vmatprep.subr.bf16.mxu0 0
    %2296 = vmatpush2.bf16.msra.mxu0 0
    %2297 = vmatprep.subr.bf16.mxu0 0
    %2298 = vmatpush2.bf16.msra.mxu0 0
    %2299 = vmatprep.subr.bf16.mxu0 0
    %2300 = vmatpush2.bf16.msra.mxu0 0
    %2301 = vmatprep.subr.bf16.mxu0 0
    %2302 = vmatpush2.bf16.msra.mxu0 0
    %2303 = vmatprep.subr.bf16.mxu0 0
    %2304 = vmatpush2.bf16.msra.mxu0 0
    %2305 = vmatprep.subr.bf16.mxu0 0
    %2306 = vmatpush2.bf16.msra.mxu0 0
    %2307 = vmatprep.subr.bf16.mxu0 0
    %2308 = vmatpush2.bf16.msra.mxu0 0
    %2309 = vmatprep.subr.bf16.mxu0 0
    %2310 = vmatpush2.bf16.msra.mxu0 0
    %2311 = vmatprep.mubr.bf16.mxu0 0
    %2312 = vmatmul.mubr.bf16.gmra.mxu0 %v2236
    %v2313 = vpop.f32.mrf.mxu0
    %v2314 = vadd.f32 %v580, %v2313
    %v2315 = vpop.f32.mrf.mxu0
    %v2316 = vpop.f32.mrf.mxu0
    %v2317 = vpop.f32.mrf.mxu0
    %2318 = vdwg.mxu0
    %v2319 = vadd.f32 %v2273, %v2161
    %v2320 = vadd.f32 %v2275, %v2200
    %v2321 = vxor.u32 %v2319, 2147483648
    %v2322 = vxor.u32 %v2320, 2147483648
    %v2323 = vmul.f32 %v2321, 1.442695
    %v2324 = vpow.pop %v2323
    %v2325 = vmul.f32 %v2322, 1.442695
    %v2326 = vpow.pop %v2325
    %v2327 = vadd.f32 %v2324, 1.0
    %v2328 = vadd.f32 %v2326, 1.0
    %v2329 = vrcp.pop %v2327
    %v2330 = vmul.f32 1.0, %v2329
    %v2331 = vrcp.pop %v2328
    %v2332 = vmul.f32 1.0, %v2331
    %v2333 = vmul.f32 %v2330, %v2202
    %v2334 = vadd.f32 %v2314, %v2333
    %v2335 = vtanh.pop %v2334
    %v2336 = vsub.f32 1.0, %v2332
    %v2337 = vmul.f32 %v2336, %v2335
    %v2338 = vmul.f32 %v2332, %v2122
    %v2339 = vadd.f32 %v2337, %v2338
    %v2342 = vunpack.c.l.s4 1966171168
    %v2343 = vunpack.c.0.s8 %v2342
    %v2344 = vlaneseq
    %v2345 = vshrl.u32 %v2344, 7
    %v2346 = vsub.s32 %v2343, %v2345
    %v2347 = vrot.slane %v822, %v2346
    %v2348 = vcombine.high %v2347, %v2347
    %v2350 = vunpack.c.l.s4 1966171168
    %v2351 = vunpack.c.0.s8 %v2350
    %v2352 = vlaneseq
    %v2353 = vshrl.u32 %v2352, 7
    %v2354 = vsub.s32 %v2351, %v2353
    %v2355 = vrot.slane %v2347, %v2354
    %v2357 = vunpack.c.l.s4 1966171168
    %v2358 = vunpack.c.0.s8 %v2357
    %v2359 = vlaneseq
    %v2360 = vshrl.u32 %v2359, 7
    %v2361 = vsub.s32 %v2358, %v2360
    %v2362 = vrot.slane %v2348, %v2361
    %v2367 = vunpack.c.l.s4 1966171168
    %v2368 = vunpack.c.0.s8 %v2367
    %v2369 = vlaneseq
    %v2370 = vshrl.u32 %v2369, 7
    %v2371 = vsub.s32 %v2368, %v2370
    %v2372 = vrot.slane %v1037, %v2371
    %v2373 = vcombine.high %v2372, %v2372
    %v2375 = vunpack.c.l.s4 1966171168
    %v2376 = vunpack.c.0.s8 %v2375
    %v2377 = vlaneseq
    %v2378 = vshrl.u32 %v2377, 7
    %v2379 = vsub.s32 %v2376, %v2378
    %v2380 = vrot.slane %v2372, %v2379
    %v2382 = vunpack.c.l.s4 1966171168
    %v2383 = vunpack.c.0.s8 %v2382
    %v2384 = vlaneseq
    %v2385 = vshrl.u32 %v2384, 7
    %v2386 = vsub.s32 %v2383, %v2385
    %v2387 = vrot.slane %v2373, %v2386
    %v2390 = vunpack.c.l.s4 1966171168
    %v2391 = vunpack.c.0.s8 %v2390
    %v2392 = vlaneseq
    %v2393 = vshrl.u32 %v2392, 7
    %v2394 = vsub.s32 %v2391, %v2393
    %v2395 = vrot.slane %v1254, %v2394
    %v2396 = vcombine.high %v2395, %v2395
    %v2398 = vunpack.c.l.s4 1966171168
    %v2399 = vunpack.c.0.s8 %v2398
    %v2400 = vlaneseq
    %v2401 = vshrl.u32 %v2400, 7
    %v2402 = vsub.s32 %v2399, %v2401
    %v2403 = vrot.slane %v2395, %v2402
    %v2405 = vunpack.c.l.s4 1966171168
    %v2406 = vunpack.c.0.s8 %v2405
    %v2407 = vlaneseq
    %v2408 = vshrl.u32 %v2407, 7
    %v2409 = vsub.s32 %v2406, %v2408
    %v2410 = vrot.slane %v2396, %v2409
    %v2413 = vunpack.c.l.s4 1966171168
    %v2414 = vunpack.c.0.s8 %v2413
    %v2415 = vlaneseq
    %v2416 = vshrl.u32 %v2415, 7
    %v2417 = vsub.s32 %v2414, %v2416
    %v2418 = vrot.slane %v1471, %v2417
    %v2419 = vcombine.high %v2418, %v2418
    %v2421 = vunpack.c.l.s4 1966171168
    %v2422 = vunpack.c.0.s8 %v2421
    %v2423 = vlaneseq
    %v2424 = vshrl.u32 %v2423, 7
    %v2425 = vsub.s32 %v2422, %v2424
    %v2426 = vrot.slane %v2418, %v2425
    %v2428 = vunpack.c.l.s4 1966171168
    %v2429 = vunpack.c.0.s8 %v2428
    %v2430 = vlaneseq
    %v2431 = vshrl.u32 %v2430, 7
    %v2432 = vsub.s32 %v2429, %v2431
    %v2433 = vrot.slane %v2419, %v2432
    %v2436 = vunpack.c.l.s4 1966171168
    %v2437 = vunpack.c.0.s8 %v2436
    %v2438 = vlaneseq
    %v2439 = vshrl.u32 %v2438, 7
    %v2440 = vsub.s32 %v2437, %v2439
    %v2441 = vrot.slane %v1688, %v2440
    %v2442 = vcombine.high %v2441, %v2441
    %v2444 = vunpack.c.l.s4 1966171168
    %v2445 = vunpack.c.0.s8 %v2444
    %v2446 = vlaneseq
    %v2447 = vshrl.u32 %v2446, 7
    %v2448 = vsub.s32 %v2445, %v2447
    %v2449 = vrot.slane %v2441, %v2448
    %v2451 = vunpack.c.l.s4 1966171168
    %v2452 = vunpack.c.0.s8 %v2451
    %v2453 = vlaneseq
    %v2454 = vshrl.u32 %v2453, 7
    %v2455 = vsub.s32 %v2452, %v2454
    %v2456 = vrot.slane %v2442, %v2455
    %v2459 = vunpack.c.l.s4 1966171168
    %v2460 = vunpack.c.0.s8 %v2459
    %v2461 = vlaneseq
    %v2462 = vshrl.u32 %v2461, 7
    %v2463 = vsub.s32 %v2460, %v2462
    %v2464 = vrot.slane %v1905, %v2463
    %v2465 = vcombine.high %v2464, %v2464
    %v2467 = vunpack.c.l.s4 1966171168
    %v2468 = vunpack.c.0.s8 %v2467
    %v2469 = vlaneseq
    %v2470 = vshrl.u32 %v2469, 7
    %v2471 = vsub.s32 %v2468, %v2470
    %v2472 = vrot.slane %v2464, %v2471
    %v2474 = vunpack.c.l.s4 1966171168
    %v2475 = vunpack.c.0.s8 %v2474
    %v2476 = vlaneseq
    %v2477 = vshrl.u32 %v2476, 7
    %v2478 = vsub.s32 %v2475, %v2477
    %v2479 = vrot.slane %v2465, %v2478
    %v2482 = vunpack.c.l.s4 1966171168
    %v2483 = vunpack.c.0.s8 %v2482
    %v2484 = vlaneseq
    %v2485 = vshrl.u32 %v2484, 7
    %v2486 = vsub.s32 %v2483, %v2485
    %v2487 = vrot.slane %v2122, %v2486
    %v2488 = vcombine.high %v2487, %v2487
    %v2490 = vunpack.c.l.s4 1966171168
    %v2491 = vunpack.c.0.s8 %v2490
    %v2492 = vlaneseq
    %v2493 = vshrl.u32 %v2492, 7
    %v2494 = vsub.s32 %v2491, %v2493
    %v2495 = vrot.slane %v2487, %v2494
    %v2497 = vunpack.c.l.s4 1966171168
    %v2498 = vunpack.c.0.s8 %v2497
    %v2499 = vlaneseq
    %v2500 = vshrl.u32 %v2499, 7
    %v2501 = vsub.s32 %v2498, %v2500
    %v2502 = vrot.slane %v2488, %v2501
    %v2505 = vunpack.c.l.s4 1966171168
    %v2506 = vunpack.c.0.s8 %v2505
    %v2507 = vlaneseq
    %v2508 = vshrl.u32 %v2507, 7
    %v2509 = vsub.s32 %v2506, %v2508
    %v2510 = vrot.slane %v2339, %v2509
    %v2511 = vcombine.high %v2510, %v2510
    %v2513 = vunpack.c.l.s4 1966171168
    %v2514 = vunpack.c.0.s8 %v2513
    %v2515 = vlaneseq
    %v2516 = vshrl.u32 %v2515, 7
    %v2517 = vsub.s32 %v2514, %v2516
    %v2518 = vrot.slane %v2510, %v2517
    %v2520 = vunpack.c.l.s4 1966171168
    %v2521 = vunpack.c.0.s8 %v2520
    %v2522 = vlaneseq
    %v2523 = vshrl.u32 %v2522, 7
    %v2524 = vsub.s32 %v2521, %v2523
    %v2525 = vrot.slane %v2511, %v2524
    %v2526 = vlaneseq
    %v2527 = vshrl.u32 %v2526, 7
    %v2528 = vsub.s32 0, %v2527
    %v2529 = vrot.slane %v2380, %v2528
    %v2530 = vlaneseq
    %v2531 = vshrl.u32 %v2530, 7
    %v2532 = vsub.s32 0, %v2531
    %v2533 = vrot.slane %v2387, %v2532
    %v2536 = vlaneseq
    %v2537 = vshrl.u32 %v2536, 7
    %v2538 = vsub.s32 0, %v2537
    %v2539 = vrot.slane %v2403, %v2538
    %v2540 = vlaneseq
    %v2541 = vshrl.u32 %v2540, 7
    %v2542 = vsub.s32 0, %v2541
    %v2543 = vrot.slane %v2410, %v2542
    %v2546 = vlaneseq
    %v2547 = vshrl.u32 %v2546, 7
    %v2548 = vsub.s32 0, %v2547
    %v2549 = vrot.slane %v2426, %v2548
    %v2550 = vlaneseq
    %v2551 = vshrl.u32 %v2550, 7
    %v2552 = vsub.s32 0, %v2551
    %v2553 = vrot.slane %v2433, %v2552
    %v2556 = vlaneseq
    %v2557 = vshrl.u32 %v2556, 7
    %v2558 = vsub.s32 0, %v2557
    %v2559 = vrot.slane %v2449, %v2558
    %v2560 = vlaneseq
    %v2561 = vshrl.u32 %v2560, 7
    %v2562 = vsub.s32 0, %v2561
    %v2563 = vrot.slane %v2456, %v2562
    %v2566 = vlaneseq
    %v2567 = vshrl.u32 %v2566, 7
    %v2568 = vsub.s32 0, %v2567
    %v2569 = vrot.slane %v2472, %v2568
    %v2570 = vlaneseq
    %v2571 = vshrl.u32 %v2570, 7
    %v2572 = vsub.s32 0, %v2571
    %v2573 = vrot.slane %v2479, %v2572
    %v2576 = vlaneseq
    %v2577 = vshrl.u32 %v2576, 7
    %v2578 = vsub.s32 0, %v2577
    %v2579 = vrot.slane %v2495, %v2578
    %v2580 = vlaneseq
    %v2581 = vshrl.u32 %v2580, 7
    %v2582 = vsub.s32 0, %v2581
    %v2583 = vrot.slane %v2502, %v2582
    %v2586 = vlaneseq
    %v2587 = vshrl.u32 %v2586, 7
    %v2588 = vsub.s32 0, %v2587
    %v2589 = vrot.slane %v2518, %v2588
    %v2590 = vlaneseq
    %v2591 = vshrl.u32 %v2590, 7
    %v2592 = vsub.s32 0, %v2591
    %v2593 = vrot.slane %v2525, %v2592
    %vm2596 = vcmask 1040384
    %v2597 = vsel %vm2596, %v2355, %v2529
    %v2598 = vsel %vm2596, %v2362, %v2533
    %vm2599 = vcmask 1041408
    %v2600 = vsel %vm2599, %v2597, %v2539
    %v2601 = vsel %vm2599, %v2598, %v2543
    %vm2602 = vcmask 1042432
    %v2603 = vsel %vm2602, %v2600, %v2549
    %v2604 = vsel %vm2602, %v2601, %v2553
    %vm2605 = vcmask 1043456
    %v2606 = vsel %vm2605, %v2603, %v2559
    %v2607 = vsel %vm2605, %v2604, %v2563
    %vm2608 = vcmask 1044480
    %v2609 = vsel %vm2608, %v2606, %v2569
    %v2610 = vsel %vm2608, %v2607, %v2573
    %vm2611 = vcmask 1045504
    %v2612 = vsel %vm2611, %v2609, %v2579
    %v2613 = vsel %vm2611, %v2610, %v2583
    %vm2614 = vcmask 1046528
    %v2615 = vsel %vm2614, %v2612, %v2589
    %v2616 = vsel %vm2614, %v2613, %v2593
    %2617 = vst [vmem:[#allocation12] sm:$0xff] %v2615
    %2618 = vst [vmem:[#allocation12 + $0x8] sm:$0xff] %v2616
    %2619 = vst [vmem:[#allocation2] sm:$0x3] %v2339
    // Predicated region
    $region54: #{tpu_custom_call.1} parent=1 // pred_check
      _
    $region55: #{tpu_custom_call.1} parent=1 // pred_check_branch
      %2621 = sbr.rel (0) target = $region57
    $region56: #{tpu_custom_call.1} parent=1 // pred_region
      %s2623 = ssub.s32 256, 256
      %2624 = vsyncadd [#allocation5], %s2623
      %s2625 = sshll.u32 [#allocation12], 4
      %s2626 = int_to_ptr.vmem [resolvable:$true] %s2625
      %2631 = dma.vmem_to_hbm [thread:$0]  %s2626, 256, %s7, [#allocation5], 128, 128, 8
    $region57: #{tpu_custom_call.1} parent=1 // pred_fallthru
      _
    // Predicated region
    $region58: #{tpu_custom_call.1} parent=1 // pred_check
      _
    $region59: #{tpu_custom_call.1} parent=1 // pred_check_branch
      %2633 = sbr.rel (0) target = $region61
    $region60: #{tpu_custom_call.1} parent=1 // pred_region
      %2634 = dma.done [#allocation5], 256
    $region61: #{tpu_custom_call.1} parent=1 // pred_fallthru
      _
    %2635 = vsyncpa [#allocation4], 1
    %2636 = vsyncpa [#allocation7], 1
    %2637 = vsyncpa [#allocation10], 1
    %2638 = vsyncpa [#allocation5], 1

</llo_original>
